<compile_context>
chip_gen: v7x
topology: tpu7x:2x2x1
jax: 0.10.0
libtpu: 0.0.40
codegen_flags: <defaults>
</compile_context>

<pallas_src>
import functools

import jax
import jax.numpy as jnp
from jax import lax
from jax.experimental import pallas as pl
from jax.experimental.pallas import tpu as pltpu


def _block_kernel(x_ref, w1_ref, w2_ref, ws_ref, b_ref, mask_ref, o_ref,
                  *, Wp, P, G, F0, L2):
    # x_ref:   (1, Cin, XT)  guarded, flattened, zero-padded input plane
    # w1_ref:  (9, Cp, Cin)  conv1 taps (BN1 scale folded in), t = dy*3+dx
    # w2_ref:  (9, Cp, Cp)   conv2 taps (BN2 scale folded in)
    # ws_ref:  (Cp, Cin)     shortcut 1x1 conv (shortcut-BN scale folded in)
    # b_ref:   (Cp, 2)       column 0: bias after conv1; column 1: combined
    #                        bias for conv2 + shortcut
    # mask_ref:(1, P)        1.0 at true image pixels of the padded plane
    # o_ref:   (1, Cp, L2)   output window = padded-plane positions [F0, F0+L2)
    Cp = o_ref.shape[1]
    offs = [(dy - 1) * Wp + (dx - 1) for dy in range(3) for dx in range(3)]

    x = x_ref[0]                                          # (Cin, XT)

    # --- conv1 (+ folded bn1) at every padded-plane position f in [0, P) -----
    acc1 = jnp.zeros((Cp, P), jnp.float32)
    for t, off in enumerate(offs):
        acc1 = acc1 + jnp.dot(w1_ref[t], x[:, G + off:G + off + P],
                              preferred_element_type=jnp.float32)
    # relu1; zero the halo so conv2 sees proper zero padding
    mid = jnp.maximum(acc1 + b_ref[:, 0:1], 0.0) * mask_ref[...]      # (Cp, P)

    # --- shortcut (1x1 conv + bias + bn, all folded) over the output window --
    acc2 = jnp.dot(ws_ref[...], x[:, G + F0:G + F0 + L2],
                   preferred_element_type=jnp.float32) + b_ref[:, 1:2]
    # --- conv2 (+ folded bn2) accumulated directly onto the shortcut ---------
    for t, off in enumerate(offs):
        acc2 = acc2 + jnp.dot(w2_ref[t], mid[:, F0 + off:F0 + off + L2],
                              preferred_element_type=jnp.float32)

    o_ref[0] = jnp.maximum(acc2, 0.0).astype(o_ref.dtype)            # relu2


def _fold_bn(gamma, beta, mean, var, eps=1e-5):
    scale = gamma / jnp.sqrt(var + eps)
    bias = beta - mean * scale
    return scale, bias


def basic_block_dropout_forward(x_nchw, p, in_planes, planes, stride=1):
    """Forward pass of BasicBlockDropout. NCHW in, NCHW out (eval-mode BN)."""
    assert stride == 1, "only stride=1 implemented in-kernel"
    N, Cin, H, W = x_nchw.shape
    Cp = planes
    Hp, Wp = H + 2, W + 2
    P = Hp * Wp                       # flattened padded plane
    G = Wp + 1                        # guard >= largest 3x3 tap offset
    F0 = Wp + 1                       # first padded-plane position of the
    L2 = P - 2 * (Wp + 1)             # output window; covers every interior px
    XT = ((G + P + G + 127) // 128) * 128   # lane-aligned guarded width
    assert XT - G - P >= Wp + 1 and L2 > 0

    # ---- activations: NCHW (unchanged), pad spatially, flatten, add guards --
    x = x_nchw.astype(jnp.float32)
    x_pad = jnp.pad(x, ((0, 0), (0, 0), (1, 1), (1, 1))).reshape(N, Cin, P)
    x_g = jnp.pad(x_pad, ((0, 0), (0, 0), (G, XT - G - P)))          # (N,Cin,XT)

    # ---- fold BN scales into conv weights, pack remaining biases ------------
    s1, b1 = _fold_bn(p["g1"], p["be1"], p["m1"], p["v1"])
    s2, b2 = _fold_bn(p["g2"], p["be2"], p["m2"], p["v2"])
    w1_eff = (p["w1"].astype(jnp.float32) * s1[:, None, None, None])
    w1_eff = w1_eff.transpose(2, 3, 0, 1).reshape(9, Cp, Cin)        # (9,Cp,Cin)
    w2_eff = (p["w2"].astype(jnp.float32) * s2[:, None, None, None])
    w2_eff = w2_eff.transpose(2, 3, 0, 1).reshape(9, Cp, Cp)         # (9,Cp,Cp)

    has_shortcut = (stride != 1) or (in_planes != planes)
    if has_shortcut:
        ss, bsn = _fold_bn(p["gs"], p["bes"], p["ms"], p["vs"])
        ws_eff = p["ws"][:, :, 0, 0].astype(jnp.float32) * ss[:, None]   # (Cp,Cin)
        b_out = b2 + ss * p["bs"].astype(jnp.float32) + bsn
    else:
        ws_eff = jnp.eye(Cp, Cin, dtype=jnp.float32)   # identity (Cin == Cp here)
        b_out = b2
    biases = jnp.stack([b1, b_out], axis=1).astype(jnp.float32)      # (Cp, 2)

    # ---- interior mask over the flattened padded plane ----------------------
    f = jnp.arange(P)
    row, col = f // Wp, f % Wp
    mask = ((row >= 1) & (row <= H) & (col >= 1) & (col <= W))
    mask = mask.astype(jnp.float32).reshape(1, P)

    kernel = functools.partial(_block_kernel, Wp=Wp, P=P, G=G, F0=F0, L2=L2)

    grid_spec = pltpu.PrefetchScalarGridSpec(
        num_scalar_prefetch=0,
        grid=(N,),
        in_specs=[
            pl.BlockSpec((1, Cin, XT), lambda n: (n, 0, 0)),
            pl.BlockSpec((9, Cp, Cin), lambda n: (0, 0, 0)),
            pl.BlockSpec((9, Cp, Cp), lambda n: (0, 0, 0)),
            pl.BlockSpec((Cp, Cin), lambda n: (0, 0)),
            pl.BlockSpec((Cp, 2), lambda n: (0, 0)),
            pl.BlockSpec((1, P), lambda n: (0, 0)),
        ],
        out_specs=pl.BlockSpec((1, Cp, L2), lambda n: (n, 0, 0)),
    )

    out_win = pl.pallas_call(
        kernel,
        out_shape=jax.ShapeDtypeStruct((N, Cp, L2), jnp.float32),
        grid_spec=grid_spec,
        compiler_params=pltpu.CompilerParams(dimension_semantics=("parallel",)),
    )(x_g, w1_eff, w2_eff, ws_eff, biases, mask)

    # ---- un-flatten: output window -> padded plane -> interior (NCHW) -------
    out_flat = jnp.pad(out_win, ((0, 0), (0, 0), (F0, P - F0 - L2)))
    out = out_flat.reshape(N, Cp, Hp, Wp)[:, :, 1:H + 1, 1:W + 1]
    return out                                                        # NCHW


def make_params(key, in_planes, planes):
    ks = jax.random.split(key, 18)
    n = lambda k, s, sc=0.1: sc * jax.random.normal(k, s, jnp.float32)
    pos = lambda k, s: 0.5 + jnp.abs(jax.random.normal(k, s, jnp.float32)) * 0.5
    return dict(
        # conv1 / conv2 weights (PyTorch OIHW layout, no bias)
        w1=n(ks[0], (planes, in_planes, 3, 3)),
        w2=n(ks[1], (planes, planes, 3, 3)),
        # bn1 (gamma, beta, running_mean, running_var)
        g1=1.0 + n(ks[2], (planes,)), be1=n(ks[3], (planes,)),
        m1=n(ks[4], (planes,)), v1=pos(ks[5], (planes,)),
        # bn2
        g2=1.0 + n(ks[6], (planes,)), be2=n(ks[7], (planes,)),
        m2=n(ks[8], (planes,)), v2=pos(ks[9], (planes,)),
        # shortcut: 1x1 conv (with bias) + bn
        ws=n(ks[10], (planes, in_planes, 1, 1)),
        bs=n(ks[11], (planes,)),
        gs=1.0 + n(ks[12], (planes,)), bes=n(ks[13], (planes,)),
        ms=n(ks[14], (planes,)), vs=pos(ks[15], (planes,)),
    )


def _reference_nchw(x, p, eps=1e-5):
    """Pure-JAX reference (eval-mode BN), NCHW in / NCHW out."""
    conv = lambda x, w: lax.conv_general_dilated(
        x, w, (1, 1), "SAME", dimension_numbers=("NCHW", "OIHW", "NCHW"))
    c = lambda v: v[None, :, None, None]
    bn = lambda x, g, b, m, v: (x - c(m)) / jnp.sqrt(c(v) + eps) * c(g) + c(b)
    out = jnp.maximum(bn(conv(x, p["w1"]), p["g1"], p["be1"], p["m1"], p["v1"]), 0.0)
    out = bn(conv(out, p["w2"]), p["g2"], p["be2"], p["m2"], p["v2"])
    sc = conv(x, p["ws"]) + c(p["bs"])
    sc = bn(sc, p["gs"], p["bes"], p["ms"], p["vs"])
    return jnp.maximum(out + sc, 0.0)


if __name__ == "__main__":
    N, in_planes, H, W = 2, 4, 16, 16
    planes = 8            # in_planes != planes -> shortcut conv branch is used
    drop_rate = 0.1       # nn.Dropout(p=drop_rate) is unused in forward() -> no-op

    key = jax.random.PRNGKey(0)
    kx, kp = jax.random.split(key)
    x = jax.random.normal(kx, (N, in_planes, H, W), jnp.float32)   # NCHW input
    params = make_params(kp, in_planes, planes)

    out = basic_block_dropout_forward(x, params, in_planes, planes, stride=1)
    out = jax.block_until_ready(out)

    ref = _reference_nchw(x, params)
    err = float(jnp.max(jnp.abs(out - ref)))
    assert out.shape == (N, planes, H, W), out.shape
    assert err < 1e-3, f"max abs error {err}"
    print("KERNEL_OK")
</pallas_src>

<mosaic_0001>
module attributes {stable_mosaic.version = 11 : i64} {
  func.func @_block_kernel(%arg0: i32, %arg1: memref<1x4x384xf32, #tpu.memory_space<vmem>>, %arg2: memref<9x8x4xf32, #tpu.memory_space<vmem>>, %arg3: memref<9x8x8xf32, #tpu.memory_space<vmem>>, %arg4: memref<8x4xf32, #tpu.memory_space<vmem>>, %arg5: memref<8x2xf32, #tpu.memory_space<vmem>>, %arg6: memref<1x324xf32, #tpu.memory_space<vmem>>, %arg7: memref<1x8x286xf32, #tpu.memory_space<vmem>>) attributes {dimension_semantics = [#tpu.dimension_semantics<parallel>], iteration_bounds = array<i64: 2>, scalar_prefetch = 0 : i64, scratch_operands = 0 : i64, tpu.core_type = #tpu.core_type<tc>, window_params = [{transform_indices = @transform_0, window_bounds = array<i64: 1, 4, 384>}, {pipeline_mode = #tpu.pipeline_mode<synchronous>, transform_indices = @transform_1, window_bounds = array<i64: 9, 8, 4>}, {pipeline_mode = #tpu.pipeline_mode<synchronous>, transform_indices = @transform_2, window_bounds = array<i64: 9, 8, 8>}, {pipeline_mode = #tpu.pipeline_mode<synchronous>, transform_indices = @transform_3, window_bounds = array<i64: 8, 4>}, {pipeline_mode = #tpu.pipeline_mode<synchronous>, transform_indices = @transform_4, window_bounds = array<i64: 8, 2>}, {pipeline_mode = #tpu.pipeline_mode<synchronous>, transform_indices = @transform_5, window_bounds = array<i64: 1, 324>}, {transform_indices = @transform_6, window_bounds = array<i64: 1, 8, 286>}]} {
    %c0 = arith.constant 0 : index
    %c0_0 = arith.constant 0 : index
    %c0_1 = arith.constant 0 : index
    %0 = vector.load %arg1[%c0, %c0_0, %c0_1] : memref<1x4x384xf32, #tpu.memory_space<vmem>>, vector<1x4x384xf32>
    %1 = vector.shape_cast %0 : vector<1x4x384xf32> to vector<4x384xf32>
    %cst = arith.constant 0.000000e+00 : f32
    %2 = vector.broadcast %cst : f32 to vector<8x324xf32>
    %c0_2 = arith.constant 0 : index
    %c0_3 = arith.constant 0 : index
    %c0_4 = arith.constant 0 : index
    %3 = vector.load %arg2[%c0_2, %c0_3, %c0_4] : memref<9x8x4xf32, #tpu.memory_space<vmem>>, vector<1x8x4xf32>
    %4 = vector.shape_cast %3 : vector<1x8x4xf32> to vector<8x4xf32>
    %5 = vector.extract_strided_slice %1 {offsets = [0, 0], sizes = [4, 324], strides = [1, 1]} : vector<4x384xf32> to vector<4x324xf32>
    %cst_5 = arith.constant dense<0.000000e+00> : vector<8x324xf32>
    %6 = tpu.matmul %4, %5, %cst_5 {dimension_numbers = #tpu.dot_dimension_numbers<[1], [0], [0], [1], [0, 0, 1, 1], [], []>} : vector<8x4xf32>, vector<4x324xf32>, vector<8x324xf32> -> vector<8x324xf32>
    %7 = arith.addf %2, %6 : vector<8x324xf32>
    %c1 = arith.constant 1 : index
    %c0_6 = arith.constant 0 : index
    %c0_7 = arith.constant 0 : index
    %8 = vector.load %arg2[%c1, %c0_6, %c0_7] : memref<9x8x4xf32, #tpu.memory_space<vmem>>, vector<1x8x4xf32>
    %9 = vector.shape_cast %8 : vector<1x8x4xf32> to vector<8x4xf32>
    %10 = vector.extract_strided_slice %1 {offsets = [0, 1], sizes = [4, 324], strides = [1, 1]} : vector<4x384xf32> to vector<4x324xf32>
    %cst_8 = arith.constant dense<0.000000e+00> : vector<8x324xf32>
    %11 = tpu.matmul %9, %10, %cst_8 {dimension_numbers = #tpu.dot_dimension_numbers<[1], [0], [0], [1], [0, 0, 1, 1], [], []>} : vector<8x4xf32>, vector<4x324xf32>, vector<8x324xf32> -> vector<8x324xf32>
    %12 = arith.addf %7, %11 : vector<8x324xf32>
    %c2 = arith.constant 2 : index
    %c0_9 = arith.constant 0 : index
    %c0_10 = arith.constant 0 : index
    %13 = vector.load %arg2[%c2, %c0_9, %c0_10] : memref<9x8x4xf32, #tpu.memory_space<vmem>>, vector<1x8x4xf32>
    %14 = vector.shape_cast %13 : vector<1x8x4xf32> to vector<8x4xf32>
    %15 = vector.extract_strided_slice %1 {offsets = [0, 2], sizes = [4, 324], strides = [1, 1]} : vector<4x384xf32> to vector<4x324xf32>
    %cst_11 = arith.constant dense<0.000000e+00> : vector<8x324xf32>
    %16 = tpu.matmul %14, %15, %cst_11 {dimension_numbers = #tpu.dot_dimension_numbers<[1], [0], [0], [1], [0, 0, 1, 1], [], []>} : vector<8x4xf32>, vector<4x324xf32>, vector<8x324xf32> -> vector<8x324xf32>
    %17 = arith.addf %12, %16 : vector<8x324xf32>
    %c3 = arith.constant 3 : index
    %c0_12 = arith.constant 0 : index
    %c0_13 = arith.constant 0 : index
    %18 = vector.load %arg2[%c3, %c0_12, %c0_13] : memref<9x8x4xf32, #tpu.memory_space<vmem>>, vector<1x8x4xf32>
    %19 = vector.shape_cast %18 : vector<1x8x4xf32> to vector<8x4xf32>
    %20 = vector.extract_strided_slice %1 {offsets = [0, 18], sizes = [4, 324], strides = [1, 1]} : vector<4x384xf32> to vector<4x324xf32>
    %cst_14 = arith.constant dense<0.000000e+00> : vector<8x324xf32>
    %21 = tpu.matmul %19, %20, %cst_14 {dimension_numbers = #tpu.dot_dimension_numbers<[1], [0], [0], [1], [0, 0, 1, 1], [], []>} : vector<8x4xf32>, vector<4x324xf32>, vector<8x324xf32> -> vector<8x324xf32>
    %22 = arith.addf %17, %21 : vector<8x324xf32>
    %c4 = arith.constant 4 : index
    %c0_15 = arith.constant 0 : index
    %c0_16 = arith.constant 0 : index
    %23 = vector.load %arg2[%c4, %c0_15, %c0_16] : memref<9x8x4xf32, #tpu.memory_space<vmem>>, vector<1x8x4xf32>
    %24 = vector.shape_cast %23 : vector<1x8x4xf32> to vector<8x4xf32>
    %25 = vector.extract_strided_slice %1 {offsets = [0, 19], sizes = [4, 324], strides = [1, 1]} : vector<4x384xf32> to vector<4x324xf32>
    %cst_17 = arith.constant dense<0.000000e+00> : vector<8x324xf32>
    %26 = tpu.matmul %24, %25, %cst_17 {dimension_numbers = #tpu.dot_dimension_numbers<[1], [0], [0], [1], [0, 0, 1, 1], [], []>} : vector<8x4xf32>, vector<4x324xf32>, vector<8x324xf32> -> vector<8x324xf32>
    %27 = arith.addf %22, %26 : vector<8x324xf32>
    %c5 = arith.constant 5 : index
    %c0_18 = arith.constant 0 : index
    %c0_19 = arith.constant 0 : index
    %28 = vector.load %arg2[%c5, %c0_18, %c0_19] : memref<9x8x4xf32, #tpu.memory_space<vmem>>, vector<1x8x4xf32>
    %29 = vector.shape_cast %28 : vector<1x8x4xf32> to vector<8x4xf32>
    %30 = vector.extract_strided_slice %1 {offsets = [0, 20], sizes = [4, 324], strides = [1, 1]} : vector<4x384xf32> to vector<4x324xf32>
    %cst_20 = arith.constant dense<0.000000e+00> : vector<8x324xf32>
    %31 = tpu.matmul %29, %30, %cst_20 {dimension_numbers = #tpu.dot_dimension_numbers<[1], [0], [0], [1], [0, 0, 1, 1], [], []>} : vector<8x4xf32>, vector<4x324xf32>, vector<8x324xf32> -> vector<8x324xf32>
    %32 = arith.addf %27, %31 : vector<8x324xf32>
    %c6 = arith.constant 6 : index
    %c0_21 = arith.constant 0 : index
    %c0_22 = arith.constant 0 : index
    %33 = vector.load %arg2[%c6, %c0_21, %c0_22] : memref<9x8x4xf32, #tpu.memory_space<vmem>>, vector<1x8x4xf32>
    %34 = vector.shape_cast %33 : vector<1x8x4xf32> to vector<8x4xf32>
    %35 = vector.extract_strided_slice %1 {offsets = [0, 36], sizes = [4, 324], strides = [1, 1]} : vector<4x384xf32> to vector<4x324xf32>
    %cst_23 = arith.constant dense<0.000000e+00> : vector<8x324xf32>
    %36 = tpu.matmul %34, %35, %cst_23 {dimension_numbers = #tpu.dot_dimension_numbers<[1], [0], [0], [1], [0, 0, 1, 1], [], []>} : vector<8x4xf32>, vector<4x324xf32>, vector<8x324xf32> -> vector<8x324xf32>
    %37 = arith.addf %32, %36 : vector<8x324xf32>
    %c7 = arith.constant 7 : index
    %c0_24 = arith.constant 0 : index
    %c0_25 = arith.constant 0 : index
    %38 = vector.load %arg2[%c7, %c0_24, %c0_25] : memref<9x8x4xf32, #tpu.memory_space<vmem>>, vector<1x8x4xf32>
    %39 = vector.shape_cast %38 : vector<1x8x4xf32> to vector<8x4xf32>
    %40 = vector.extract_strided_slice %1 {offsets = [0, 37], sizes = [4, 324], strides = [1, 1]} : vector<4x384xf32> to vector<4x324xf32>
    %cst_26 = arith.constant dense<0.000000e+00> : vector<8x324xf32>
    %41 = tpu.matmul %39, %40, %cst_26 {dimension_numbers = #tpu.dot_dimension_numbers<[1], [0], [0], [1], [0, 0, 1, 1], [], []>} : vector<8x4xf32>, vector<4x324xf32>, vector<8x324xf32> -> vector<8x324xf32>
    %42 = arith.addf %37, %41 : vector<8x324xf32>
    %c8 = arith.constant 8 : index
    %c0_27 = arith.constant 0 : index
    %c0_28 = arith.constant 0 : index
    %43 = vector.load %arg2[%c8, %c0_27, %c0_28] : memref<9x8x4xf32, #tpu.memory_space<vmem>>, vector<1x8x4xf32>
    %44 = vector.shape_cast %43 : vector<1x8x4xf32> to vector<8x4xf32>
    %45 = vector.extract_strided_slice %1 {offsets = [0, 38], sizes = [4, 324], strides = [1, 1]} : vector<4x384xf32> to vector<4x324xf32>
    %cst_29 = arith.constant dense<0.000000e+00> : vector<8x324xf32>
    %46 = tpu.matmul %44, %45, %cst_29 {dimension_numbers = #tpu.dot_dimension_numbers<[1], [0], [0], [1], [0, 0, 1, 1], [], []>} : vector<8x4xf32>, vector<4x324xf32>, vector<8x324xf32> -> vector<8x324xf32>
    %47 = arith.addf %42, %46 : vector<8x324xf32>
    %c0_30 = arith.constant 0 : index
    %c0_31 = arith.constant 0 : index
    %48 = vector.load %arg5[%c0_30, %c0_31] : memref<8x2xf32, #tpu.memory_space<vmem>>, vector<8x1xf32>
    %49 = vector.broadcast %48 : vector<8x1xf32> to vector<8x324xf32>
    %50 = arith.addf %47, %49 : vector<8x324xf32>
    %cst_32 = arith.constant 0.000000e+00 : f32
    %51 = vector.broadcast %cst_32 : f32 to vector<8x324xf32>
    %52 = arith.maximumf %50, %51 : vector<8x324xf32>
    %c0_33 = arith.constant 0 : index
    %c0_34 = arith.constant 0 : index
    %53 = vector.load %arg6[%c0_33, %c0_34] : memref<1x324xf32, #tpu.memory_space<vmem>>, vector<1x324xf32>
    %54 = vector.broadcast %53 : vector<1x324xf32> to vector<8x324xf32>
    %55 = arith.mulf %52, %54 : vector<8x324xf32>
    %c0_35 = arith.constant 0 : index
    %c0_36 = arith.constant 0 : index
    %56 = vector.load %arg4[%c0_35, %c0_36] : memref<8x4xf32, #tpu.memory_space<vmem>>, vector<8x4xf32>
    %57 = vector.extract_strided_slice %1 {offsets = [0, 38], sizes = [4, 286], strides = [1, 1]} : vector<4x384xf32> to vector<4x286xf32>
    %cst_37 = arith.constant dense<0.000000e+00> : vector<8x286xf32>
    %58 = tpu.matmul %56, %57, %cst_37 {dimension_numbers = #tpu.dot_dimension_numbers<[1], [0], [0], [1], [0, 0, 1, 1], [], []>} : vector<8x4xf32>, vector<4x286xf32>, vector<8x286xf32> -> vector<8x286xf32>
    %c0_38 = arith.constant 0 : index
    %c1_39 = arith.constant 1 : index
    %59 = vector.load %arg5[%c0_38, %c1_39] : memref<8x2xf32, #tpu.memory_space<vmem>>, vector<8x1xf32>
    %60 = vector.broadcast %59 : vector<8x1xf32> to vector<8x286xf32>
    %61 = arith.addf %58, %60 : vector<8x286xf32>
    %c0_40 = arith.constant 0 : index
    %c0_41 = arith.constant 0 : index
    %c0_42 = arith.constant 0 : index
    %62 = vector.load %arg3[%c0_40, %c0_41, %c0_42] : memref<9x8x8xf32, #tpu.memory_space<vmem>>, vector<1x8x8xf32>
    %63 = vector.shape_cast %62 : vector<1x8x8xf32> to vector<8x8xf32>
    %64 = vector.extract_strided_slice %55 {offsets = [0, 0], sizes = [8, 286], strides = [1, 1]} : vector<8x324xf32> to vector<8x286xf32>
    %cst_43 = arith.constant dense<0.000000e+00> : vector<8x286xf32>
    %65 = tpu.matmul %63, %64, %cst_43 {dimension_numbers = #tpu.dot_dimension_numbers<[1], [0], [0], [1], [0, 0, 1, 1], [], []>} : vector<8x8xf32>, vector<8x286xf32>, vector<8x286xf32> -> vector<8x286xf32>
    %66 = arith.addf %61, %65 : vector<8x286xf32>
    %c1_44 = arith.constant 1 : index
    %c0_45 = arith.constant 0 : index
    %c0_46 = arith.constant 0 : index
    %67 = vector.load %arg3[%c1_44, %c0_45, %c0_46] : memref<9x8x8xf32, #tpu.memory_space<vmem>>, vector<1x8x8xf32>
    %68 = vector.shape_cast %67 : vector<1x8x8xf32> to vector<8x8xf32>
    %69 = vector.extract_strided_slice %55 {offsets = [0, 1], sizes = [8, 286], strides = [1, 1]} : vector<8x324xf32> to vector<8x286xf32>
    %cst_47 = arith.constant dense<0.000000e+00> : vector<8x286xf32>
    %70 = tpu.matmul %68, %69, %cst_47 {dimension_numbers = #tpu.dot_dimension_numbers<[1], [0], [0], [1], [0, 0, 1, 1], [], []>} : vector<8x8xf32>, vector<8x286xf32>, vector<8x286xf32> -> vector<8x286xf32>
    %71 = arith.addf %66, %70 : vector<8x286xf32>
    %c2_48 = arith.constant 2 : index
    %c0_49 = arith.constant 0 : index
    %c0_50 = arith.constant 0 : index
    %72 = vector.load %arg3[%c2_48, %c0_49, %c0_50] : memref<9x8x8xf32, #tpu.memory_space<vmem>>, vector<1x8x8xf32>
    %73 = vector.shape_cast %72 : vector<1x8x8xf32> to vector<8x8xf32>
    %74 = vector.extract_strided_slice %55 {offsets = [0, 2], sizes = [8, 286], strides = [1, 1]} : vector<8x324xf32> to vector<8x286xf32>
    %cst_51 = arith.constant dense<0.000000e+00> : vector<8x286xf32>
    %75 = tpu.matmul %73, %74, %cst_51 {dimension_numbers = #tpu.dot_dimension_numbers<[1], [0], [0], [1], [0, 0, 1, 1], [], []>} : vector<8x8xf32>, vector<8x286xf32>, vector<8x286xf32> -> vector<8x286xf32>
    %76 = arith.addf %71, %75 : vector<8x286xf32>
    %c3_52 = arith.constant 3 : index
    %c0_53 = arith.constant 0 : index
    %c0_54 = arith.constant 0 : index
    %77 = vector.load %arg3[%c3_52, %c0_53, %c0_54] : memref<9x8x8xf32, #tpu.memory_space<vmem>>, vector<1x8x8xf32>
    %78 = vector.shape_cast %77 : vector<1x8x8xf32> to vector<8x8xf32>
    %79 = vector.extract_strided_slice %55 {offsets = [0, 18], sizes = [8, 286], strides = [1, 1]} : vector<8x324xf32> to vector<8x286xf32>
    %cst_55 = arith.constant dense<0.000000e+00> : vector<8x286xf32>
    %80 = tpu.matmul %78, %79, %cst_55 {dimension_numbers = #tpu.dot_dimension_numbers<[1], [0], [0], [1], [0, 0, 1, 1], [], []>} : vector<8x8xf32>, vector<8x286xf32>, vector<8x286xf32> -> vector<8x286xf32>
    %81 = arith.addf %76, %80 : vector<8x286xf32>
    %c4_56 = arith.constant 4 : index
    %c0_57 = arith.constant 0 : index
    %c0_58 = arith.constant 0 : index
    %82 = vector.load %arg3[%c4_56, %c0_57, %c0_58] : memref<9x8x8xf32, #tpu.memory_space<vmem>>, vector<1x8x8xf32>
    %83 = vector.shape_cast %82 : vector<1x8x8xf32> to vector<8x8xf32>
    %84 = vector.extract_strided_slice %55 {offsets = [0, 19], sizes = [8, 286], strides = [1, 1]} : vector<8x324xf32> to vector<8x286xf32>
    %cst_59 = arith.constant dense<0.000000e+00> : vector<8x286xf32>
    %85 = tpu.matmul %83, %84, %cst_59 {dimension_numbers = #tpu.dot_dimension_numbers<[1], [0], [0], [1], [0, 0, 1, 1], [], []>} : vector<8x8xf32>, vector<8x286xf32>, vector<8x286xf32> -> vector<8x286xf32>
    %86 = arith.addf %81, %85 : vector<8x286xf32>
    %c5_60 = arith.constant 5 : index
    %c0_61 = arith.constant 0 : index
    %c0_62 = arith.constant 0 : index
    %87 = vector.load %arg3[%c5_60, %c0_61, %c0_62] : memref<9x8x8xf32, #tpu.memory_space<vmem>>, vector<1x8x8xf32>
    %88 = vector.shape_cast %87 : vector<1x8x8xf32> to vector<8x8xf32>
    %89 = vector.extract_strided_slice %55 {offsets = [0, 20], sizes = [8, 286], strides = [1, 1]} : vector<8x324xf32> to vector<8x286xf32>
    %cst_63 = arith.constant dense<0.000000e+00> : vector<8x286xf32>
    %90 = tpu.matmul %88, %89, %cst_63 {dimension_numbers = #tpu.dot_dimension_numbers<[1], [0], [0], [1], [0, 0, 1, 1], [], []>} : vector<8x8xf32>, vector<8x286xf32>, vector<8x286xf32> -> vector<8x286xf32>
    %91 = arith.addf %86, %90 : vector<8x286xf32>
    %c6_64 = arith.constant 6 : index
    %c0_65 = arith.constant 0 : index
    %c0_66 = arith.constant 0 : index
    %92 = vector.load %arg3[%c6_64, %c0_65, %c0_66] : memref<9x8x8xf32, #tpu.memory_space<vmem>>, vector<1x8x8xf32>
    %93 = vector.shape_cast %92 : vector<1x8x8xf32> to vector<8x8xf32>
    %94 = vector.extract_strided_slice %55 {offsets = [0, 36], sizes = [8, 286], strides = [1, 1]} : vector<8x324xf32> to vector<8x286xf32>
    %cst_67 = arith.constant dense<0.000000e+00> : vector<8x286xf32>
    %95 = tpu.matmul %93, %94, %cst_67 {dimension_numbers = #tpu.dot_dimension_numbers<[1], [0], [0], [1], [0, 0, 1, 1], [], []>} : vector<8x8xf32>, vector<8x286xf32>, vector<8x286xf32> -> vector<8x286xf32>
    %96 = arith.addf %91, %95 : vector<8x286xf32>
    %c7_68 = arith.constant 7 : index
    %c0_69 = arith.constant 0 : index
    %c0_70 = arith.constant 0 : index
    %97 = vector.load %arg3[%c7_68, %c0_69, %c0_70] : memref<9x8x8xf32, #tpu.memory_space<vmem>>, vector<1x8x8xf32>
    %98 = vector.shape_cast %97 : vector<1x8x8xf32> to vector<8x8xf32>
    %99 = vector.extract_strided_slice %55 {offsets = [0, 37], sizes = [8, 286], strides = [1, 1]} : vector<8x324xf32> to vector<8x286xf32>
    %cst_71 = arith.constant dense<0.000000e+00> : vector<8x286xf32>
    %100 = tpu.matmul %98, %99, %cst_71 {dimension_numbers = #tpu.dot_dimension_numbers<[1], [0], [0], [1], [0, 0, 1, 1], [], []>} : vector<8x8xf32>, vector<8x286xf32>, vector<8x286xf32> -> vector<8x286xf32>
    %101 = arith.addf %96, %100 : vector<8x286xf32>
    %c8_72 = arith.constant 8 : index
    %c0_73 = arith.constant 0 : index
    %c0_74 = arith.constant 0 : index
    %102 = vector.load %arg3[%c8_72, %c0_73, %c0_74] : memref<9x8x8xf32, #tpu.memory_space<vmem>>, vector<1x8x8xf32>
    %103 = vector.shape_cast %102 : vector<1x8x8xf32> to vector<8x8xf32>
    %104 = vector.extract_strided_slice %55 {offsets = [0, 38], sizes = [8, 286], strides = [1, 1]} : vector<8x324xf32> to vector<8x286xf32>
    %cst_75 = arith.constant dense<0.000000e+00> : vector<8x286xf32>
    %105 = tpu.matmul %103, %104, %cst_75 {dimension_numbers = #tpu.dot_dimension_numbers<[1], [0], [0], [1], [0, 0, 1, 1], [], []>} : vector<8x8xf32>, vector<8x286xf32>, vector<8x286xf32> -> vector<8x286xf32>
    %106 = arith.addf %101, %105 : vector<8x286xf32>
    %cst_76 = arith.constant 0.000000e+00 : f32
    %107 = vector.broadcast %cst_76 : f32 to vector<8x286xf32>
    %108 = arith.maximumf %106, %107 : vector<8x286xf32>
    %c0_77 = arith.constant 0 : index
    %c0_78 = arith.constant 0 : index
    %c0_79 = arith.constant 0 : index
    %109 = vector.load %arg7[%c0_77, %c0_78, %c0_79] : memref<1x8x286xf32, #tpu.memory_space<vmem>>, vector<1x8x286xf32>
    %110 = vector.shape_cast %109 : vector<1x8x286xf32> to vector<8x286xf32>
    %111 = vector.shape_cast %108 : vector<8x286xf32> to vector<1x8x286xf32>
    tpu.vector_store %arg7[%c0_77, %c0_78, %c0_79], %111 {strides = array<i32>} : memref<1x8x286xf32, #tpu.memory_space<vmem>>, vector<1x8x286xf32>,
    return
  }
  func.func @transform_0(%arg0: i32) -> (i32, i32, i32) {
    %c0_i32 = arith.constant 0 : i32
    %c0_i32_0 = arith.constant 0 : i32
    %c0_i32_1 = arith.constant 0 : i32
    return %arg0, %c0_i32, %c0_i32_0 : i32, i32, i32
  }
  func.func @transform_1(%arg0: i32) -> (i32, i32, i32) {
    %c0_i32 = arith.constant 0 : i32
    %c0_i32_0 = arith.constant 0 : i32
    %c0_i32_1 = arith.constant 0 : i32
    %c0_i32_2 = arith.constant 0 : i32
    return %c0_i32, %c0_i32_0, %c0_i32_1 : i32, i32, i32
  }
  func.func @transform_2(%arg0: i32) -> (i32, i32, i32) {
    %c0_i32 = arith.constant 0 : i32
    %c0_i32_0 = arith.constant 0 : i32
    %c0_i32_1 = arith.constant 0 : i32
    %c0_i32_2 = arith.constant 0 : i32
    return %c0_i32, %c0_i32_0, %c0_i32_1 : i32, i32, i32
  }
  func.func @transform_3(%arg0: i32) -> (i32, i32) {
    %c0_i32 = arith.constant 0 : i32
    %c0_i32_0 = arith.constant 0 : i32
    %c0_i32_1 = arith.constant 0 : i32
    return %c0_i32, %c0_i32_0 : i32, i32
  }
  func.func @transform_4(%arg0: i32) -> (i32, i32) {
    %c0_i32 = arith.constant 0 : i32
    %c0_i32_0 = arith.constant 0 : i32
    %c0_i32_1 = arith.constant 0 : i32
    return %c0_i32, %c0_i32_0 : i32, i32
  }
  func.func @transform_5(%arg0: i32) -> (i32, i32) {
    %c0_i32 = arith.constant 0 : i32
    %c0_i32_0 = arith.constant 0 : i32
    %c0_i32_1 = arith.constant 0 : i32
    return %c0_i32, %c0_i32_0 : i32, i32
  }
  func.func @transform_6(%arg0: i32) -> (i32, i32, i32) {
    %c0_i32 = arith.constant 0 : i32
    %c0_i32_0 = arith.constant 0 : i32
    %c0_i32_1 = arith.constant 0 : i32
    return %arg0, %c0_i32, %c0_i32_0 : i32, i32, i32
  }
}

</mosaic_0001>

<llo_original>
// kernel: tpu_custom_call.1
$region0: #{tpu_custom_call.1}
  #allocation0 [shape = 'u32[]', space=smem, size = 0x4, offset = 0x4, fixed_abs, tag = 'smem constant byte address 0x4 - core index']
  #allocation1 [shape = 'u32[144,128]{1,0:T(1,128)}', space=vmem, size = 0x12000, scoped, tag = 'internal scratch']
  %s0 = inlined_call_operand.vmem [shape: f32[2,4,384], index: 0, kind: input, shape index: {}]
  %s1 = inlined_call_operand.vmem [shape: f32[9,8,4], index: 1, kind: input, shape index: {}]
  %s2 = inlined_call_operand.vmem [shape: f32[9,8,8], index: 2, kind: input, shape index: {}]
  %s3 = inlined_call_operand.vmem [shape: f32[8,4], index: 3, kind: input, shape index: {}]
  %s4 = inlined_call_operand.vmem [shape: f32[8,2], index: 4, kind: input, shape index: {}]
  %s5 = inlined_call_operand.vmem [shape: f32[1,324], index: 5, kind: input, shape index: {}]
  %s6 = inlined_call_operand.hbm [shape: f32[2,8,286], index: 6, kind: output, shape index: {}]
  %s7 = sld [smem:[#allocation0]]
  $region57: #{tpu_custom_call.1} parent=0
    _
  %s9 = ssub.s32 1, %s7
  %s10 = scalar_select 0, %s9, %s7
  $region1: #{tpu_custom_call.1} parent=0
    #allocation2 [shape = 'u8[24576]{0}', space=vmem, size = 0x6000, scoped, tag = 'output window, operand 0']
    #allocation3 [shape = 's32[2]{0}', space=sflag, size = 0x8, scoped, tag = 'scoped memory for tpu_custom_call.1']
    %11 = vsyncpa [#allocation3], 0
    %s12 = scalar_lea.sflag [#allocation3], 1
    %13 = vsyncpa %s12, 0
    loop: start=0, step=1, limit=4
    $region2: #{tpu_custom_call.1} parent=1 // loop_pre_header
      _
    $region3: #{tpu_custom_call.1} parent=1 // loop_header
      %s15 = sphi 0, %s19
      %p16 = scmp.ge.s32.totalorder %s15, 4
      %s25 = sphi 0, %s27
      %s28 = sphi 0, %s25
      %s29 = sphi 0, %s28
      %s45 = sphi 0, %s29
      %s49 = sphi 0, %s49
      %s51 = sphi 0, %s49
      %s52 = sphi 0, %s51
      %s66 = sphi 0, %s52
      %s70 = sphi 0, %s70
      %s72 = sphi 0, %s70
      %s73 = sphi 0, %s72
      %s87 = sphi 0, %s73
      %s91 = sphi 0, %s91
      %s93 = sphi 0, %s91
      %s94 = sphi 0, %s93
      %s108 = sphi 0, %s94
      %s112 = sphi 0, %s112
      %s114 = sphi 0, %s112
      %s115 = sphi 0, %s114
      %s129 = sphi 0, %s115
      %s133 = sphi 0, %s133
      %s135 = sphi 0, %s133
      %s136 = sphi 0, %s135
      %s150 = sphi 0, %s136
      %s156 = sphi 0, %s158
      %s159 = sphi 0, %s156
      %s160 = sphi 0, %s159
      %s176 = sphi 0, %s160
    $region4: #{tpu_custom_call.1} parent=1 // loop_header_branch
      %18 = sbr.rel (%p16) target = $region8
    $region5: #{tpu_custom_call.1} parent=1 // loop_body
      %s20 = ssub.s32 %s15, 1
      %s21 = ssub.s32 %s15, 2
      %s22 = sadd.s32 %s15, 1
      %s23 = ssub.s32 %s15, %s22
      %p24 = scmp.eq.s32.totalorder %s23, 0
      %s26 = sadd.s32 %s25, 1
      %s27 = scalar_select %p24, %s25, %s26
      %p30 = pneg %p24
      %p31 = scmp.eq.s32.totalorder %s15, 1
      %p32 = por %p30, %p31
      %p33 = scmp.ne.s32.totalorder %s25, %s28
      %p34 = scmp.eq.s32.totalorder %s15, 0
      %p35 = por %p33, %p34
      %p36 = scmp.ne.s32.totalorder %s25, %s28
      %p37 = scmp.eq.s32.totalorder %s20, 1
      %p38 = por %p36, %p37
      %p39 = scmp.ne.s32.totalorder %s28, %s29
      %p40 = scmp.eq.s32.totalorder %s20, 0
      %p41 = por %p39, %p40
      %p42 = scmp.ne.s32.totalorder %s28, %s29
      %p43 = scmp.eq.s32.totalorder %s21, 1
      %p44 = por %p42, %p43
      %p46 = scmp.ne.s32.totalorder %s29, %s45
      %p47 = scmp.eq.s32.totalorder %s21, 0
      %p48 = por %p46, %p47
      %s50 = sadd.s32 %s49, 1
      %p53 = scmp.eq.s32.totalorder %s15, 1
      %p54 = scmp.ne.s32.totalorder %s49, %s51
      %p55 = scmp.eq.s32.totalorder %s15, 0
      %p56 = por %p54, %p55
      %p57 = scmp.ne.s32.totalorder %s49, %s51
      %p58 = scmp.eq.s32.totalorder %s20, 1
      %p59 = por %p57, %p58
      %p60 = scmp.ne.s32.totalorder %s51, %s52
      %p61 = scmp.eq.s32.totalorder %s20, 0
      %p62 = por %p60, %p61
      %p63 = scmp.ne.s32.totalorder %s51, %s52
      %p64 = scmp.eq.s32.totalorder %s21, 1
      %p65 = por %p63, %p64
      %p67 = scmp.ne.s32.totalorder %s52, %s66
      %p68 = scmp.eq.s32.totalorder %s21, 0
      %p69 = por %p67, %p68
      %s71 = sadd.s32 %s70, 1
      %p74 = scmp.eq.s32.totalorder %s15, 1
      %p75 = scmp.ne.s32.totalorder %s70, %s72
      %p76 = scmp.eq.s32.totalorder %s15, 0
      %p77 = por %p75, %p76
      %p78 = scmp.ne.s32.totalorder %s70, %s72
      %p79 = scmp.eq.s32.totalorder %s20, 1
      %p80 = por %p78, %p79
      %p81 = scmp.ne.s32.totalorder %s72, %s73
      %p82 = scmp.eq.s32.totalorder %s20, 0
      %p83 = por %p81, %p82
      %p84 = scmp.ne.s32.totalorder %s72, %s73
      %p85 = scmp.eq.s32.totalorder %s21, 1
      %p86 = por %p84, %p85
      %p88 = scmp.ne.s32.totalorder %s73, %s87
      %p89 = scmp.eq.s32.totalorder %s21, 0
      %p90 = por %p88, %p89
      %s92 = sadd.s32 %s91, 1
      %p95 = scmp.eq.s32.totalorder %s15, 1
      %p96 = scmp.ne.s32.totalorder %s91, %s93
      %p97 = scmp.eq.s32.totalorder %s15, 0
      %p98 = por %p96, %p97
      %p99 = scmp.ne.s32.totalorder %s91, %s93
      %p100 = scmp.eq.s32.totalorder %s20, 1
      %p101 = por %p99, %p100
      %p102 = scmp.ne.s32.totalorder %s93, %s94
      %p103 = scmp.eq.s32.totalorder %s20, 0
      %p104 = por %p102, %p103
      %p105 = scmp.ne.s32.totalorder %s93, %s94
      %p106 = scmp.eq.s32.totalorder %s21, 1
      %p107 = por %p105, %p106
      %p109 = scmp.ne.s32.totalorder %s94, %s108
      %p110 = scmp.eq.s32.totalorder %s21, 0
      %p111 = por %p109, %p110
      %s113 = sadd.s32 %s112, 1
      %p116 = scmp.eq.s32.totalorder %s15, 1
      %p117 = scmp.ne.s32.totalorder %s112, %s114
      %p118 = scmp.eq.s32.totalorder %s15, 0
      %p119 = por %p117, %p118
      %p120 = scmp.ne.s32.totalorder %s112, %s114
      %p121 = scmp.eq.s32.totalorder %s20, 1
      %p122 = por %p120, %p121
      %p123 = scmp.ne.s32.totalorder %s114, %s115
      %p124 = scmp.eq.s32.totalorder %s20, 0
      %p125 = por %p123, %p124
      %p126 = scmp.ne.s32.totalorder %s114, %s115
      %p127 = scmp.eq.s32.totalorder %s21, 1
      %p128 = por %p126, %p127
      %p130 = scmp.ne.s32.totalorder %s115, %s129
      %p131 = scmp.eq.s32.totalorder %s21, 0
      %p132 = por %p130, %p131
      %s134 = sadd.s32 %s133, 1
      %p137 = scmp.eq.s32.totalorder %s15, 1
      %p138 = scmp.ne.s32.totalorder %s133, %s135
      %p139 = scmp.eq.s32.totalorder %s15, 0
      %p140 = por %p138, %p139
      %p141 = scmp.ne.s32.totalorder %s133, %s135
      %p142 = scmp.eq.s32.totalorder %s20, 1
      %p143 = por %p141, %p142
      %p144 = scmp.ne.s32.totalorder %s135, %s136
      %p145 = scmp.eq.s32.totalorder %s20, 0
      %p146 = por %p144, %p145
      %p147 = scmp.ne.s32.totalorder %s135, %s136
      %p148 = scmp.eq.s32.totalorder %s21, 1
      %p149 = por %p147, %p148
      %p151 = scmp.ne.s32.totalorder %s136, %s150
      %p152 = scmp.eq.s32.totalorder %s21, 0
      %p153 = por %p151, %p152
      %s154 = ssub.s32 %s15, %s22
      %p155 = scmp.eq.s32.totalorder %s154, 0
      %s157 = sadd.s32 %s156, 1
      %s158 = scalar_select %p155, %s156, %s157
      %p161 = pneg %p155
      %p162 = scmp.eq.s32.totalorder %s15, 1
      %p163 = por %p161, %p162
      %p164 = scmp.ne.s32.totalorder %s156, %s159
      %p165 = scmp.eq.s32.totalorder %s15, 0
      %p166 = por %p164, %p165
      %p167 = scmp.ne.s32.totalorder %s156, %s159
      %p168 = scmp.eq.s32.totalorder %s20, 1
      %p169 = por %p167, %p168
      %p170 = scmp.ne.s32.totalorder %s159, %s160
      %p171 = scmp.eq.s32.totalorder %s20, 0
      %p172 = por %p170, %p171
      %p173 = scmp.ne.s32.totalorder %s159, %s160
      %p174 = scmp.eq.s32.totalorder %s21, 1
      %p175 = por %p173, %p174
      %p177 = scmp.ne.s32.totalorder %s160, %s176
      %p178 = scmp.eq.s32.totalorder %s21, 0
      %p179 = por %p177, %p178
      %p180 = scmp.le.s32.totalorder 1, %s15
      %p181 = scmp.lt.s32.totalorder %s15, 3
      %p182 = pnand %p180, %p181
      %p183 = pneg %p182
      // Predicated region
      $region9: #{tpu_custom_call.1} parent=5 // pred_check
        _
      $region10: #{tpu_custom_call.1} parent=5 // pred_check_branch
        %185 = sbr.rel (%p182) target = $region12
      $region11: #{tpu_custom_call.1} parent=5 // pred_region
        %s186 = ssub.s32 %s15, 1
        // Predicated region
        $region13: #{tpu_custom_call.1} parent=11 // pred_check
          %p187 = pneg %p62
        $region14: #{tpu_custom_call.1} parent=11 // pred_check_branch
          %189 = sbr.rel (%p187) target = $region16
        $region15: #{tpu_custom_call.1} parent=11 // pred_region
          _
        $region16: #{tpu_custom_call.1} parent=11 // pred_fallthru
          _
        // Predicated region
        $region17: #{tpu_custom_call.1} parent=11 // pred_check
          %p190 = pneg %p83
        $region18: #{tpu_custom_call.1} parent=11 // pred_check_branch
          %192 = sbr.rel (%p190) target = $region20
        $region19: #{tpu_custom_call.1} parent=11 // pred_region
          _
        $region20: #{tpu_custom_call.1} parent=11 // pred_fallthru
          _
        // Predicated region
        $region21: #{tpu_custom_call.1} parent=11 // pred_check
          %p193 = pneg %p104
        $region22: #{tpu_custom_call.1} parent=11 // pred_check_branch
          %195 = sbr.rel (%p193) target = $region24
        $region23: #{tpu_custom_call.1} parent=11 // pred_region
          _
        $region24: #{tpu_custom_call.1} parent=11 // pred_fallthru
          _
        // Predicated region
        $region25: #{tpu_custom_call.1} parent=11 // pred_check
          %p196 = pneg %p125
        $region26: #{tpu_custom_call.1} parent=11 // pred_check_branch
          %198 = sbr.rel (%p196) target = $region28
        $region27: #{tpu_custom_call.1} parent=11 // pred_region
          _
        $region28: #{tpu_custom_call.1} parent=11 // pred_fallthru
          _
        // Predicated region
        $region29: #{tpu_custom_call.1} parent=11 // pred_check
          %p199 = pneg %p146
        $region30: #{tpu_custom_call.1} parent=11 // pred_check_branch
          %201 = sbr.rel (%p199) target = $region32
        $region31: #{tpu_custom_call.1} parent=11 // pred_region
          _
        $region32: #{tpu_custom_call.1} parent=11 // pred_fallthru
          _
      $region12: #{tpu_custom_call.1} parent=5 // pred_fallthru
        _
      %p202 = scmp.lt.s32.totalorder %s15, 2
      // Predicated region
      $region33: #{tpu_custom_call.1} parent=5 // pred_check
        %p203 = pneg %p202
      $region34: #{tpu_custom_call.1} parent=5 // pred_check_branch
        %205 = sbr.rel (%p203) target = $region36
      $region35: #{tpu_custom_call.1} parent=5 // pred_region
        // Predicated region
        $region37: #{tpu_custom_call.1} parent=35 // pred_check
          %p206 = pneg %p35
        $region38: #{tpu_custom_call.1} parent=35 // pred_check_branch
          %208 = sbr.rel (%p206) target = $region40
        $region39: #{tpu_custom_call.1} parent=35 // pred_region
          %p209 = scmp.lt.s32.totalorder %s15, 1
          %s210 = scalar_select %p209, %s15, 1
          %s211 = smul.addr %s210, 3
          %s212 = smul.addr %s211, 4
          %s213 = scalar_lea.vmem %s0, %s212
        $region40: #{tpu_custom_call.1} parent=35 // pred_fallthru
          _
      $region36: #{tpu_custom_call.1} parent=5 // pred_fallthru
        _
      %p214 = scmp.le.s32.totalorder 1, %s15
      %p215 = scmp.lt.s32.totalorder %s15, 3
      %p216 = pnand %p214, %p215
      %p217 = pneg %p216
      // Predicated region
      $region41: #{tpu_custom_call.1} parent=5 // pred_check
        _
      $region42: #{tpu_custom_call.1} parent=5 // pred_check_branch
        %219 = sbr.rel (%p216) target = $region44
      $region43: #{tpu_custom_call.1} parent=5 // pred_region
        %s220 = ssub.s32 %s15, 1
        %p221 = scmp.lt.s32.totalorder %s20, 1
        %s222 = scalar_select %p221, %s20, 1
        %s223 = smul.addr %s222, 3
        %s224 = smul.addr %s223, 4
        %s225 = scalar_lea.vmem %s0, %s224
        %p226 = pneg %p41
        %p227 = pneg %p38
        %p228 = pneg %p62
        %p229 = pneg %p59
        %p230 = pneg %p83
        %p231 = pneg %p80
        %p232 = pneg %p104
        %p233 = pneg %p101
        %p234 = pneg %p125
        %p235 = pneg %p122
        %p236 = pneg %p146
        %p237 = pneg %p143
        %p238 = pneg %p172
        %p239 = pneg %p169
        %s240 = sand.u32 %s159, 1
        %s241 = scalar_lea.sflag [#allocation3], %s240
        %s242 = sand.u32 %s159, 1
        %s243 = smul.addr %s242, 24
        %s244 = scalar_lea.vmem [#allocation2], %s243
        %p245 = scmp.lt.s32.totalorder %s20, 1
        %s246 = scalar_select %p245, %s20, 1
        %s247 = smul.addr %s246, 3
        %s248 = smul.addr %s247, 4
        %s249 = scalar_lea.vmem %s0, %s248
        %v250 = vld [vmem:[%s249] sm:$0xff]
        %v251 = vld [vmem:[%s249 + $0x8] sm:$0xf]
        %v252 = vld [vmem:[%s1] sm:$0xff]
        %s253 = scalar_lea.vmem %s1, 8
        %v254 = vld [vmem:[%s253] sm:$0xff]
        %v257 = vcombine.high %v250, %v250
        %258 = vrot.lane.b32.xlu0 %v250, 127
        %v259 = vpop.permute.xlu0 %258
        %260 = vrot.lane.b32.xlu0 %v257, 127
        %v261 = vpop.permute.xlu0 %260
        %262 = vrot.lane.b32.xlu0 %v251, 127
        %v263 = vpop.permute.xlu0 %262
        %vm264 = vcmask 1039360
        %v265 = vsel %vm264, %v259, %v261
        %v266 = vsel %vm264, %v261, %v263
        %vm267 = vcmask 31744
        %v269 = vsel %vm267, %v254, 0
        %vm271 = vcmask 1043456
        %v272 = vsel %vm271, %v265, 0
        %v274 = vsel %vm271, %v266, 0
        %v276 = vsel %vm271, %v263, 0
        %278 = vmatprep.subr.mxu0 %v274
        %279 = vmatpush1.msra.mxu0 %v272
        %280 = vmatprep.subr.mxu0 0.0
        %281 = vmatpush1.msra.mxu0 0.0
        %282 = vmatprep.subr.mxu0 0.0
        %283 = vmatpush1.msra.mxu0 0.0
        %284 = vmatprep.subr.mxu0 0.0
        %285 = vmatpush1.msra.mxu0 0.0
        %286 = vmatprep.subr.mxu0 0.0
        %287 = vmatpush1.msra.mxu0 0.0
        %288 = vmatprep.subr.mxu0 0.0
        %289 = vmatpush1.msra.mxu0 0.0
        %290 = vmatprep.subr.mxu0 0.0
        %291 = vmatpush1.msra.mxu0 0.0
        %292 = vmatprep.subr.mxu0 0.0
        %293 = vmatpush1.msra.mxu0 0.0
        %294 = vmatprep.subr.mxu0 0.0
        %295 = vmatpush1.msra.mxu0 0.0
        %296 = vmatprep.subr.mxu0 0.0
        %297 = vmatpush1.msra.mxu0 0.0
        %298 = vmatprep.subr.mxu0 0.0
        %299 = vmatpush1.msra.mxu0 0.0
        %300 = vmatprep.subr.mxu0 0.0
        %301 = vmatpush1.msra.mxu0 0.0
        %302 = vmatprep.subr.mxu0 0.0
        %303 = vmatpush1.msra.mxu0 0.0
        %304 = vmatprep.subr.mxu0 0.0
        %305 = vmatpush1.msra.mxu0 0.0
        %306 = vmatprep.subr.mxu0 0.0
        %307 = vmatpush1.msra.mxu0 0.0
        %308 = vmatprep.subr.mxu0 0.0
        %309 = vmatpush1.msra.mxu0 0.0
        %310 = vmatprep.subr.mxu0 0.0
        %311 = vmatpush1.msra.mxu0 0.0
        %312 = vmatprep.subr.mxu0 0.0
        %313 = vmatpush1.msra.mxu0 0.0
        %314 = vmatprep.subr.mxu0 0.0
        %315 = vmatpush1.msra.mxu0 0.0
        %316 = vmatprep.subr.mxu0 0.0
        %317 = vmatpush1.msra.mxu0 0.0
        %318 = vmatprep.subr.mxu0 0.0
        %319 = vmatpush1.msra.mxu0 0.0
        %320 = vmatprep.subr.mxu0 0.0
        %321 = vmatpush1.msra.mxu0 0.0
        %322 = vmatprep.subr.mxu0 0.0
        %323 = vmatpush1.msra.mxu0 0.0
        %324 = vmatprep.subr.mxu0 0.0
        %325 = vmatpush1.msra.mxu0 0.0
        %326 = vmatprep.subr.mxu0 0.0
        %327 = vmatpush1.msra.mxu0 0.0
        %328 = vmatprep.subr.mxu0 0.0
        %329 = vmatpush1.msra.mxu0 0.0
        %330 = vmatprep.subr.mxu0 0.0
        %331 = vmatpush1.msra.mxu0 0.0
        %332 = vmatprep.subr.mxu0 0.0
        %333 = vmatpush1.msra.mxu0 0.0
        %334 = vmatprep.subr.mxu0 0.0
        %335 = vmatpush1.msra.mxu0 0.0
        %336 = vmatprep.subr.mxu0 0.0
        %337 = vmatpush1.msra.mxu0 0.0
        %338 = vmatprep.subr.mxu0 0.0
        %339 = vmatpush1.msra.mxu0 0.0
        %340 = vmatprep.subr.mxu0 0.0
        %341 = vmatpush1.msra.mxu0 0.0
        %342 = vmatprep.mubr.f32.mxu0 0.0
        %343 = vmatmul.mubr.f32.gmra.mrb[0].mxu0 %v269
        %v344 = vpop.f32.mrb[0].mxu0
        %v345 = vadd.f32 0.0, %v344
        %v346 = vpop.f32.mrb[0].mxu0
        %v347 = vadd.f32 0.0, %v346
        %348 = vdwg.mxu0
        %349 = vmatprep.subr.mxu0 0.0
        %350 = vmatpush1.msra.mxu0 %v276
        %351 = vmatprep.subr.mxu0 0.0
        %352 = vmatpush1.msra.mxu0 0.0
        %353 = vmatprep.subr.mxu0 0.0
        %354 = vmatpush1.msra.mxu0 0.0
        %355 = vmatprep.subr.mxu0 0.0
        %356 = vmatpush1.msra.mxu0 0.0
        %357 = vmatprep.subr.mxu0 0.0
        %358 = vmatpush1.msra.mxu0 0.0
        %359 = vmatprep.subr.mxu0 0.0
        %360 = vmatpush1.msra.mxu0 0.0
        %361 = vmatprep.subr.mxu0 0.0
        %362 = vmatpush1.msra.mxu0 0.0
        %363 = vmatprep.subr.mxu0 0.0
        %364 = vmatpush1.msra.mxu0 0.0
        %365 = vmatprep.subr.mxu0 0.0
        %366 = vmatpush1.msra.mxu0 0.0
        %367 = vmatprep.subr.mxu0 0.0
        %368 = vmatpush1.msra.mxu0 0.0
        %369 = vmatprep.subr.mxu0 0.0
        %370 = vmatpush1.msra.mxu0 0.0
        %371 = vmatprep.subr.mxu0 0.0
        %372 = vmatpush1.msra.mxu0 0.0
        %373 = vmatprep.subr.mxu0 0.0
        %374 = vmatpush1.msra.mxu0 0.0
        %375 = vmatprep.subr.mxu0 0.0
        %376 = vmatpush1.msra.mxu0 0.0
        %377 = vmatprep.subr.mxu0 0.0
        %378 = vmatpush1.msra.mxu0 0.0
        %379 = vmatprep.subr.mxu0 0.0
        %380 = vmatpush1.msra.mxu0 0.0
        %381 = vmatprep.subr.mxu0 0.0
        %382 = vmatpush1.msra.mxu0 0.0
        %383 = vmatprep.subr.mxu0 0.0
        %384 = vmatpush1.msra.mxu0 0.0
        %385 = vmatprep.subr.mxu0 0.0
        %386 = vmatpush1.msra.mxu0 0.0
        %387 = vmatprep.subr.mxu0 0.0
        %388 = vmatpush1.msra.mxu0 0.0
        %389 = vmatprep.subr.mxu0 0.0
        %390 = vmatpush1.msra.mxu0 0.0
        %391 = vmatprep.subr.mxu0 0.0
        %392 = vmatpush1.msra.mxu0 0.0
        %393 = vmatprep.subr.mxu0 0.0
        %394 = vmatpush1.msra.mxu0 0.0
        %395 = vmatprep.subr.mxu0 0.0
        %396 = vmatpush1.msra.mxu0 0.0
        %397 = vmatprep.subr.mxu0 0.0
        %398 = vmatpush1.msra.mxu0 0.0
        %399 = vmatprep.subr.mxu0 0.0
        %400 = vmatpush1.msra.mxu0 0.0
        %401 = vmatprep.subr.mxu0 0.0
        %402 = vmatpush1.msra.mxu0 0.0
        %403 = vmatprep.subr.mxu0 0.0
        %404 = vmatpush1.msra.mxu0 0.0
        %405 = vmatprep.subr.mxu0 0.0
        %406 = vmatpush1.msra.mxu0 0.0
        %407 = vmatprep.subr.mxu0 0.0
        %408 = vmatpush1.msra.mxu0 0.0
        %409 = vmatprep.subr.mxu0 0.0
        %410 = vmatpush1.msra.mxu0 0.0
        %411 = vmatprep.subr.mxu0 0.0
        %412 = vmatpush1.msra.mxu0 0.0
        %413 = vmatprep.mubr.f32.mxu0 0.0
        %414 = vmatmul.mubr.f32.gmra.mrb[0].mxu0 %v269
        %v415 = vpop.f32.mrb[0].mxu0
        %v416 = vadd.f32 0.0, %v415
        %v417 = vpop.f32.mrb[0].mxu0
        %418 = vdwg.mxu0
        %v420 = vsel %vm267, %v252, 0
        %v422 = vsel %vm271, %v250, 0
        %v424 = vsel %vm271, %v257, 0
        %v426 = vsel %vm271, %v251, 0
        %428 = vmatprep.subr.mxu0 %v424
        %429 = vmatpush1.msra.mxu0 %v422
        %430 = vmatprep.subr.mxu0 0.0
        %431 = vmatpush1.msra.mxu0 0.0
        %432 = vmatprep.subr.mxu0 0.0
        %433 = vmatpush1.msra.mxu0 0.0
        %434 = vmatprep.subr.mxu0 0.0
        %435 = vmatpush1.msra.mxu0 0.0
        %436 = vmatprep.subr.mxu0 0.0
        %437 = vmatpush1.msra.mxu0 0.0
        %438 = vmatprep.subr.mxu0 0.0
        %439 = vmatpush1.msra.mxu0 0.0
        %440 = vmatprep.subr.mxu0 0.0
        %441 = vmatpush1.msra.mxu0 0.0
        %442 = vmatprep.subr.mxu0 0.0
        %443 = vmatpush1.msra.mxu0 0.0
        %444 = vmatprep.subr.mxu0 0.0
        %445 = vmatpush1.msra.mxu0 0.0
        %446 = vmatprep.subr.mxu0 0.0
        %447 = vmatpush1.msra.mxu0 0.0
        %448 = vmatprep.subr.mxu0 0.0
        %449 = vmatpush1.msra.mxu0 0.0
        %450 = vmatprep.subr.mxu0 0.0
        %451 = vmatpush1.msra.mxu0 0.0
        %452 = vmatprep.subr.mxu0 0.0
        %453 = vmatpush1.msra.mxu0 0.0
        %454 = vmatprep.subr.mxu0 0.0
        %455 = vmatpush1.msra.mxu0 0.0
        %456 = vmatprep.subr.mxu0 0.0
        %457 = vmatpush1.msra.mxu0 0.0
        %458 = vmatprep.subr.mxu0 0.0
        %459 = vmatpush1.msra.mxu0 0.0
        %460 = vmatprep.subr.mxu0 0.0
        %461 = vmatpush1.msra.mxu0 0.0
        %462 = vmatprep.subr.mxu0 0.0
        %463 = vmatpush1.msra.mxu0 0.0
        %464 = vmatprep.subr.mxu0 0.0
        %465 = vmatpush1.msra.mxu0 0.0
        %466 = vmatprep.subr.mxu0 0.0
        %467 = vmatpush1.msra.mxu0 0.0
        %468 = vmatprep.subr.mxu0 0.0
        %469 = vmatpush1.msra.mxu0 0.0
        %470 = vmatprep.subr.mxu0 0.0
        %471 = vmatpush1.msra.mxu0 0.0
        %472 = vmatprep.subr.mxu0 0.0
        %473 = vmatpush1.msra.mxu0 0.0
        %474 = vmatprep.subr.mxu0 0.0
        %475 = vmatpush1.msra.mxu0 0.0
        %476 = vmatprep.subr.mxu0 0.0
        %477 = vmatpush1.msra.mxu0 0.0
        %478 = vmatprep.subr.mxu0 0.0
        %479 = vmatpush1.msra.mxu0 0.0
        %480 = vmatprep.subr.mxu0 0.0
        %481 = vmatpush1.msra.mxu0 0.0
        %482 = vmatprep.subr.mxu0 0.0
        %483 = vmatpush1.msra.mxu0 0.0
        %484 = vmatprep.subr.mxu0 0.0
        %485 = vmatpush1.msra.mxu0 0.0
        %486 = vmatprep.subr.mxu0 0.0
        %487 = vmatpush1.msra.mxu0 0.0
        %488 = vmatprep.subr.mxu0 0.0
        %489 = vmatpush1.msra.mxu0 0.0
        %490 = vmatprep.subr.mxu0 0.0
        %491 = vmatpush1.msra.mxu0 0.0
        %492 = vmatprep.mubr.f32.mxu0 0.0
        %493 = vmatmul.mubr.f32.gmra.mrb[0].mxu0 %v420
        %v494 = vpop.f32.mrb[0].mxu0
        %v495 = vadd.f32 %v345, %v494
        %v496 = vpop.f32.mrb[0].mxu0
        %v497 = vadd.f32 %v347, %v496
        %498 = vdwg.mxu0
        %499 = vmatprep.subr.mxu0 0.0
        %500 = vmatpush1.msra.mxu0 %v426
        %501 = vmatprep.subr.mxu0 0.0
        %502 = vmatpush1.msra.mxu0 0.0
        %503 = vmatprep.subr.mxu0 0.0
        %504 = vmatpush1.msra.mxu0 0.0
        %505 = vmatprep.subr.mxu0 0.0
        %506 = vmatpush1.msra.mxu0 0.0
        %507 = vmatprep.subr.mxu0 0.0
        %508 = vmatpush1.msra.mxu0 0.0
        %509 = vmatprep.subr.mxu0 0.0
        %510 = vmatpush1.msra.mxu0 0.0
        %511 = vmatprep.subr.mxu0 0.0
        %512 = vmatpush1.msra.mxu0 0.0
        %513 = vmatprep.subr.mxu0 0.0
        %514 = vmatpush1.msra.mxu0 0.0
        %515 = vmatprep.subr.mxu0 0.0
        %516 = vmatpush1.msra.mxu0 0.0
        %517 = vmatprep.subr.mxu0 0.0
        %518 = vmatpush1.msra.mxu0 0.0
        %519 = vmatprep.subr.mxu0 0.0
        %520 = vmatpush1.msra.mxu0 0.0
        %521 = vmatprep.subr.mxu0 0.0
        %522 = vmatpush1.msra.mxu0 0.0
        %523 = vmatprep.subr.mxu0 0.0
        %524 = vmatpush1.msra.mxu0 0.0
        %525 = vmatprep.subr.mxu0 0.0
        %526 = vmatpush1.msra.mxu0 0.0
        %527 = vmatprep.subr.mxu0 0.0
        %528 = vmatpush1.msra.mxu0 0.0
        %529 = vmatprep.subr.mxu0 0.0
        %530 = vmatpush1.msra.mxu0 0.0
        %531 = vmatprep.subr.mxu0 0.0
        %532 = vmatpush1.msra.mxu0 0.0
        %533 = vmatprep.subr.mxu0 0.0
        %534 = vmatpush1.msra.mxu0 0.0
        %535 = vmatprep.subr.mxu0 0.0
        %536 = vmatpush1.msra.mxu0 0.0
        %537 = vmatprep.subr.mxu0 0.0
        %538 = vmatpush1.msra.mxu0 0.0
        %539 = vmatprep.subr.mxu0 0.0
        %540 = vmatpush1.msra.mxu0 0.0
        %541 = vmatprep.subr.mxu0 0.0
        %542 = vmatpush1.msra.mxu0 0.0
        %543 = vmatprep.subr.mxu0 0.0
        %544 = vmatpush1.msra.mxu0 0.0
        %545 = vmatprep.subr.mxu0 0.0
        %546 = vmatpush1.msra.mxu0 0.0
        %547 = vmatprep.subr.mxu0 0.0
        %548 = vmatpush1.msra.mxu0 0.0
        %549 = vmatprep.subr.mxu0 0.0
        %550 = vmatpush1.msra.mxu0 0.0
        %551 = vmatprep.subr.mxu0 0.0
        %552 = vmatpush1.msra.mxu0 0.0
        %553 = vmatprep.subr.mxu0 0.0
        %554 = vmatpush1.msra.mxu0 0.0
        %555 = vmatprep.subr.mxu0 0.0
        %556 = vmatpush1.msra.mxu0 0.0
        %557 = vmatprep.subr.mxu0 0.0
        %558 = vmatpush1.msra.mxu0 0.0
        %559 = vmatprep.subr.mxu0 0.0
        %560 = vmatpush1.msra.mxu0 0.0
        %561 = vmatprep.subr.mxu0 0.0
        %562 = vmatpush1.msra.mxu0 0.0
        %563 = vmatprep.mubr.f32.mxu0 0.0
        %564 = vmatmul.mubr.f32.gmra.mrb[0].mxu0 %v420
        %v565 = vpop.f32.mrb[0].mxu0
        %v566 = vadd.f32 %v416, %v565
        %v567 = vpop.f32.mrb[0].mxu0
        %568 = vdwg.mxu0
        %s569 = scalar_lea.vmem %s1, 16
        %v570 = vld [vmem:[%s569] sm:$0xff]
        %571 = vrot.lane.b32.xlu0 %v250, 126
        %v572 = vpop.permute.xlu0 %571
        %573 = vrot.lane.b32.xlu0 %v257, 126
        %v574 = vpop.permute.xlu0 %573
        %575 = vrot.lane.b32.xlu0 %v251, 126
        %v576 = vpop.permute.xlu0 %575
        %vm577 = vcmask 1031168
        %v578 = vsel %vm577, %v572, %v574
        %v579 = vsel %vm577, %v574, %v576
        %v581 = vsel %vm267, %v570, 0
        %v583 = vsel %vm271, %v578, 0
        %v585 = vsel %vm271, %v579, 0
        %v587 = vsel %vm271, %v576, 0
        %589 = vmatprep.subr.mxu0 %v585
        %590 = vmatpush1.msra.mxu0 %v583
        %591 = vmatprep.subr.mxu0 0.0
        %592 = vmatpush1.msra.mxu0 0.0
        %593 = vmatprep.subr.mxu0 0.0
        %594 = vmatpush1.msra.mxu0 0.0
        %595 = vmatprep.subr.mxu0 0.0
        %596 = vmatpush1.msra.mxu0 0.0
        %597 = vmatprep.subr.mxu0 0.0
        %598 = vmatpush1.msra.mxu0 0.0
        %599 = vmatprep.subr.mxu0 0.0
        %600 = vmatpush1.msra.mxu0 0.0
        %601 = vmatprep.subr.mxu0 0.0
        %602 = vmatpush1.msra.mxu0 0.0
        %603 = vmatprep.subr.mxu0 0.0
        %604 = vmatpush1.msra.mxu0 0.0
        %605 = vmatprep.subr.mxu0 0.0
        %606 = vmatpush1.msra.mxu0 0.0
        %607 = vmatprep.subr.mxu0 0.0
        %608 = vmatpush1.msra.mxu0 0.0
        %609 = vmatprep.subr.mxu0 0.0
        %610 = vmatpush1.msra.mxu0 0.0
        %611 = vmatprep.subr.mxu0 0.0
        %612 = vmatpush1.msra.mxu0 0.0
        %613 = vmatprep.subr.mxu0 0.0
        %614 = vmatpush1.msra.mxu0 0.0
        %615 = vmatprep.subr.mxu0 0.0
        %616 = vmatpush1.msra.mxu0 0.0
        %617 = vmatprep.subr.mxu0 0.0
        %618 = vmatpush1.msra.mxu0 0.0
        %619 = vmatprep.subr.mxu0 0.0
        %620 = vmatpush1.msra.mxu0 0.0
        %621 = vmatprep.subr.mxu0 0.0
        %622 = vmatpush1.msra.mxu0 0.0
        %623 = vmatprep.subr.mxu0 0.0
        %624 = vmatpush1.msra.mxu0 0.0
        %625 = vmatprep.subr.mxu0 0.0
        %626 = vmatpush1.msra.mxu0 0.0
        %627 = vmatprep.subr.mxu0 0.0
        %628 = vmatpush1.msra.mxu0 0.0
        %629 = vmatprep.subr.mxu0 0.0
        %630 = vmatpush1.msra.mxu0 0.0
        %631 = vmatprep.subr.mxu0 0.0
        %632 = vmatpush1.msra.mxu0 0.0
        %633 = vmatprep.subr.mxu0 0.0
        %634 = vmatpush1.msra.mxu0 0.0
        %635 = vmatprep.subr.mxu0 0.0
        %636 = vmatpush1.msra.mxu0 0.0
        %637 = vmatprep.subr.mxu0 0.0
        %638 = vmatpush1.msra.mxu0 0.0
        %639 = vmatprep.subr.mxu0 0.0
        %640 = vmatpush1.msra.mxu0 0.0
        %641 = vmatprep.subr.mxu0 0.0
        %642 = vmatpush1.msra.mxu0 0.0
        %643 = vmatprep.subr.mxu0 0.0
        %644 = vmatpush1.msra.mxu0 0.0
        %645 = vmatprep.subr.mxu0 0.0
        %646 = vmatpush1.msra.mxu0 0.0
        %647 = vmatprep.subr.mxu0 0.0
        %648 = vmatpush1.msra.mxu0 0.0
        %649 = vmatprep.subr.mxu0 0.0
        %650 = vmatpush1.msra.mxu0 0.0
        %651 = vmatprep.subr.mxu0 0.0
        %652 = vmatpush1.msra.mxu0 0.0
        %653 = vmatprep.mubr.f32.mxu0 0.0
        %654 = vmatmul.mubr.f32.gmra.mrb[0].mxu0 %v581
        %v655 = vpop.f32.mrb[0].mxu0
        %v656 = vadd.f32 0.0, %v655
        %v657 = vpop.f32.mrb[0].mxu0
        %v658 = vadd.f32 0.0, %v657
        %659 = vdwg.mxu0
        %660 = vmatprep.subr.mxu0 0.0
        %661 = vmatpush1.msra.mxu0 %v587
        %662 = vmatprep.subr.mxu0 0.0
        %663 = vmatpush1.msra.mxu0 0.0
        %664 = vmatprep.subr.mxu0 0.0
        %665 = vmatpush1.msra.mxu0 0.0
        %666 = vmatprep.subr.mxu0 0.0
        %667 = vmatpush1.msra.mxu0 0.0
        %668 = vmatprep.subr.mxu0 0.0
        %669 = vmatpush1.msra.mxu0 0.0
        %670 = vmatprep.subr.mxu0 0.0
        %671 = vmatpush1.msra.mxu0 0.0
        %672 = vmatprep.subr.mxu0 0.0
        %673 = vmatpush1.msra.mxu0 0.0
        %674 = vmatprep.subr.mxu0 0.0
        %675 = vmatpush1.msra.mxu0 0.0
        %676 = vmatprep.subr.mxu0 0.0
        %677 = vmatpush1.msra.mxu0 0.0
        %678 = vmatprep.subr.mxu0 0.0
        %679 = vmatpush1.msra.mxu0 0.0
        %680 = vmatprep.subr.mxu0 0.0
        %681 = vmatpush1.msra.mxu0 0.0
        %682 = vmatprep.subr.mxu0 0.0
        %683 = vmatpush1.msra.mxu0 0.0
        %684 = vmatprep.subr.mxu0 0.0
        %685 = vmatpush1.msra.mxu0 0.0
        %686 = vmatprep.subr.mxu0 0.0
        %687 = vmatpush1.msra.mxu0 0.0
        %688 = vmatprep.subr.mxu0 0.0
        %689 = vmatpush1.msra.mxu0 0.0
        %690 = vmatprep.subr.mxu0 0.0
        %691 = vmatpush1.msra.mxu0 0.0
        %692 = vmatprep.subr.mxu0 0.0
        %693 = vmatpush1.msra.mxu0 0.0
        %694 = vmatprep.subr.mxu0 0.0
        %695 = vmatpush1.msra.mxu0 0.0
        %696 = vmatprep.subr.mxu0 0.0
        %697 = vmatpush1.msra.mxu0 0.0
        %698 = vmatprep.subr.mxu0 0.0
        %699 = vmatpush1.msra.mxu0 0.0
        %700 = vmatprep.subr.mxu0 0.0
        %701 = vmatpush1.msra.mxu0 0.0
        %702 = vmatprep.subr.mxu0 0.0
        %703 = vmatpush1.msra.mxu0 0.0
        %704 = vmatprep.subr.mxu0 0.0
        %705 = vmatpush1.msra.mxu0 0.0
        %706 = vmatprep.subr.mxu0 0.0
        %707 = vmatpush1.msra.mxu0 0.0
        %708 = vmatprep.subr.mxu0 0.0
        %709 = vmatpush1.msra.mxu0 0.0
        %710 = vmatprep.subr.mxu0 0.0
        %711 = vmatpush1.msra.mxu0 0.0
        %712 = vmatprep.subr.mxu0 0.0
        %713 = vmatpush1.msra.mxu0 0.0
        %714 = vmatprep.subr.mxu0 0.0
        %715 = vmatpush1.msra.mxu0 0.0
        %716 = vmatprep.subr.mxu0 0.0
        %717 = vmatpush1.msra.mxu0 0.0
        %718 = vmatprep.subr.mxu0 0.0
        %719 = vmatpush1.msra.mxu0 0.0
        %720 = vmatprep.subr.mxu0 0.0
        %721 = vmatpush1.msra.mxu0 0.0
        %722 = vmatprep.subr.mxu0 0.0
        %723 = vmatpush1.msra.mxu0 0.0
        %724 = vmatprep.mubr.f32.mxu0 0.0
        %725 = vmatmul.mubr.f32.gmra.mrb[0].mxu0 %v581
        %v726 = vpop.f32.mrb[0].mxu0
        %v727 = vadd.f32 0.0, %v726
        %v728 = vpop.f32.mrb[0].mxu0
        %729 = vdwg.mxu0
        %v730 = vadd.f32 %v495, %v656
        %v731 = vadd.f32 %v497, %v658
        %v732 = vadd.f32 %v566, %v727
        %s733 = scalar_lea.vmem %s1, 24
        %v734 = vld [vmem:[%s733] sm:$0xff]
        %735 = vrot.lane.b32.xlu0 %v250, 110
        %v736 = vpop.permute.xlu0 %735
        %737 = vrot.lane.b32.xlu0 %v257, 110
        %v738 = vpop.permute.xlu0 %737
        %739 = vrot.lane.b32.xlu0 %v251, 110
        %v740 = vpop.permute.xlu0 %739
        %vm741 = vcmask 900096
        %v742 = vsel %vm741, %v736, %v738
        %v743 = vsel %vm741, %v738, %v740
        %v745 = vsel %vm267, %v734, 0
        %v747 = vsel %vm271, %v742, 0
        %v749 = vsel %vm271, %v743, 0
        %v751 = vsel %vm271, %v740, 0
        %753 = vmatprep.subr.mxu0 %v749
        %754 = vmatpush1.msra.mxu0 %v747
        %755 = vmatprep.subr.mxu0 0.0
        %756 = vmatpush1.msra.mxu0 0.0
        %757 = vmatprep.subr.mxu0 0.0
        %758 = vmatpush1.msra.mxu0 0.0
        %759 = vmatprep.subr.mxu0 0.0
        %760 = vmatpush1.msra.mxu0 0.0
        %761 = vmatprep.subr.mxu0 0.0
        %762 = vmatpush1.msra.mxu0 0.0
        %763 = vmatprep.subr.mxu0 0.0
        %764 = vmatpush1.msra.mxu0 0.0
        %765 = vmatprep.subr.mxu0 0.0
        %766 = vmatpush1.msra.mxu0 0.0
        %767 = vmatprep.subr.mxu0 0.0
        %768 = vmatpush1.msra.mxu0 0.0
        %769 = vmatprep.subr.mxu0 0.0
        %770 = vmatpush1.msra.mxu0 0.0
        %771 = vmatprep.subr.mxu0 0.0
        %772 = vmatpush1.msra.mxu0 0.0
        %773 = vmatprep.subr.mxu0 0.0
        %774 = vmatpush1.msra.mxu0 0.0
        %775 = vmatprep.subr.mxu0 0.0
        %776 = vmatpush1.msra.mxu0 0.0
        %777 = vmatprep.subr.mxu0 0.0
        %778 = vmatpush1.msra.mxu0 0.0
        %779 = vmatprep.subr.mxu0 0.0
        %780 = vmatpush1.msra.mxu0 0.0
        %781 = vmatprep.subr.mxu0 0.0
        %782 = vmatpush1.msra.mxu0 0.0
        %783 = vmatprep.subr.mxu0 0.0
        %784 = vmatpush1.msra.mxu0 0.0
        %785 = vmatprep.subr.mxu0 0.0
        %786 = vmatpush1.msra.mxu0 0.0
        %787 = vmatprep.subr.mxu0 0.0
        %788 = vmatpush1.msra.mxu0 0.0
        %789 = vmatprep.subr.mxu0 0.0
        %790 = vmatpush1.msra.mxu0 0.0
        %791 = vmatprep.subr.mxu0 0.0
        %792 = vmatpush1.msra.mxu0 0.0
        %793 = vmatprep.subr.mxu0 0.0
        %794 = vmatpush1.msra.mxu0 0.0
        %795 = vmatprep.subr.mxu0 0.0
        %796 = vmatpush1.msra.mxu0 0.0
        %797 = vmatprep.subr.mxu0 0.0
        %798 = vmatpush1.msra.mxu0 0.0
        %799 = vmatprep.subr.mxu0 0.0
        %800 = vmatpush1.msra.mxu0 0.0
        %801 = vmatprep.subr.mxu0 0.0
        %802 = vmatpush1.msra.mxu0 0.0
        %803 = vmatprep.subr.mxu0 0.0
        %804 = vmatpush1.msra.mxu0 0.0
        %805 = vmatprep.subr.mxu0 0.0
        %806 = vmatpush1.msra.mxu0 0.0
        %807 = vmatprep.subr.mxu0 0.0
        %808 = vmatpush1.msra.mxu0 0.0
        %809 = vmatprep.subr.mxu0 0.0
        %810 = vmatpush1.msra.mxu0 0.0
        %811 = vmatprep.subr.mxu0 0.0
        %812 = vmatpush1.msra.mxu0 0.0
        %813 = vmatprep.subr.mxu0 0.0
        %814 = vmatpush1.msra.mxu0 0.0
        %815 = vmatprep.subr.mxu0 0.0
        %816 = vmatpush1.msra.mxu0 0.0
        %817 = vmatprep.mubr.f32.mxu0 0.0
        %818 = vmatmul.mubr.f32.gmra.mrb[0].mxu0 %v745
        %v819 = vpop.f32.mrb[0].mxu0
        %v820 = vadd.f32 0.0, %v819
        %v821 = vpop.f32.mrb[0].mxu0
        %v822 = vadd.f32 0.0, %v821
        %823 = vdwg.mxu0
        %824 = vmatprep.subr.mxu0 0.0
        %825 = vmatpush1.msra.mxu0 %v751
        %826 = vmatprep.subr.mxu0 0.0
        %827 = vmatpush1.msra.mxu0 0.0
        %828 = vmatprep.subr.mxu0 0.0
        %829 = vmatpush1.msra.mxu0 0.0
        %830 = vmatprep.subr.mxu0 0.0
        %831 = vmatpush1.msra.mxu0 0.0
        %832 = vmatprep.subr.mxu0 0.0
        %833 = vmatpush1.msra.mxu0 0.0
        %834 = vmatprep.subr.mxu0 0.0
        %835 = vmatpush1.msra.mxu0 0.0
        %836 = vmatprep.subr.mxu0 0.0
        %837 = vmatpush1.msra.mxu0 0.0
        %838 = vmatprep.subr.mxu0 0.0
        %839 = vmatpush1.msra.mxu0 0.0
        %840 = vmatprep.subr.mxu0 0.0
        %841 = vmatpush1.msra.mxu0 0.0
        %842 = vmatprep.subr.mxu0 0.0
        %843 = vmatpush1.msra.mxu0 0.0
        %844 = vmatprep.subr.mxu0 0.0
        %845 = vmatpush1.msra.mxu0 0.0
        %846 = vmatprep.subr.mxu0 0.0
        %847 = vmatpush1.msra.mxu0 0.0
        %848 = vmatprep.subr.mxu0 0.0
        %849 = vmatpush1.msra.mxu0 0.0
        %850 = vmatprep.subr.mxu0 0.0
        %851 = vmatpush1.msra.mxu0 0.0
        %852 = vmatprep.subr.mxu0 0.0
        %853 = vmatpush1.msra.mxu0 0.0
        %854 = vmatprep.subr.mxu0 0.0
        %855 = vmatpush1.msra.mxu0 0.0
        %856 = vmatprep.subr.mxu0 0.0
        %857 = vmatpush1.msra.mxu0 0.0
        %858 = vmatprep.subr.mxu0 0.0
        %859 = vmatpush1.msra.mxu0 0.0
        %860 = vmatprep.subr.mxu0 0.0
        %861 = vmatpush1.msra.mxu0 0.0
        %862 = vmatprep.subr.mxu0 0.0
        %863 = vmatpush1.msra.mxu0 0.0
        %864 = vmatprep.subr.mxu0 0.0
        %865 = vmatpush1.msra.mxu0 0.0
        %866 = vmatprep.subr.mxu0 0.0
        %867 = vmatpush1.msra.mxu0 0.0
        %868 = vmatprep.subr.mxu0 0.0
        %869 = vmatpush1.msra.mxu0 0.0
        %870 = vmatprep.subr.mxu0 0.0
        %871 = vmatpush1.msra.mxu0 0.0
        %872 = vmatprep.subr.mxu0 0.0
        %873 = vmatpush1.msra.mxu0 0.0
        %874 = vmatprep.subr.mxu0 0.0
        %875 = vmatpush1.msra.mxu0 0.0
        %876 = vmatprep.subr.mxu0 0.0
        %877 = vmatpush1.msra.mxu0 0.0
        %878 = vmatprep.subr.mxu0 0.0
        %879 = vmatpush1.msra.mxu0 0.0
        %880 = vmatprep.subr.mxu0 0.0
        %881 = vmatpush1.msra.mxu0 0.0
        %882 = vmatprep.subr.mxu0 0.0
        %883 = vmatpush1.msra.mxu0 0.0
        %884 = vmatprep.subr.mxu0 0.0
        %885 = vmatpush1.msra.mxu0 0.0
        %886 = vmatprep.subr.mxu0 0.0
        %887 = vmatpush1.msra.mxu0 0.0
        %888 = vmatprep.mubr.f32.mxu0 0.0
        %889 = vmatmul.mubr.f32.gmra.mrb[0].mxu0 %v745
        %v890 = vpop.f32.mrb[0].mxu0
        %v891 = vadd.f32 0.0, %v890
        %v892 = vpop.f32.mrb[0].mxu0
        %893 = vdwg.mxu0
        %v894 = vadd.f32 %v730, %v820
        %v895 = vadd.f32 %v731, %v822
        %v896 = vadd.f32 %v732, %v891
        %s897 = scalar_lea.vmem %s1, 32
        %v898 = vld [vmem:[%s897] sm:$0xff]
        %899 = vrot.lane.b32.xlu0 %v250, 109
        %v900 = vpop.permute.xlu0 %899
        %901 = vrot.lane.b32.xlu0 %v257, 109
        %v902 = vpop.permute.xlu0 %901
        %903 = vrot.lane.b32.xlu0 %v251, 109
        %v904 = vpop.permute.xlu0 %903
        %vm905 = vcmask 891904
        %v906 = vsel %vm905, %v900, %v902
        %v907 = vsel %vm905, %v902, %v904
        %v909 = vsel %vm267, %v898, 0
        %v911 = vsel %vm271, %v906, 0
        %v913 = vsel %vm271, %v907, 0
        %v915 = vsel %vm271, %v904, 0
        %917 = vmatprep.subr.mxu0 %v913
        %918 = vmatpush1.msra.mxu0 %v911
        %919 = vmatprep.subr.mxu0 0.0
        %920 = vmatpush1.msra.mxu0 0.0
        %921 = vmatprep.subr.mxu0 0.0
        %922 = vmatpush1.msra.mxu0 0.0
        %923 = vmatprep.subr.mxu0 0.0
        %924 = vmatpush1.msra.mxu0 0.0
        %925 = vmatprep.subr.mxu0 0.0
        %926 = vmatpush1.msra.mxu0 0.0
        %927 = vmatprep.subr.mxu0 0.0
        %928 = vmatpush1.msra.mxu0 0.0
        %929 = vmatprep.subr.mxu0 0.0
        %930 = vmatpush1.msra.mxu0 0.0
        %931 = vmatprep.subr.mxu0 0.0
        %932 = vmatpush1.msra.mxu0 0.0
        %933 = vmatprep.subr.mxu0 0.0
        %934 = vmatpush1.msra.mxu0 0.0
        %935 = vmatprep.subr.mxu0 0.0
        %936 = vmatpush1.msra.mxu0 0.0
        %937 = vmatprep.subr.mxu0 0.0
        %938 = vmatpush1.msra.mxu0 0.0
        %939 = vmatprep.subr.mxu0 0.0
        %940 = vmatpush1.msra.mxu0 0.0
        %941 = vmatprep.subr.mxu0 0.0
        %942 = vmatpush1.msra.mxu0 0.0
        %943 = vmatprep.subr.mxu0 0.0
        %944 = vmatpush1.msra.mxu0 0.0
        %945 = vmatprep.subr.mxu0 0.0
        %946 = vmatpush1.msra.mxu0 0.0
        %947 = vmatprep.subr.mxu0 0.0
        %948 = vmatpush1.msra.mxu0 0.0
        %949 = vmatprep.subr.mxu0 0.0
        %950 = vmatpush1.msra.mxu0 0.0
        %951 = vmatprep.subr.mxu0 0.0
        %952 = vmatpush1.msra.mxu0 0.0
        %953 = vmatprep.subr.mxu0 0.0
        %954 = vmatpush1.msra.mxu0 0.0
        %955 = vmatprep.subr.mxu0 0.0
        %956 = vmatpush1.msra.mxu0 0.0
        %957 = vmatprep.subr.mxu0 0.0
        %958 = vmatpush1.msra.mxu0 0.0
        %959 = vmatprep.subr.mxu0 0.0
        %960 = vmatpush1.msra.mxu0 0.0
        %961 = vmatprep.subr.mxu0 0.0
        %962 = vmatpush1.msra.mxu0 0.0
        %963 = vmatprep.subr.mxu0 0.0
        %964 = vmatpush1.msra.mxu0 0.0
        %965 = vmatprep.subr.mxu0 0.0
        %966 = vmatpush1.msra.mxu0 0.0
        %967 = vmatprep.subr.mxu0 0.0
        %968 = vmatpush1.msra.mxu0 0.0
        %969 = vmatprep.subr.mxu0 0.0
        %970 = vmatpush1.msra.mxu0 0.0
        %971 = vmatprep.subr.mxu0 0.0
        %972 = vmatpush1.msra.mxu0 0.0
        %973 = vmatprep.subr.mxu0 0.0
        %974 = vmatpush1.msra.mxu0 0.0
        %975 = vmatprep.subr.mxu0 0.0
        %976 = vmatpush1.msra.mxu0 0.0
        %977 = vmatprep.subr.mxu0 0.0
        %978 = vmatpush1.msra.mxu0 0.0
        %979 = vmatprep.subr.mxu0 0.0
        %980 = vmatpush1.msra.mxu0 0.0
        %981 = vmatprep.mubr.f32.mxu0 0.0
        %982 = vmatmul.mubr.f32.gmra.mrb[0].mxu0 %v909
        %v983 = vpop.f32.mrb[0].mxu0
        %v984 = vadd.f32 0.0, %v983
        %v985 = vpop.f32.mrb[0].mxu0
        %v986 = vadd.f32 0.0, %v985
        %987 = vdwg.mxu0
        %988 = vmatprep.subr.mxu0 0.0
        %989 = vmatpush1.msra.mxu0 %v915
        %990 = vmatprep.subr.mxu0 0.0
        %991 = vmatpush1.msra.mxu0 0.0
        %992 = vmatprep.subr.mxu0 0.0
        %993 = vmatpush1.msra.mxu0 0.0
        %994 = vmatprep.subr.mxu0 0.0
        %995 = vmatpush1.msra.mxu0 0.0
        %996 = vmatprep.subr.mxu0 0.0
        %997 = vmatpush1.msra.mxu0 0.0
        %998 = vmatprep.subr.mxu0 0.0
        %999 = vmatpush1.msra.mxu0 0.0
        %1000 = vmatprep.subr.mxu0 0.0
        %1001 = vmatpush1.msra.mxu0 0.0
        %1002 = vmatprep.subr.mxu0 0.0
        %1003 = vmatpush1.msra.mxu0 0.0
        %1004 = vmatprep.subr.mxu0 0.0
        %1005 = vmatpush1.msra.mxu0 0.0
        %1006 = vmatprep.subr.mxu0 0.0
        %1007 = vmatpush1.msra.mxu0 0.0
        %1008 = vmatprep.subr.mxu0 0.0
        %1009 = vmatpush1.msra.mxu0 0.0
        %1010 = vmatprep.subr.mxu0 0.0
        %1011 = vmatpush1.msra.mxu0 0.0
        %1012 = vmatprep.subr.mxu0 0.0
        %1013 = vmatpush1.msra.mxu0 0.0
        %1014 = vmatprep.subr.mxu0 0.0
        %1015 = vmatpush1.msra.mxu0 0.0
        %1016 = vmatprep.subr.mxu0 0.0
        %1017 = vmatpush1.msra.mxu0 0.0
        %1018 = vmatprep.subr.mxu0 0.0
        %1019 = vmatpush1.msra.mxu0 0.0
        %1020 = vmatprep.subr.mxu0 0.0
        %1021 = vmatpush1.msra.mxu0 0.0
        %1022 = vmatprep.subr.mxu0 0.0
        %1023 = vmatpush1.msra.mxu0 0.0
        %1024 = vmatprep.subr.mxu0 0.0
        %1025 = vmatpush1.msra.mxu0 0.0
        %1026 = vmatprep.subr.mxu0 0.0
        %1027 = vmatpush1.msra.mxu0 0.0
        %1028 = vmatprep.subr.mxu0 0.0
        %1029 = vmatpush1.msra.mxu0 0.0
        %1030 = vmatprep.subr.mxu0 0.0
        %1031 = vmatpush1.msra.mxu0 0.0
        %1032 = vmatprep.subr.mxu0 0.0
        %1033 = vmatpush1.msra.mxu0 0.0
        %1034 = vmatprep.subr.mxu0 0.0
        %1035 = vmatpush1.msra.mxu0 0.0
        %1036 = vmatprep.subr.mxu0 0.0
        %1037 = vmatpush1.msra.mxu0 0.0
        %1038 = vmatprep.subr.mxu0 0.0
        %1039 = vmatpush1.msra.mxu0 0.0
        %1040 = vmatprep.subr.mxu0 0.0
        %1041 = vmatpush1.msra.mxu0 0.0
        %1042 = vmatprep.subr.mxu0 0.0
        %1043 = vmatpush1.msra.mxu0 0.0
        %1044 = vmatprep.subr.mxu0 0.0
        %1045 = vmatpush1.msra.mxu0 0.0
        %1046 = vmatprep.subr.mxu0 0.0
        %1047 = vmatpush1.msra.mxu0 0.0
        %1048 = vmatprep.subr.mxu0 0.0
        %1049 = vmatpush1.msra.mxu0 0.0
        %1050 = vmatprep.subr.mxu0 0.0
        %1051 = vmatpush1.msra.mxu0 0.0
        %1052 = vmatprep.mubr.f32.mxu0 0.0
        %1053 = vmatmul.mubr.f32.gmra.mrb[0].mxu0 %v909
        %v1054 = vpop.f32.mrb[0].mxu0
        %v1055 = vadd.f32 0.0, %v1054
        %v1056 = vpop.f32.mrb[0].mxu0
        %1057 = vdwg.mxu0
        %v1058 = vadd.f32 %v894, %v984
        %v1059 = vadd.f32 %v895, %v986
        %v1060 = vadd.f32 %v896, %v1055
        %s1061 = scalar_lea.vmem %s1, 40
        %v1062 = vld [vmem:[%s1061] sm:$0xff]
        %1063 = vrot.lane.b32.xlu0 %v250, 108
        %v1064 = vpop.permute.xlu0 %1063
        %1065 = vrot.lane.b32.xlu0 %v257, 108
        %v1066 = vpop.permute.xlu0 %1065
        %1067 = vrot.lane.b32.xlu0 %v251, 108
        %v1068 = vpop.permute.xlu0 %1067
        %vm1069 = vcmask 883712
        %v1070 = vsel %vm1069, %v1064, %v1066
        %v1071 = vsel %vm1069, %v1066, %v1068
        %v1073 = vsel %vm267, %v1062, 0
        %v1075 = vsel %vm271, %v1070, 0
        %v1077 = vsel %vm271, %v1071, 0
        %v1079 = vsel %vm271, %v1068, 0
        %1081 = vmatprep.subr.mxu0 %v1077
        %1082 = vmatpush1.msra.mxu0 %v1075
        %1083 = vmatprep.subr.mxu0 0.0
        %1084 = vmatpush1.msra.mxu0 0.0
        %1085 = vmatprep.subr.mxu0 0.0
        %1086 = vmatpush1.msra.mxu0 0.0
        %1087 = vmatprep.subr.mxu0 0.0
        %1088 = vmatpush1.msra.mxu0 0.0
        %1089 = vmatprep.subr.mxu0 0.0
        %1090 = vmatpush1.msra.mxu0 0.0
        %1091 = vmatprep.subr.mxu0 0.0
        %1092 = vmatpush1.msra.mxu0 0.0
        %1093 = vmatprep.subr.mxu0 0.0
        %1094 = vmatpush1.msra.mxu0 0.0
        %1095 = vmatprep.subr.mxu0 0.0
        %1096 = vmatpush1.msra.mxu0 0.0
        %1097 = vmatprep.subr.mxu0 0.0
        %1098 = vmatpush1.msra.mxu0 0.0
        %1099 = vmatprep.subr.mxu0 0.0
        %1100 = vmatpush1.msra.mxu0 0.0
        %1101 = vmatprep.subr.mxu0 0.0
        %1102 = vmatpush1.msra.mxu0 0.0
        %1103 = vmatprep.subr.mxu0 0.0
        %1104 = vmatpush1.msra.mxu0 0.0
        %1105 = vmatprep.subr.mxu0 0.0
        %1106 = vmatpush1.msra.mxu0 0.0
        %1107 = vmatprep.subr.mxu0 0.0
        %1108 = vmatpush1.msra.mxu0 0.0
        %1109 = vmatprep.subr.mxu0 0.0
        %1110 = vmatpush1.msra.mxu0 0.0
        %1111 = vmatprep.subr.mxu0 0.0
        %1112 = vmatpush1.msra.mxu0 0.0
        %1113 = vmatprep.subr.mxu0 0.0
        %1114 = vmatpush1.msra.mxu0 0.0
        %1115 = vmatprep.subr.mxu0 0.0
        %1116 = vmatpush1.msra.mxu0 0.0
        %1117 = vmatprep.subr.mxu0 0.0
        %1118 = vmatpush1.msra.mxu0 0.0
        %1119 = vmatprep.subr.mxu0 0.0
        %1120 = vmatpush1.msra.mxu0 0.0
        %1121 = vmatprep.subr.mxu0 0.0
        %1122 = vmatpush1.msra.mxu0 0.0
        %1123 = vmatprep.subr.mxu0 0.0
        %1124 = vmatpush1.msra.mxu0 0.0
        %1125 = vmatprep.subr.mxu0 0.0
        %1126 = vmatpush1.msra.mxu0 0.0
        %1127 = vmatprep.subr.mxu0 0.0
        %1128 = vmatpush1.msra.mxu0 0.0
        %1129 = vmatprep.subr.mxu0 0.0
        %1130 = vmatpush1.msra.mxu0 0.0
        %1131 = vmatprep.subr.mxu0 0.0
        %1132 = vmatpush1.msra.mxu0 0.0
        %1133 = vmatprep.subr.mxu0 0.0
        %1134 = vmatpush1.msra.mxu0 0.0
        %1135 = vmatprep.subr.mxu0 0.0
        %1136 = vmatpush1.msra.mxu0 0.0
        %1137 = vmatprep.subr.mxu0 0.0
        %1138 = vmatpush1.msra.mxu0 0.0
        %1139 = vmatprep.subr.mxu0 0.0
        %1140 = vmatpush1.msra.mxu0 0.0
        %1141 = vmatprep.subr.mxu0 0.0
        %1142 = vmatpush1.msra.mxu0 0.0
        %1143 = vmatprep.subr.mxu0 0.0
        %1144 = vmatpush1.msra.mxu0 0.0
        %1145 = vmatprep.mubr.f32.mxu0 0.0
        %1146 = vmatmul.mubr.f32.gmra.mrb[0].mxu0 %v1073
        %v1147 = vpop.f32.mrb[0].mxu0
        %v1148 = vadd.f32 0.0, %v1147
        %v1149 = vpop.f32.mrb[0].mxu0
        %v1150 = vadd.f32 0.0, %v1149
        %1151 = vdwg.mxu0
        %1152 = vmatprep.subr.mxu0 0.0
        %1153 = vmatpush1.msra.mxu0 %v1079
        %1154 = vmatprep.subr.mxu0 0.0
        %1155 = vmatpush1.msra.mxu0 0.0
        %1156 = vmatprep.subr.mxu0 0.0
        %1157 = vmatpush1.msra.mxu0 0.0
        %1158 = vmatprep.subr.mxu0 0.0
        %1159 = vmatpush1.msra.mxu0 0.0
        %1160 = vmatprep.subr.mxu0 0.0
        %1161 = vmatpush1.msra.mxu0 0.0
        %1162 = vmatprep.subr.mxu0 0.0
        %1163 = vmatpush1.msra.mxu0 0.0
        %1164 = vmatprep.subr.mxu0 0.0
        %1165 = vmatpush1.msra.mxu0 0.0
        %1166 = vmatprep.subr.mxu0 0.0
        %1167 = vmatpush1.msra.mxu0 0.0
        %1168 = vmatprep.subr.mxu0 0.0
        %1169 = vmatpush1.msra.mxu0 0.0
        %1170 = vmatprep.subr.mxu0 0.0
        %1171 = vmatpush1.msra.mxu0 0.0
        %1172 = vmatprep.subr.mxu0 0.0
        %1173 = vmatpush1.msra.mxu0 0.0
        %1174 = vmatprep.subr.mxu0 0.0
        %1175 = vmatpush1.msra.mxu0 0.0
        %1176 = vmatprep.subr.mxu0 0.0
        %1177 = vmatpush1.msra.mxu0 0.0
        %1178 = vmatprep.subr.mxu0 0.0
        %1179 = vmatpush1.msra.mxu0 0.0
        %1180 = vmatprep.subr.mxu0 0.0
        %1181 = vmatpush1.msra.mxu0 0.0
        %1182 = vmatprep.subr.mxu0 0.0
        %1183 = vmatpush1.msra.mxu0 0.0
        %1184 = vmatprep.subr.mxu0 0.0
        %1185 = vmatpush1.msra.mxu0 0.0
        %1186 = vmatprep.subr.mxu0 0.0
        %1187 = vmatpush1.msra.mxu0 0.0
        %1188 = vmatprep.subr.mxu0 0.0
        %1189 = vmatpush1.msra.mxu0 0.0
        %1190 = vmatprep.subr.mxu0 0.0
        %1191 = vmatpush1.msra.mxu0 0.0
        %1192 = vmatprep.subr.mxu0 0.0
        %1193 = vmatpush1.msra.mxu0 0.0
        %1194 = vmatprep.subr.mxu0 0.0
        %1195 = vmatpush1.msra.mxu0 0.0
        %1196 = vmatprep.subr.mxu0 0.0
        %1197 = vmatpush1.msra.mxu0 0.0
        %1198 = vmatprep.subr.mxu0 0.0
        %1199 = vmatpush1.msra.mxu0 0.0
        %1200 = vmatprep.subr.mxu0 0.0
        %1201 = vmatpush1.msra.mxu0 0.0
        %1202 = vmatprep.subr.mxu0 0.0
        %1203 = vmatpush1.msra.mxu0 0.0
        %1204 = vmatprep.subr.mxu0 0.0
        %1205 = vmatpush1.msra.mxu0 0.0
        %1206 = vmatprep.subr.mxu0 0.0
        %1207 = vmatpush1.msra.mxu0 0.0
        %1208 = vmatprep.subr.mxu0 0.0
        %1209 = vmatpush1.msra.mxu0 0.0
        %1210 = vmatprep.subr.mxu0 0.0
        %1211 = vmatpush1.msra.mxu0 0.0
        %1212 = vmatprep.subr.mxu0 0.0
        %1213 = vmatpush1.msra.mxu0 0.0
        %1214 = vmatprep.subr.mxu0 0.0
        %1215 = vmatpush1.msra.mxu0 0.0
        %1216 = vmatprep.mubr.f32.mxu0 0.0
        %1217 = vmatmul.mubr.f32.gmra.mrb[0].mxu0 %v1073
        %v1218 = vpop.f32.mrb[0].mxu0
        %v1219 = vadd.f32 0.0, %v1218
        %v1220 = vpop.f32.mrb[0].mxu0
        %1221 = vdwg.mxu0
        %v1222 = vadd.f32 %v1058, %v1148
        %v1223 = vadd.f32 %v1059, %v1150
        %v1224 = vadd.f32 %v1060, %v1219
        %s1225 = scalar_lea.vmem %s1, 48
        %v1226 = vld [vmem:[%s1225] sm:$0xff]
        %1227 = vrot.lane.b32.xlu0 %v250, 92
        %v1228 = vpop.permute.xlu0 %1227
        %1229 = vrot.lane.b32.xlu0 %v257, 92
        %v1230 = vpop.permute.xlu0 %1229
        %1231 = vrot.lane.b32.xlu0 %v251, 92
        %v1232 = vpop.permute.xlu0 %1231
        %vm1233 = vcmask 752640
        %v1234 = vsel %vm1233, %v1228, %v1230
        %v1235 = vsel %vm1233, %v1230, %v1232
        %v1237 = vsel %vm267, %v1226, 0
        %v1239 = vsel %vm271, %v1234, 0
        %v1241 = vsel %vm271, %v1235, 0
        %v1243 = vsel %vm271, %v1232, 0
        %1245 = vmatprep.subr.mxu0 %v1241
        %1246 = vmatpush1.msra.mxu0 %v1239
        %1247 = vmatprep.subr.mxu0 0.0
        %1248 = vmatpush1.msra.mxu0 0.0
        %1249 = vmatprep.subr.mxu0 0.0
        %1250 = vmatpush1.msra.mxu0 0.0
        %1251 = vmatprep.subr.mxu0 0.0
        %1252 = vmatpush1.msra.mxu0 0.0
        %1253 = vmatprep.subr.mxu0 0.0
        %1254 = vmatpush1.msra.mxu0 0.0
        %1255 = vmatprep.subr.mxu0 0.0
        %1256 = vmatpush1.msra.mxu0 0.0
        %1257 = vmatprep.subr.mxu0 0.0
        %1258 = vmatpush1.msra.mxu0 0.0
        %1259 = vmatprep.subr.mxu0 0.0
        %1260 = vmatpush1.msra.mxu0 0.0
        %1261 = vmatprep.subr.mxu0 0.0
        %1262 = vmatpush1.msra.mxu0 0.0
        %1263 = vmatprep.subr.mxu0 0.0
        %1264 = vmatpush1.msra.mxu0 0.0
        %1265 = vmatprep.subr.mxu0 0.0
        %1266 = vmatpush1.msra.mxu0 0.0
        %1267 = vmatprep.subr.mxu0 0.0
        %1268 = vmatpush1.msra.mxu0 0.0
        %1269 = vmatprep.subr.mxu0 0.0
        %1270 = vmatpush1.msra.mxu0 0.0
        %1271 = vmatprep.subr.mxu0 0.0
        %1272 = vmatpush1.msra.mxu0 0.0
        %1273 = vmatprep.subr.mxu0 0.0
        %1274 = vmatpush1.msra.mxu0 0.0
        %1275 = vmatprep.subr.mxu0 0.0
        %1276 = vmatpush1.msra.mxu0 0.0
        %1277 = vmatprep.subr.mxu0 0.0
        %1278 = vmatpush1.msra.mxu0 0.0
        %1279 = vmatprep.subr.mxu0 0.0
        %1280 = vmatpush1.msra.mxu0 0.0
        %1281 = vmatprep.subr.mxu0 0.0
        %1282 = vmatpush1.msra.mxu0 0.0
        %1283 = vmatprep.subr.mxu0 0.0
        %1284 = vmatpush1.msra.mxu0 0.0
        %1285 = vmatprep.subr.mxu0 0.0
        %1286 = vmatpush1.msra.mxu0 0.0
        %1287 = vmatprep.subr.mxu0 0.0
        %1288 = vmatpush1.msra.mxu0 0.0
        %1289 = vmatprep.subr.mxu0 0.0
        %1290 = vmatpush1.msra.mxu0 0.0
        %1291 = vmatprep.subr.mxu0 0.0
        %1292 = vmatpush1.msra.mxu0 0.0
        %1293 = vmatprep.subr.mxu0 0.0
        %1294 = vmatpush1.msra.mxu0 0.0
        %1295 = vmatprep.subr.mxu0 0.0
        %1296 = vmatpush1.msra.mxu0 0.0
        %1297 = vmatprep.subr.mxu0 0.0
        %1298 = vmatpush1.msra.mxu0 0.0
        %1299 = vmatprep.subr.mxu0 0.0
        %1300 = vmatpush1.msra.mxu0 0.0
        %1301 = vmatprep.subr.mxu0 0.0
        %1302 = vmatpush1.msra.mxu0 0.0
        %1303 = vmatprep.subr.mxu0 0.0
        %1304 = vmatpush1.msra.mxu0 0.0
        %1305 = vmatprep.subr.mxu0 0.0
        %1306 = vmatpush1.msra.mxu0 0.0
        %1307 = vmatprep.subr.mxu0 0.0
        %1308 = vmatpush1.msra.mxu0 0.0
        %1309 = vmatprep.mubr.f32.mxu0 0.0
        %1310 = vmatmul.mubr.f32.gmra.mrb[0].mxu0 %v1237
        %v1311 = vpop.f32.mrb[0].mxu0
        %v1312 = vadd.f32 0.0, %v1311
        %v1313 = vpop.f32.mrb[0].mxu0
        %v1314 = vadd.f32 0.0, %v1313
        %1315 = vdwg.mxu0
        %1316 = vmatprep.subr.mxu0 0.0
        %1317 = vmatpush1.msra.mxu0 %v1243
        %1318 = vmatprep.subr.mxu0 0.0
        %1319 = vmatpush1.msra.mxu0 0.0
        %1320 = vmatprep.subr.mxu0 0.0
        %1321 = vmatpush1.msra.mxu0 0.0
        %1322 = vmatprep.subr.mxu0 0.0
        %1323 = vmatpush1.msra.mxu0 0.0
        %1324 = vmatprep.subr.mxu0 0.0
        %1325 = vmatpush1.msra.mxu0 0.0
        %1326 = vmatprep.subr.mxu0 0.0
        %1327 = vmatpush1.msra.mxu0 0.0
        %1328 = vmatprep.subr.mxu0 0.0
        %1329 = vmatpush1.msra.mxu0 0.0
        %1330 = vmatprep.subr.mxu0 0.0
        %1331 = vmatpush1.msra.mxu0 0.0
        %1332 = vmatprep.subr.mxu0 0.0
        %1333 = vmatpush1.msra.mxu0 0.0
        %1334 = vmatprep.subr.mxu0 0.0
        %1335 = vmatpush1.msra.mxu0 0.0
        %1336 = vmatprep.subr.mxu0 0.0
        %1337 = vmatpush1.msra.mxu0 0.0
        %1338 = vmatprep.subr.mxu0 0.0
        %1339 = vmatpush1.msra.mxu0 0.0
        %1340 = vmatprep.subr.mxu0 0.0
        %1341 = vmatpush1.msra.mxu0 0.0
        %1342 = vmatprep.subr.mxu0 0.0
        %1343 = vmatpush1.msra.mxu0 0.0
        %1344 = vmatprep.subr.mxu0 0.0
        %1345 = vmatpush1.msra.mxu0 0.0
        %1346 = vmatprep.subr.mxu0 0.0
        %1347 = vmatpush1.msra.mxu0 0.0
        %1348 = vmatprep.subr.mxu0 0.0
        %1349 = vmatpush1.msra.mxu0 0.0
        %1350 = vmatprep.subr.mxu0 0.0
        %1351 = vmatpush1.msra.mxu0 0.0
        %1352 = vmatprep.subr.mxu0 0.0
        %1353 = vmatpush1.msra.mxu0 0.0
        %1354 = vmatprep.subr.mxu0 0.0
        %1355 = vmatpush1.msra.mxu0 0.0
        %1356 = vmatprep.subr.mxu0 0.0
        %1357 = vmatpush1.msra.mxu0 0.0
        %1358 = vmatprep.subr.mxu0 0.0
        %1359 = vmatpush1.msra.mxu0 0.0
        %1360 = vmatprep.subr.mxu0 0.0
        %1361 = vmatpush1.msra.mxu0 0.0
        %1362 = vmatprep.subr.mxu0 0.0
        %1363 = vmatpush1.msra.mxu0 0.0
        %1364 = vmatprep.subr.mxu0 0.0
        %1365 = vmatpush1.msra.mxu0 0.0
        %1366 = vmatprep.subr.mxu0 0.0
        %1367 = vmatpush1.msra.mxu0 0.0
        %1368 = vmatprep.subr.mxu0 0.0
        %1369 = vmatpush1.msra.mxu0 0.0
        %1370 = vmatprep.subr.mxu0 0.0
        %1371 = vmatpush1.msra.mxu0 0.0
        %1372 = vmatprep.subr.mxu0 0.0
        %1373 = vmatpush1.msra.mxu0 0.0
        %1374 = vmatprep.subr.mxu0 0.0
        %1375 = vmatpush1.msra.mxu0 0.0
        %1376 = vmatprep.subr.mxu0 0.0
        %1377 = vmatpush1.msra.mxu0 0.0
        %1378 = vmatprep.subr.mxu0 0.0
        %1379 = vmatpush1.msra.mxu0 0.0
        %1380 = vmatprep.mubr.f32.mxu0 0.0
        %1381 = vmatmul.mubr.f32.gmra.mrb[0].mxu0 %v1237
        %v1382 = vpop.f32.mrb[0].mxu0
        %v1383 = vadd.f32 0.0, %v1382
        %v1384 = vpop.f32.mrb[0].mxu0
        %1385 = vdwg.mxu0
        %v1386 = vadd.f32 %v1222, %v1312
        %v1387 = vadd.f32 %v1223, %v1314
        %v1388 = vadd.f32 %v1224, %v1383
        %s1389 = scalar_lea.vmem %s1, 56
        %v1390 = vld [vmem:[%s1389] sm:$0xff]
        %1391 = vrot.lane.b32.xlu0 %v250, 91
        %v1392 = vpop.permute.xlu0 %1391
        %1393 = vrot.lane.b32.xlu0 %v257, 91
        %v1394 = vpop.permute.xlu0 %1393
        %1395 = vrot.lane.b32.xlu0 %v251, 91
        %v1396 = vpop.permute.xlu0 %1395
        %vm1397 = vcmask 744448
        %v1398 = vsel %vm1397, %v1392, %v1394
        %v1399 = vsel %vm1397, %v1394, %v1396
        %v1401 = vsel %vm267, %v1390, 0
        %v1403 = vsel %vm271, %v1398, 0
        %v1405 = vsel %vm271, %v1399, 0
        %v1407 = vsel %vm271, %v1396, 0
        %1409 = vmatprep.subr.mxu0 %v1405
        %1410 = vmatpush1.msra.mxu0 %v1403
        %1411 = vmatprep.subr.mxu0 0.0
        %1412 = vmatpush1.msra.mxu0 0.0
        %1413 = vmatprep.subr.mxu0 0.0
        %1414 = vmatpush1.msra.mxu0 0.0
        %1415 = vmatprep.subr.mxu0 0.0
        %1416 = vmatpush1.msra.mxu0 0.0
        %1417 = vmatprep.subr.mxu0 0.0
        %1418 = vmatpush1.msra.mxu0 0.0
        %1419 = vmatprep.subr.mxu0 0.0
        %1420 = vmatpush1.msra.mxu0 0.0
        %1421 = vmatprep.subr.mxu0 0.0
        %1422 = vmatpush1.msra.mxu0 0.0
        %1423 = vmatprep.subr.mxu0 0.0
        %1424 = vmatpush1.msra.mxu0 0.0
        %1425 = vmatprep.subr.mxu0 0.0
        %1426 = vmatpush1.msra.mxu0 0.0
        %1427 = vmatprep.subr.mxu0 0.0
        %1428 = vmatpush1.msra.mxu0 0.0
        %1429 = vmatprep.subr.mxu0 0.0
        %1430 = vmatpush1.msra.mxu0 0.0
        %1431 = vmatprep.subr.mxu0 0.0
        %1432 = vmatpush1.msra.mxu0 0.0
        %1433 = vmatprep.subr.mxu0 0.0
        %1434 = vmatpush1.msra.mxu0 0.0
        %1435 = vmatprep.subr.mxu0 0.0
        %1436 = vmatpush1.msra.mxu0 0.0
        %1437 = vmatprep.subr.mxu0 0.0
        %1438 = vmatpush1.msra.mxu0 0.0
        %1439 = vmatprep.subr.mxu0 0.0
        %1440 = vmatpush1.msra.mxu0 0.0
        %1441 = vmatprep.subr.mxu0 0.0
        %1442 = vmatpush1.msra.mxu0 0.0
        %1443 = vmatprep.subr.mxu0 0.0
        %1444 = vmatpush1.msra.mxu0 0.0
        %1445 = vmatprep.subr.mxu0 0.0
        %1446 = vmatpush1.msra.mxu0 0.0
        %1447 = vmatprep.subr.mxu0 0.0
        %1448 = vmatpush1.msra.mxu0 0.0
        %1449 = vmatprep.subr.mxu0 0.0
        %1450 = vmatpush1.msra.mxu0 0.0
        %1451 = vmatprep.subr.mxu0 0.0
        %1452 = vmatpush1.msra.mxu0 0.0
        %1453 = vmatprep.subr.mxu0 0.0
        %1454 = vmatpush1.msra.mxu0 0.0
        %1455 = vmatprep.subr.mxu0 0.0
        %1456 = vmatpush1.msra.mxu0 0.0
        %1457 = vmatprep.subr.mxu0 0.0
        %1458 = vmatpush1.msra.mxu0 0.0
        %1459 = vmatprep.subr.mxu0 0.0
        %1460 = vmatpush1.msra.mxu0 0.0
        %1461 = vmatprep.subr.mxu0 0.0
        %1462 = vmatpush1.msra.mxu0 0.0
        %1463 = vmatprep.subr.mxu0 0.0
        %1464 = vmatpush1.msra.mxu0 0.0
        %1465 = vmatprep.subr.mxu0 0.0
        %1466 = vmatpush1.msra.mxu0 0.0
        %1467 = vmatprep.subr.mxu0 0.0
        %1468 = vmatpush1.msra.mxu0 0.0
        %1469 = vmatprep.subr.mxu0 0.0
        %1470 = vmatpush1.msra.mxu0 0.0
        %1471 = vmatprep.subr.mxu0 0.0
        %1472 = vmatpush1.msra.mxu0 0.0
        %1473 = vmatprep.mubr.f32.mxu0 0.0
        %1474 = vmatmul.mubr.f32.gmra.mrb[0].mxu0 %v1401
        %v1475 = vpop.f32.mrb[0].mxu0
        %v1476 = vadd.f32 0.0, %v1475
        %v1477 = vpop.f32.mrb[0].mxu0
        %v1478 = vadd.f32 0.0, %v1477
        %1479 = vdwg.mxu0
        %1480 = vmatprep.subr.mxu0 0.0
        %1481 = vmatpush1.msra.mxu0 %v1407
        %1482 = vmatprep.subr.mxu0 0.0
        %1483 = vmatpush1.msra.mxu0 0.0
        %1484 = vmatprep.subr.mxu0 0.0
        %1485 = vmatpush1.msra.mxu0 0.0
        %1486 = vmatprep.subr.mxu0 0.0
        %1487 = vmatpush1.msra.mxu0 0.0
        %1488 = vmatprep.subr.mxu0 0.0
        %1489 = vmatpush1.msra.mxu0 0.0
        %1490 = vmatprep.subr.mxu0 0.0
        %1491 = vmatpush1.msra.mxu0 0.0
        %1492 = vmatprep.subr.mxu0 0.0
        %1493 = vmatpush1.msra.mxu0 0.0
        %1494 = vmatprep.subr.mxu0 0.0
        %1495 = vmatpush1.msra.mxu0 0.0
        %1496 = vmatprep.subr.mxu0 0.0
        %1497 = vmatpush1.msra.mxu0 0.0
        %1498 = vmatprep.subr.mxu0 0.0
        %1499 = vmatpush1.msra.mxu0 0.0
        %1500 = vmatprep.subr.mxu0 0.0
        %1501 = vmatpush1.msra.mxu0 0.0
        %1502 = vmatprep.subr.mxu0 0.0
        %1503 = vmatpush1.msra.mxu0 0.0
        %1504 = vmatprep.subr.mxu0 0.0
        %1505 = vmatpush1.msra.mxu0 0.0
        %1506 = vmatprep.subr.mxu0 0.0
        %1507 = vmatpush1.msra.mxu0 0.0
        %1508 = vmatprep.subr.mxu0 0.0
        %1509 = vmatpush1.msra.mxu0 0.0
        %1510 = vmatprep.subr.mxu0 0.0
        %1511 = vmatpush1.msra.mxu0 0.0
        %1512 = vmatprep.subr.mxu0 0.0
        %1513 = vmatpush1.msra.mxu0 0.0
        %1514 = vmatprep.subr.mxu0 0.0
        %1515 = vmatpush1.msra.mxu0 0.0
        %1516 = vmatprep.subr.mxu0 0.0
        %1517 = vmatpush1.msra.mxu0 0.0
        %1518 = vmatprep.subr.mxu0 0.0
        %1519 = vmatpush1.msra.mxu0 0.0
        %1520 = vmatprep.subr.mxu0 0.0
        %1521 = vmatpush1.msra.mxu0 0.0
        %1522 = vmatprep.subr.mxu0 0.0
        %1523 = vmatpush1.msra.mxu0 0.0
        %1524 = vmatprep.subr.mxu0 0.0
        %1525 = vmatpush1.msra.mxu0 0.0
        %1526 = vmatprep.subr.mxu0 0.0
        %1527 = vmatpush1.msra.mxu0 0.0
        %1528 = vmatprep.subr.mxu0 0.0
        %1529 = vmatpush1.msra.mxu0 0.0
        %1530 = vmatprep.subr.mxu0 0.0
        %1531 = vmatpush1.msra.mxu0 0.0
        %1532 = vmatprep.subr.mxu0 0.0
        %1533 = vmatpush1.msra.mxu0 0.0
        %1534 = vmatprep.subr.mxu0 0.0
        %1535 = vmatpush1.msra.mxu0 0.0
        %1536 = vmatprep.subr.mxu0 0.0
        %1537 = vmatpush1.msra.mxu0 0.0
        %1538 = vmatprep.subr.mxu0 0.0
        %1539 = vmatpush1.msra.mxu0 0.0
        %1540 = vmatprep.subr.mxu0 0.0
        %1541 = vmatpush1.msra.mxu0 0.0
        %1542 = vmatprep.subr.mxu0 0.0
        %1543 = vmatpush1.msra.mxu0 0.0
        %1544 = vmatprep.mubr.f32.mxu0 0.0
        %1545 = vmatmul.mubr.f32.gmra.mrb[0].mxu0 %v1401
        %v1546 = vpop.f32.mrb[0].mxu0
        %v1547 = vadd.f32 0.0, %v1546
        %v1548 = vpop.f32.mrb[0].mxu0
        %1549 = vdwg.mxu0
        %v1550 = vadd.f32 %v1386, %v1476
        %v1551 = vadd.f32 %v1387, %v1478
        %v1552 = vadd.f32 %v1388, %v1547
        %s1553 = scalar_lea.vmem %s1, 64
        %v1554 = vld [vmem:[%s1553] sm:$0xff]
        %1555 = vrot.lane.b32.xlu0 %v250, 90
        %v1556 = vpop.permute.xlu0 %1555
        %1557 = vrot.lane.b32.xlu0 %v257, 90
        %v1558 = vpop.permute.xlu0 %1557
        %1559 = vrot.lane.b32.xlu0 %v251, 90
        %v1560 = vpop.permute.xlu0 %1559
        %vm1561 = vcmask 736256
        %v1562 = vsel %vm1561, %v1556, %v1558
        %v1563 = vsel %vm1561, %v1558, %v1560
        %v1565 = vsel %vm267, %v1554, 0
        %v1567 = vsel %vm271, %v1562, 0
        %v1569 = vsel %vm271, %v1563, 0
        %v1571 = vsel %vm271, %v1560, 0
        %1573 = vmatprep.subr.mxu0 %v1569
        %1574 = vmatpush1.msra.mxu0 %v1567
        %1575 = vmatprep.subr.mxu0 0.0
        %1576 = vmatpush1.msra.mxu0 0.0
        %1577 = vmatprep.subr.mxu0 0.0
        %1578 = vmatpush1.msra.mxu0 0.0
        %1579 = vmatprep.subr.mxu0 0.0
        %1580 = vmatpush1.msra.mxu0 0.0
        %1581 = vmatprep.subr.mxu0 0.0
        %1582 = vmatpush1.msra.mxu0 0.0
        %1583 = vmatprep.subr.mxu0 0.0
        %1584 = vmatpush1.msra.mxu0 0.0
        %1585 = vmatprep.subr.mxu0 0.0
        %1586 = vmatpush1.msra.mxu0 0.0
        %1587 = vmatprep.subr.mxu0 0.0
        %1588 = vmatpush1.msra.mxu0 0.0
        %1589 = vmatprep.subr.mxu0 0.0
        %1590 = vmatpush1.msra.mxu0 0.0
        %1591 = vmatprep.subr.mxu0 0.0
        %1592 = vmatpush1.msra.mxu0 0.0
        %1593 = vmatprep.subr.mxu0 0.0
        %1594 = vmatpush1.msra.mxu0 0.0
        %1595 = vmatprep.subr.mxu0 0.0
        %1596 = vmatpush1.msra.mxu0 0.0
        %1597 = vmatprep.subr.mxu0 0.0
        %1598 = vmatpush1.msra.mxu0 0.0
        %1599 = vmatprep.subr.mxu0 0.0
        %1600 = vmatpush1.msra.mxu0 0.0
        %1601 = vmatprep.subr.mxu0 0.0
        %1602 = vmatpush1.msra.mxu0 0.0
        %1603 = vmatprep.subr.mxu0 0.0
        %1604 = vmatpush1.msra.mxu0 0.0
        %1605 = vmatprep.subr.mxu0 0.0
        %1606 = vmatpush1.msra.mxu0 0.0
        %1607 = vmatprep.subr.mxu0 0.0
        %1608 = vmatpush1.msra.mxu0 0.0
        %1609 = vmatprep.subr.mxu0 0.0
        %1610 = vmatpush1.msra.mxu0 0.0
        %1611 = vmatprep.subr.mxu0 0.0
        %1612 = vmatpush1.msra.mxu0 0.0
        %1613 = vmatprep.subr.mxu0 0.0
        %1614 = vmatpush1.msra.mxu0 0.0
        %1615 = vmatprep.subr.mxu0 0.0
        %1616 = vmatpush1.msra.mxu0 0.0
        %1617 = vmatprep.subr.mxu0 0.0
        %1618 = vmatpush1.msra.mxu0 0.0
        %1619 = vmatprep.subr.mxu0 0.0
        %1620 = vmatpush1.msra.mxu0 0.0
        %1621 = vmatprep.subr.mxu0 0.0
        %1622 = vmatpush1.msra.mxu0 0.0
        %1623 = vmatprep.subr.mxu0 0.0
        %1624 = vmatpush1.msra.mxu0 0.0
        %1625 = vmatprep.subr.mxu0 0.0
        %1626 = vmatpush1.msra.mxu0 0.0
        %1627 = vmatprep.subr.mxu0 0.0
        %1628 = vmatpush1.msra.mxu0 0.0
        %1629 = vmatprep.subr.mxu0 0.0
        %1630 = vmatpush1.msra.mxu0 0.0
        %1631 = vmatprep.subr.mxu0 0.0
        %1632 = vmatpush1.msra.mxu0 0.0
        %1633 = vmatprep.subr.mxu0 0.0
        %1634 = vmatpush1.msra.mxu0 0.0
        %1635 = vmatprep.subr.mxu0 0.0
        %1636 = vmatpush1.msra.mxu0 0.0
        %1637 = vmatprep.mubr.f32.mxu0 0.0
        %1638 = vmatmul.mubr.f32.gmra.mrb[0].mxu0 %v1565
        %v1639 = vpop.f32.mrb[0].mxu0
        %v1640 = vadd.f32 0.0, %v1639
        %v1641 = vpop.f32.mrb[0].mxu0
        %v1642 = vadd.f32 0.0, %v1641
        %1643 = vdwg.mxu0
        %1644 = vmatprep.subr.mxu0 0.0
        %1645 = vmatpush1.msra.mxu0 %v1571
        %1646 = vmatprep.subr.mxu0 0.0
        %1647 = vmatpush1.msra.mxu0 0.0
        %1648 = vmatprep.subr.mxu0 0.0
        %1649 = vmatpush1.msra.mxu0 0.0
        %1650 = vmatprep.subr.mxu0 0.0
        %1651 = vmatpush1.msra.mxu0 0.0
        %1652 = vmatprep.subr.mxu0 0.0
        %1653 = vmatpush1.msra.mxu0 0.0
        %1654 = vmatprep.subr.mxu0 0.0
        %1655 = vmatpush1.msra.mxu0 0.0
        %1656 = vmatprep.subr.mxu0 0.0
        %1657 = vmatpush1.msra.mxu0 0.0
        %1658 = vmatprep.subr.mxu0 0.0
        %1659 = vmatpush1.msra.mxu0 0.0
        %1660 = vmatprep.subr.mxu0 0.0
        %1661 = vmatpush1.msra.mxu0 0.0
        %1662 = vmatprep.subr.mxu0 0.0
        %1663 = vmatpush1.msra.mxu0 0.0
        %1664 = vmatprep.subr.mxu0 0.0
        %1665 = vmatpush1.msra.mxu0 0.0
        %1666 = vmatprep.subr.mxu0 0.0
        %1667 = vmatpush1.msra.mxu0 0.0
        %1668 = vmatprep.subr.mxu0 0.0
        %1669 = vmatpush1.msra.mxu0 0.0
        %1670 = vmatprep.subr.mxu0 0.0
        %1671 = vmatpush1.msra.mxu0 0.0
        %1672 = vmatprep.subr.mxu0 0.0
        %1673 = vmatpush1.msra.mxu0 0.0
        %1674 = vmatprep.subr.mxu0 0.0
        %1675 = vmatpush1.msra.mxu0 0.0
        %1676 = vmatprep.subr.mxu0 0.0
        %1677 = vmatpush1.msra.mxu0 0.0
        %1678 = vmatprep.subr.mxu0 0.0
        %1679 = vmatpush1.msra.mxu0 0.0
        %1680 = vmatprep.subr.mxu0 0.0
        %1681 = vmatpush1.msra.mxu0 0.0
        %1682 = vmatprep.subr.mxu0 0.0
        %1683 = vmatpush1.msra.mxu0 0.0
        %1684 = vmatprep.subr.mxu0 0.0
        %1685 = vmatpush1.msra.mxu0 0.0
        %1686 = vmatprep.subr.mxu0 0.0
        %1687 = vmatpush1.msra.mxu0 0.0
        %1688 = vmatprep.subr.mxu0 0.0
        %1689 = vmatpush1.msra.mxu0 0.0
        %1690 = vmatprep.subr.mxu0 0.0
        %1691 = vmatpush1.msra.mxu0 0.0
        %1692 = vmatprep.subr.mxu0 0.0
        %1693 = vmatpush1.msra.mxu0 0.0
        %1694 = vmatprep.subr.mxu0 0.0
        %1695 = vmatpush1.msra.mxu0 0.0
        %1696 = vmatprep.subr.mxu0 0.0
        %1697 = vmatpush1.msra.mxu0 0.0
        %1698 = vmatprep.subr.mxu0 0.0
        %1699 = vmatpush1.msra.mxu0 0.0
        %1700 = vmatprep.subr.mxu0 0.0
        %1701 = vmatpush1.msra.mxu0 0.0
        %1702 = vmatprep.subr.mxu0 0.0
        %1703 = vmatpush1.msra.mxu0 0.0
        %1704 = vmatprep.subr.mxu0 0.0
        %1705 = vmatpush1.msra.mxu0 0.0
        %1706 = vmatprep.subr.mxu0 0.0
        %1707 = vmatpush1.msra.mxu0 0.0
        %1708 = vmatprep.mubr.f32.mxu0 0.0
        %1709 = vmatmul.mubr.f32.gmra.mrb[0].mxu0 %v1565
        %v1710 = vpop.f32.mrb[0].mxu0
        %v1711 = vadd.f32 0.0, %v1710
        %v1712 = vpop.f32.mrb[0].mxu0
        %1713 = vdwg.mxu0
        %v1714 = vadd.f32 %v1550, %v1640
        %v1715 = vadd.f32 %v1551, %v1642
        %v1716 = vadd.f32 %v1552, %v1711
        %v1717 = vld [vmem:[%s4] sm:$0xff]
        %1719 = vset.pattern.permute.xlu0 0
        %1720 = vperm.xlu0 %1719, %v1717
        %v1721 = vpop.permute.xlu0 %1720
        %v1723 = vadd.f32 %v1714, %v1721
        %v1724 = vadd.f32 %v1715, %v1721
        %v1725 = vadd.f32 %v1716, %v1721
        %v1726 = vmax.f32 %v1723, 0.0
        %v1727 = vmax.f32 %v1724, 0.0
        %v1728 = vmax.f32 %v1725, 0.0
        %v1729 = vld [vmem:[%s5] sm:$0x7]
        %v1731 = vlaneseq
        %v1732 = vshrl.u32 %v1731, 7
        %v1733 = vsub.s32 0, %v1732
        %v1734 = vrot.slane %v1729, %v1733
        %v1735 = vlaneseq
        %v1736 = vshrl.u32 %v1735, 7
        %v1737 = vsub.s32 1, %v1736
        %v1738 = vrot.slane %v1729, %v1737
        %v1739 = vlaneseq
        %v1740 = vshrl.u32 %v1739, 7
        %v1741 = vsub.s32 2, %v1740
        %v1742 = vrot.slane %v1729, %v1741
        %v1746 = vmul.f32 %v1726, %v1734
        %v1747 = vmul.f32 %v1727, %v1738
        %v1748 = vmul.f32 %v1728, %v1742
        %v1749 = vld [vmem:[%s3] sm:$0xff]
        %1750 = vset.pattern.permute.xlu0 1
        %1751 = vperm.xlu0 %1750, %v1717
        %v1752 = vpop.permute.xlu0 %1751
        %v1755 = vsel %vm267, %v1749, 0
        %1757 = vmatprep.subr.mxu0 %v1569
        %1758 = vmatpush1.msra.mxu0 %v1567
        %1759 = vmatprep.subr.mxu0 0.0
        %1760 = vmatpush1.msra.mxu0 0.0
        %1761 = vmatprep.subr.mxu0 0.0
        %1762 = vmatpush1.msra.mxu0 0.0
        %1763 = vmatprep.subr.mxu0 0.0
        %1764 = vmatpush1.msra.mxu0 0.0
        %1765 = vmatprep.subr.mxu0 0.0
        %1766 = vmatpush1.msra.mxu0 0.0
        %1767 = vmatprep.subr.mxu0 0.0
        %1768 = vmatpush1.msra.mxu0 0.0
        %1769 = vmatprep.subr.mxu0 0.0
        %1770 = vmatpush1.msra.mxu0 0.0
        %1771 = vmatprep.subr.mxu0 0.0
        %1772 = vmatpush1.msra.mxu0 0.0
        %1773 = vmatprep.subr.mxu0 0.0
        %1774 = vmatpush1.msra.mxu0 0.0
        %1775 = vmatprep.subr.mxu0 0.0
        %1776 = vmatpush1.msra.mxu0 0.0
        %1777 = vmatprep.subr.mxu0 0.0
        %1778 = vmatpush1.msra.mxu0 0.0
        %1779 = vmatprep.subr.mxu0 0.0
        %1780 = vmatpush1.msra.mxu0 0.0
        %1781 = vmatprep.subr.mxu0 0.0
        %1782 = vmatpush1.msra.mxu0 0.0
        %1783 = vmatprep.subr.mxu0 0.0
        %1784 = vmatpush1.msra.mxu0 0.0
        %1785 = vmatprep.subr.mxu0 0.0
        %1786 = vmatpush1.msra.mxu0 0.0
        %1787 = vmatprep.subr.mxu0 0.0
        %1788 = vmatpush1.msra.mxu0 0.0
        %1789 = vmatprep.subr.mxu0 0.0
        %1790 = vmatpush1.msra.mxu0 0.0
        %1791 = vmatprep.subr.mxu0 0.0
        %1792 = vmatpush1.msra.mxu0 0.0
        %1793 = vmatprep.subr.mxu0 0.0
        %1794 = vmatpush1.msra.mxu0 0.0
        %1795 = vmatprep.subr.mxu0 0.0
        %1796 = vmatpush1.msra.mxu0 0.0
        %1797 = vmatprep.subr.mxu0 0.0
        %1798 = vmatpush1.msra.mxu0 0.0
        %1799 = vmatprep.subr.mxu0 0.0
        %1800 = vmatpush1.msra.mxu0 0.0
        %1801 = vmatprep.subr.mxu0 0.0
        %1802 = vmatpush1.msra.mxu0 0.0
        %1803 = vmatprep.subr.mxu0 0.0
        %1804 = vmatpush1.msra.mxu0 0.0
        %1805 = vmatprep.subr.mxu0 0.0
        %1806 = vmatpush1.msra.mxu0 0.0
        %1807 = vmatprep.subr.mxu0 0.0
        %1808 = vmatpush1.msra.mxu0 0.0
        %1809 = vmatprep.subr.mxu0 0.0
        %1810 = vmatpush1.msra.mxu0 0.0
        %1811 = vmatprep.subr.mxu0 0.0
        %1812 = vmatpush1.msra.mxu0 0.0
        %1813 = vmatprep.subr.mxu0 0.0
        %1814 = vmatpush1.msra.mxu0 0.0
        %1815 = vmatprep.subr.mxu0 0.0
        %1816 = vmatpush1.msra.mxu0 0.0
        %1817 = vmatprep.subr.mxu0 0.0
        %1818 = vmatpush1.msra.mxu0 0.0
        %1819 = vmatprep.subr.mxu0 0.0
        %1820 = vmatpush1.msra.mxu0 0.0
        %1821 = vmatprep.mubr.f32.mxu0 0.0
        %1822 = vmatmul.mubr.f32.gmra.mrb[0].mxu0 %v1755
        %v1823 = vpop.f32.mrb[0].mxu0
        %v1824 = vadd.f32 %v1752, %v1823
        %v1825 = vpop.f32.mrb[0].mxu0
        %v1826 = vadd.f32 %v1752, %v1825
        %1827 = vdwg.mxu0
        %1828 = vmatprep.subr.mxu0 0.0
        %1829 = vmatpush1.msra.mxu0 %v1571
        %1830 = vmatprep.subr.mxu0 0.0
        %1831 = vmatpush1.msra.mxu0 0.0
        %1832 = vmatprep.subr.mxu0 0.0
        %1833 = vmatpush1.msra.mxu0 0.0
        %1834 = vmatprep.subr.mxu0 0.0
        %1835 = vmatpush1.msra.mxu0 0.0
        %1836 = vmatprep.subr.mxu0 0.0
        %1837 = vmatpush1.msra.mxu0 0.0
        %1838 = vmatprep.subr.mxu0 0.0
        %1839 = vmatpush1.msra.mxu0 0.0
        %1840 = vmatprep.subr.mxu0 0.0
        %1841 = vmatpush1.msra.mxu0 0.0
        %1842 = vmatprep.subr.mxu0 0.0
        %1843 = vmatpush1.msra.mxu0 0.0
        %1844 = vmatprep.subr.mxu0 0.0
        %1845 = vmatpush1.msra.mxu0 0.0
        %1846 = vmatprep.subr.mxu0 0.0
        %1847 = vmatpush1.msra.mxu0 0.0
        %1848 = vmatprep.subr.mxu0 0.0
        %1849 = vmatpush1.msra.mxu0 0.0
        %1850 = vmatprep.subr.mxu0 0.0
        %1851 = vmatpush1.msra.mxu0 0.0
        %1852 = vmatprep.subr.mxu0 0.0
        %1853 = vmatpush1.msra.mxu0 0.0
        %1854 = vmatprep.subr.mxu0 0.0
        %1855 = vmatpush1.msra.mxu0 0.0
        %1856 = vmatprep.subr.mxu0 0.0
        %1857 = vmatpush1.msra.mxu0 0.0
        %1858 = vmatprep.subr.mxu0 0.0
        %1859 = vmatpush1.msra.mxu0 0.0
        %1860 = vmatprep.subr.mxu0 0.0
        %1861 = vmatpush1.msra.mxu0 0.0
        %1862 = vmatprep.subr.mxu0 0.0
        %1863 = vmatpush1.msra.mxu0 0.0
        %1864 = vmatprep.subr.mxu0 0.0
        %1865 = vmatpush1.msra.mxu0 0.0
        %1866 = vmatprep.subr.mxu0 0.0
        %1867 = vmatpush1.msra.mxu0 0.0
        %1868 = vmatprep.subr.mxu0 0.0
        %1869 = vmatpush1.msra.mxu0 0.0
        %1870 = vmatprep.subr.mxu0 0.0
        %1871 = vmatpush1.msra.mxu0 0.0
        %1872 = vmatprep.subr.mxu0 0.0
        %1873 = vmatpush1.msra.mxu0 0.0
        %1874 = vmatprep.subr.mxu0 0.0
        %1875 = vmatpush1.msra.mxu0 0.0
        %1876 = vmatprep.subr.mxu0 0.0
        %1877 = vmatpush1.msra.mxu0 0.0
        %1878 = vmatprep.subr.mxu0 0.0
        %1879 = vmatpush1.msra.mxu0 0.0
        %1880 = vmatprep.subr.mxu0 0.0
        %1881 = vmatpush1.msra.mxu0 0.0
        %1882 = vmatprep.subr.mxu0 0.0
        %1883 = vmatpush1.msra.mxu0 0.0
        %1884 = vmatprep.subr.mxu0 0.0
        %1885 = vmatpush1.msra.mxu0 0.0
        %1886 = vmatprep.subr.mxu0 0.0
        %1887 = vmatpush1.msra.mxu0 0.0
        %1888 = vmatprep.subr.mxu0 0.0
        %1889 = vmatpush1.msra.mxu0 0.0
        %1890 = vmatprep.subr.mxu0 0.0
        %1891 = vmatpush1.msra.mxu0 0.0
        %1892 = vmatprep.mubr.f32.mxu0 0.0
        %1893 = vmatmul.mubr.f32.gmra.mrb[0].mxu0 %v1755
        %v1894 = vpop.f32.mrb[0].mxu0
        %v1895 = vadd.f32 %v1752, %v1894
        %v1896 = vpop.f32.mrb[0].mxu0
        %1897 = vdwg.mxu0
        %v1898 = vld [vmem:[%s2] sm:$0xff]
        %vm1899 = vcmask 64512
        %v1901 = vsel %vm1899, %v1898, 0
        %1903 = vmatprep.subr.mxu0 %v1747
        %1904 = vmatpush1.msra.mxu0 %v1746
        %1905 = vmatprep.subr.mxu0 0.0
        %1906 = vmatpush1.msra.mxu0 0.0
        %1907 = vmatprep.subr.mxu0 0.0
        %1908 = vmatpush1.msra.mxu0 0.0
        %1909 = vmatprep.subr.mxu0 0.0
        %1910 = vmatpush1.msra.mxu0 0.0
        %1911 = vmatprep.subr.mxu0 0.0
        %1912 = vmatpush1.msra.mxu0 0.0
        %1913 = vmatprep.subr.mxu0 0.0
        %1914 = vmatpush1.msra.mxu0 0.0
        %1915 = vmatprep.subr.mxu0 0.0
        %1916 = vmatpush1.msra.mxu0 0.0
        %1917 = vmatprep.subr.mxu0 0.0
        %1918 = vmatpush1.msra.mxu0 0.0
        %1919 = vmatprep.subr.mxu0 0.0
        %1920 = vmatpush1.msra.mxu0 0.0
        %1921 = vmatprep.subr.mxu0 0.0
        %1922 = vmatpush1.msra.mxu0 0.0
        %1923 = vmatprep.subr.mxu0 0.0
        %1924 = vmatpush1.msra.mxu0 0.0
        %1925 = vmatprep.subr.mxu0 0.0
        %1926 = vmatpush1.msra.mxu0 0.0
        %1927 = vmatprep.subr.mxu0 0.0
        %1928 = vmatpush1.msra.mxu0 0.0
        %1929 = vmatprep.subr.mxu0 0.0
        %1930 = vmatpush1.msra.mxu0 0.0
        %1931 = vmatprep.subr.mxu0 0.0
        %1932 = vmatpush1.msra.mxu0 0.0
        %1933 = vmatprep.subr.mxu0 0.0
        %1934 = vmatpush1.msra.mxu0 0.0
        %1935 = vmatprep.subr.mxu0 0.0
        %1936 = vmatpush1.msra.mxu0 0.0
        %1937 = vmatprep.subr.mxu0 0.0
        %1938 = vmatpush1.msra.mxu0 0.0
        %1939 = vmatprep.subr.mxu0 0.0
        %1940 = vmatpush1.msra.mxu0 0.0
        %1941 = vmatprep.subr.mxu0 0.0
        %1942 = vmatpush1.msra.mxu0 0.0
        %1943 = vmatprep.subr.mxu0 0.0
        %1944 = vmatpush1.msra.mxu0 0.0
        %1945 = vmatprep.subr.mxu0 0.0
        %1946 = vmatpush1.msra.mxu0 0.0
        %1947 = vmatprep.subr.mxu0 0.0
        %1948 = vmatpush1.msra.mxu0 0.0
        %1949 = vmatprep.subr.mxu0 0.0
        %1950 = vmatpush1.msra.mxu0 0.0
        %1951 = vmatprep.subr.mxu0 0.0
        %1952 = vmatpush1.msra.mxu0 0.0
        %1953 = vmatprep.subr.mxu0 0.0
        %1954 = vmatpush1.msra.mxu0 0.0
        %1955 = vmatprep.subr.mxu0 0.0
        %1956 = vmatpush1.msra.mxu0 0.0
        %1957 = vmatprep.subr.mxu0 0.0
        %1958 = vmatpush1.msra.mxu0 0.0
        %1959 = vmatprep.subr.mxu0 0.0
        %1960 = vmatpush1.msra.mxu0 0.0
        %1961 = vmatprep.subr.mxu0 0.0
        %1962 = vmatpush1.msra.mxu0 0.0
        %1963 = vmatprep.subr.mxu0 0.0
        %1964 = vmatpush1.msra.mxu0 0.0
        %1965 = vmatprep.subr.mxu0 0.0
        %1966 = vmatpush1.msra.mxu0 0.0
        %1967 = vmatprep.mubr.f32.mxu0 0.0
        %1968 = vmatmul.mubr.f32.gmra.mrb[0].mxu0 %v1901
        %v1969 = vpop.f32.mrb[0].mxu0
        %v1970 = vadd.f32 0.0, %v1969
        %v1971 = vpop.f32.mrb[0].mxu0
        %v1972 = vadd.f32 0.0, %v1971
        %1973 = vdwg.mxu0
        %1974 = vmatprep.subr.mxu0 0.0
        %1975 = vmatpush1.msra.mxu0 %v1748
        %1976 = vmatprep.subr.mxu0 0.0
        %1977 = vmatpush1.msra.mxu0 0.0
        %1978 = vmatprep.subr.mxu0 0.0
        %1979 = vmatpush1.msra.mxu0 0.0
        %1980 = vmatprep.subr.mxu0 0.0
        %1981 = vmatpush1.msra.mxu0 0.0
        %1982 = vmatprep.subr.mxu0 0.0
        %1983 = vmatpush1.msra.mxu0 0.0
        %1984 = vmatprep.subr.mxu0 0.0
        %1985 = vmatpush1.msra.mxu0 0.0
        %1986 = vmatprep.subr.mxu0 0.0
        %1987 = vmatpush1.msra.mxu0 0.0
        %1988 = vmatprep.subr.mxu0 0.0
        %1989 = vmatpush1.msra.mxu0 0.0
        %1990 = vmatprep.subr.mxu0 0.0
        %1991 = vmatpush1.msra.mxu0 0.0
        %1992 = vmatprep.subr.mxu0 0.0
        %1993 = vmatpush1.msra.mxu0 0.0
        %1994 = vmatprep.subr.mxu0 0.0
        %1995 = vmatpush1.msra.mxu0 0.0
        %1996 = vmatprep.subr.mxu0 0.0
        %1997 = vmatpush1.msra.mxu0 0.0
        %1998 = vmatprep.subr.mxu0 0.0
        %1999 = vmatpush1.msra.mxu0 0.0
        %2000 = vmatprep.subr.mxu0 0.0
        %2001 = vmatpush1.msra.mxu0 0.0
        %2002 = vmatprep.subr.mxu0 0.0
        %2003 = vmatpush1.msra.mxu0 0.0
        %2004 = vmatprep.subr.mxu0 0.0
        %2005 = vmatpush1.msra.mxu0 0.0
        %2006 = vmatprep.subr.mxu0 0.0
        %2007 = vmatpush1.msra.mxu0 0.0
        %2008 = vmatprep.subr.mxu0 0.0
        %2009 = vmatpush1.msra.mxu0 0.0
        %2010 = vmatprep.subr.mxu0 0.0
        %2011 = vmatpush1.msra.mxu0 0.0
        %2012 = vmatprep.subr.mxu0 0.0
        %2013 = vmatpush1.msra.mxu0 0.0
        %2014 = vmatprep.subr.mxu0 0.0
        %2015 = vmatpush1.msra.mxu0 0.0
        %2016 = vmatprep.subr.mxu0 0.0
        %2017 = vmatpush1.msra.mxu0 0.0
        %2018 = vmatprep.subr.mxu0 0.0
        %2019 = vmatpush1.msra.mxu0 0.0
        %2020 = vmatprep.subr.mxu0 0.0
        %2021 = vmatpush1.msra.mxu0 0.0
        %2022 = vmatprep.subr.mxu0 0.0
        %2023 = vmatpush1.msra.mxu0 0.0
        %2024 = vmatprep.subr.mxu0 0.0
        %2025 = vmatpush1.msra.mxu0 0.0
        %2026 = vmatprep.subr.mxu0 0.0
        %2027 = vmatpush1.msra.mxu0 0.0
        %2028 = vmatprep.subr.mxu0 0.0
        %2029 = vmatpush1.msra.mxu0 0.0
        %2030 = vmatprep.subr.mxu0 0.0
        %2031 = vmatpush1.msra.mxu0 0.0
        %2032 = vmatprep.subr.mxu0 0.0
        %2033 = vmatpush1.msra.mxu0 0.0
        %2034 = vmatprep.subr.mxu0 0.0
        %2035 = vmatpush1.msra.mxu0 0.0
        %2036 = vmatprep.subr.mxu0 0.0
        %2037 = vmatpush1.msra.mxu0 0.0
        %2038 = vmatprep.mubr.f32.mxu0 0.0
        %2039 = vmatmul.mubr.f32.gmra.mrb[0].mxu0 %v1901
        %v2040 = vpop.f32.mrb[0].mxu0
        %v2041 = vadd.f32 0.0, %v2040
        %v2042 = vpop.f32.mrb[0].mxu0
        %2043 = vdwg.mxu0
        %v2044 = vadd.f32 %v1824, %v1970
        %v2045 = vadd.f32 %v1826, %v1972
        %v2046 = vadd.f32 %v1895, %v2041
        %s2047 = scalar_lea.vmem %s2, 8
        %v2048 = vld [vmem:[%s2047] sm:$0xff]
        %2052 = vrot.lane.b32.xlu0 %v1746, 127
        %v2053 = vpop.permute.xlu0 %2052
        %2054 = vrot.lane.b32.xlu0 %v1747, 127
        %v2055 = vpop.permute.xlu0 %2054
        %2056 = vrot.lane.b32.xlu0 %v1748, 127
        %v2057 = vpop.permute.xlu0 %2056
        %v2058 = vsel %vm264, %v2053, %v2055
        %v2059 = vsel %vm264, %v2055, %v2057
        %v2064 = vsel %vm1899, %v2048, 0
        %2066 = vmatprep.subr.mxu0 %v2059
        %2067 = vmatpush1.msra.mxu0 %v2058
        %2068 = vmatprep.subr.mxu0 0.0
        %2069 = vmatpush1.msra.mxu0 0.0
        %2070 = vmatprep.subr.mxu0 0.0
        %2071 = vmatpush1.msra.mxu0 0.0
        %2072 = vmatprep.subr.mxu0 0.0
        %2073 = vmatpush1.msra.mxu0 0.0
        %2074 = vmatprep.subr.mxu0 0.0
        %2075 = vmatpush1.msra.mxu0 0.0
        %2076 = vmatprep.subr.mxu0 0.0
        %2077 = vmatpush1.msra.mxu0 0.0
        %2078 = vmatprep.subr.mxu0 0.0
        %2079 = vmatpush1.msra.mxu0 0.0
        %2080 = vmatprep.subr.mxu0 0.0
        %2081 = vmatpush1.msra.mxu0 0.0
        %2082 = vmatprep.subr.mxu0 0.0
        %2083 = vmatpush1.msra.mxu0 0.0
        %2084 = vmatprep.subr.mxu0 0.0
        %2085 = vmatpush1.msra.mxu0 0.0
        %2086 = vmatprep.subr.mxu0 0.0
        %2087 = vmatpush1.msra.mxu0 0.0
        %2088 = vmatprep.subr.mxu0 0.0
        %2089 = vmatpush1.msra.mxu0 0.0
        %2090 = vmatprep.subr.mxu0 0.0
        %2091 = vmatpush1.msra.mxu0 0.0
        %2092 = vmatprep.subr.mxu0 0.0
        %2093 = vmatpush1.msra.mxu0 0.0
        %2094 = vmatprep.subr.mxu0 0.0
        %2095 = vmatpush1.msra.mxu0 0.0
        %2096 = vmatprep.subr.mxu0 0.0
        %2097 = vmatpush1.msra.mxu0 0.0
        %2098 = vmatprep.subr.mxu0 0.0
        %2099 = vmatpush1.msra.mxu0 0.0
        %2100 = vmatprep.subr.mxu0 0.0
        %2101 = vmatpush1.msra.mxu0 0.0
        %2102 = vmatprep.subr.mxu0 0.0
        %2103 = vmatpush1.msra.mxu0 0.0
        %2104 = vmatprep.subr.mxu0 0.0
        %2105 = vmatpush1.msra.mxu0 0.0
        %2106 = vmatprep.subr.mxu0 0.0
        %2107 = vmatpush1.msra.mxu0 0.0
        %2108 = vmatprep.subr.mxu0 0.0
        %2109 = vmatpush1.msra.mxu0 0.0
        %2110 = vmatprep.subr.mxu0 0.0
        %2111 = vmatpush1.msra.mxu0 0.0
        %2112 = vmatprep.subr.mxu0 0.0
        %2113 = vmatpush1.msra.mxu0 0.0
        %2114 = vmatprep.subr.mxu0 0.0
        %2115 = vmatpush1.msra.mxu0 0.0
        %2116 = vmatprep.subr.mxu0 0.0
        %2117 = vmatpush1.msra.mxu0 0.0
        %2118 = vmatprep.subr.mxu0 0.0
        %2119 = vmatpush1.msra.mxu0 0.0
        %2120 = vmatprep.subr.mxu0 0.0
        %2121 = vmatpush1.msra.mxu0 0.0
        %2122 = vmatprep.subr.mxu0 0.0
        %2123 = vmatpush1.msra.mxu0 0.0
        %2124 = vmatprep.subr.mxu0 0.0
        %2125 = vmatpush1.msra.mxu0 0.0
        %2126 = vmatprep.subr.mxu0 0.0
        %2127 = vmatpush1.msra.mxu0 0.0
        %2128 = vmatprep.subr.mxu0 0.0
        %2129 = vmatpush1.msra.mxu0 0.0
        %2130 = vmatprep.mubr.f32.mxu0 0.0
        %2131 = vmatmul.mubr.f32.gmra.mrb[0].mxu0 %v2064
        %v2132 = vpop.f32.mrb[0].mxu0
        %v2133 = vadd.f32 0.0, %v2132
        %v2134 = vpop.f32.mrb[0].mxu0
        %v2135 = vadd.f32 0.0, %v2134
        %2136 = vdwg.mxu0
        %2137 = vmatprep.subr.mxu0 0.0
        %2138 = vmatpush1.msra.mxu0 %v2057
        %2139 = vmatprep.subr.mxu0 0.0
        %2140 = vmatpush1.msra.mxu0 0.0
        %2141 = vmatprep.subr.mxu0 0.0
        %2142 = vmatpush1.msra.mxu0 0.0
        %2143 = vmatprep.subr.mxu0 0.0
        %2144 = vmatpush1.msra.mxu0 0.0
        %2145 = vmatprep.subr.mxu0 0.0
        %2146 = vmatpush1.msra.mxu0 0.0
        %2147 = vmatprep.subr.mxu0 0.0
        %2148 = vmatpush1.msra.mxu0 0.0
        %2149 = vmatprep.subr.mxu0 0.0
        %2150 = vmatpush1.msra.mxu0 0.0
        %2151 = vmatprep.subr.mxu0 0.0
        %2152 = vmatpush1.msra.mxu0 0.0
        %2153 = vmatprep.subr.mxu0 0.0
        %2154 = vmatpush1.msra.mxu0 0.0
        %2155 = vmatprep.subr.mxu0 0.0
        %2156 = vmatpush1.msra.mxu0 0.0
        %2157 = vmatprep.subr.mxu0 0.0
        %2158 = vmatpush1.msra.mxu0 0.0
        %2159 = vmatprep.subr.mxu0 0.0
        %2160 = vmatpush1.msra.mxu0 0.0
        %2161 = vmatprep.subr.mxu0 0.0
        %2162 = vmatpush1.msra.mxu0 0.0
        %2163 = vmatprep.subr.mxu0 0.0
        %2164 = vmatpush1.msra.mxu0 0.0
        %2165 = vmatprep.subr.mxu0 0.0
        %2166 = vmatpush1.msra.mxu0 0.0
        %2167 = vmatprep.subr.mxu0 0.0
        %2168 = vmatpush1.msra.mxu0 0.0
        %2169 = vmatprep.subr.mxu0 0.0
        %2170 = vmatpush1.msra.mxu0 0.0
        %2171 = vmatprep.subr.mxu0 0.0
        %2172 = vmatpush1.msra.mxu0 0.0
        %2173 = vmatprep.subr.mxu0 0.0
        %2174 = vmatpush1.msra.mxu0 0.0
        %2175 = vmatprep.subr.mxu0 0.0
        %2176 = vmatpush1.msra.mxu0 0.0
        %2177 = vmatprep.subr.mxu0 0.0
        %2178 = vmatpush1.msra.mxu0 0.0
        %2179 = vmatprep.subr.mxu0 0.0
        %2180 = vmatpush1.msra.mxu0 0.0
        %2181 = vmatprep.subr.mxu0 0.0
        %2182 = vmatpush1.msra.mxu0 0.0
        %2183 = vmatprep.subr.mxu0 0.0
        %2184 = vmatpush1.msra.mxu0 0.0
        %2185 = vmatprep.subr.mxu0 0.0
        %2186 = vmatpush1.msra.mxu0 0.0
        %2187 = vmatprep.subr.mxu0 0.0
        %2188 = vmatpush1.msra.mxu0 0.0
        %2189 = vmatprep.subr.mxu0 0.0
        %2190 = vmatpush1.msra.mxu0 0.0
        %2191 = vmatprep.subr.mxu0 0.0
        %2192 = vmatpush1.msra.mxu0 0.0
        %2193 = vmatprep.subr.mxu0 0.0
        %2194 = vmatpush1.msra.mxu0 0.0
        %2195 = vmatprep.subr.mxu0 0.0
        %2196 = vmatpush1.msra.mxu0 0.0
        %2197 = vmatprep.subr.mxu0 0.0
        %2198 = vmatpush1.msra.mxu0 0.0
        %2199 = vmatprep.subr.mxu0 0.0
        %2200 = vmatpush1.msra.mxu0 0.0
        %2201 = vmatprep.mubr.f32.mxu0 0.0
        %2202 = vmatmul.mubr.f32.gmra.mrb[0].mxu0 %v2064
        %v2203 = vpop.f32.mrb[0].mxu0
        %v2204 = vadd.f32 0.0, %v2203
        %v2205 = vpop.f32.mrb[0].mxu0
        %2206 = vdwg.mxu0
        %v2207 = vadd.f32 %v2044, %v2133
        %v2208 = vadd.f32 %v2045, %v2135
        %v2209 = vadd.f32 %v2046, %v2204
        %s2210 = scalar_lea.vmem %s2, 16
        %v2211 = vld [vmem:[%s2210] sm:$0xff]
        %2212 = vrot.lane.b32.xlu0 %v1746, 126
        %v2213 = vpop.permute.xlu0 %2212
        %2214 = vrot.lane.b32.xlu0 %v1747, 126
        %v2215 = vpop.permute.xlu0 %2214
        %2216 = vrot.lane.b32.xlu0 %v1748, 126
        %v2217 = vpop.permute.xlu0 %2216
        %v2218 = vsel %vm577, %v2213, %v2215
        %v2219 = vsel %vm577, %v2215, %v2217
        %v2224 = vsel %vm1899, %v2211, 0
        %2226 = vmatprep.subr.mxu0 %v2219
        %2227 = vmatpush1.msra.mxu0 %v2218
        %2228 = vmatprep.subr.mxu0 0.0
        %2229 = vmatpush1.msra.mxu0 0.0
        %2230 = vmatprep.subr.mxu0 0.0
        %2231 = vmatpush1.msra.mxu0 0.0
        %2232 = vmatprep.subr.mxu0 0.0
        %2233 = vmatpush1.msra.mxu0 0.0
        %2234 = vmatprep.subr.mxu0 0.0
        %2235 = vmatpush1.msra.mxu0 0.0
        %2236 = vmatprep.subr.mxu0 0.0
        %2237 = vmatpush1.msra.mxu0 0.0
        %2238 = vmatprep.subr.mxu0 0.0
        %2239 = vmatpush1.msra.mxu0 0.0
        %2240 = vmatprep.subr.mxu0 0.0
        %2241 = vmatpush1.msra.mxu0 0.0
        %2242 = vmatprep.subr.mxu0 0.0
        %2243 = vmatpush1.msra.mxu0 0.0
        %2244 = vmatprep.subr.mxu0 0.0
        %2245 = vmatpush1.msra.mxu0 0.0
        %2246 = vmatprep.subr.mxu0 0.0
        %2247 = vmatpush1.msra.mxu0 0.0
        %2248 = vmatprep.subr.mxu0 0.0
        %2249 = vmatpush1.msra.mxu0 0.0
        %2250 = vmatprep.subr.mxu0 0.0
        %2251 = vmatpush1.msra.mxu0 0.0
        %2252 = vmatprep.subr.mxu0 0.0
        %2253 = vmatpush1.msra.mxu0 0.0
        %2254 = vmatprep.subr.mxu0 0.0
        %2255 = vmatpush1.msra.mxu0 0.0
        %2256 = vmatprep.subr.mxu0 0.0
        %2257 = vmatpush1.msra.mxu0 0.0
        %2258 = vmatprep.subr.mxu0 0.0
        %2259 = vmatpush1.msra.mxu0 0.0
        %2260 = vmatprep.subr.mxu0 0.0
        %2261 = vmatpush1.msra.mxu0 0.0
        %2262 = vmatprep.subr.mxu0 0.0
        %2263 = vmatpush1.msra.mxu0 0.0
        %2264 = vmatprep.subr.mxu0 0.0
        %2265 = vmatpush1.msra.mxu0 0.0
        %2266 = vmatprep.subr.mxu0 0.0
        %2267 = vmatpush1.msra.mxu0 0.0
        %2268 = vmatprep.subr.mxu0 0.0
        %2269 = vmatpush1.msra.mxu0 0.0
        %2270 = vmatprep.subr.mxu0 0.0
        %2271 = vmatpush1.msra.mxu0 0.0
        %2272 = vmatprep.subr.mxu0 0.0
        %2273 = vmatpush1.msra.mxu0 0.0
        %2274 = vmatprep.subr.mxu0 0.0
        %2275 = vmatpush1.msra.mxu0 0.0
        %2276 = vmatprep.subr.mxu0 0.0
        %2277 = vmatpush1.msra.mxu0 0.0
        %2278 = vmatprep.subr.mxu0 0.0
        %2279 = vmatpush1.msra.mxu0 0.0
        %2280 = vmatprep.subr.mxu0 0.0
        %2281 = vmatpush1.msra.mxu0 0.0
        %2282 = vmatprep.subr.mxu0 0.0
        %2283 = vmatpush1.msra.mxu0 0.0
        %2284 = vmatprep.subr.mxu0 0.0
        %2285 = vmatpush1.msra.mxu0 0.0
        %2286 = vmatprep.subr.mxu0 0.0
        %2287 = vmatpush1.msra.mxu0 0.0
        %2288 = vmatprep.subr.mxu0 0.0
        %2289 = vmatpush1.msra.mxu0 0.0
        %2290 = vmatprep.mubr.f32.mxu0 0.0
        %2291 = vmatmul.mubr.f32.gmra.mrb[0].mxu0 %v2224
        %v2292 = vpop.f32.mrb[0].mxu0
        %v2293 = vadd.f32 0.0, %v2292
        %v2294 = vpop.f32.mrb[0].mxu0
        %v2295 = vadd.f32 0.0, %v2294
        %2296 = vdwg.mxu0
        %2297 = vmatprep.subr.mxu0 0.0
        %2298 = vmatpush1.msra.mxu0 %v2217
        %2299 = vmatprep.subr.mxu0 0.0
        %2300 = vmatpush1.msra.mxu0 0.0
        %2301 = vmatprep.subr.mxu0 0.0
        %2302 = vmatpush1.msra.mxu0 0.0
        %2303 = vmatprep.subr.mxu0 0.0
        %2304 = vmatpush1.msra.mxu0 0.0
        %2305 = vmatprep.subr.mxu0 0.0
        %2306 = vmatpush1.msra.mxu0 0.0
        %2307 = vmatprep.subr.mxu0 0.0
        %2308 = vmatpush1.msra.mxu0 0.0
        %2309 = vmatprep.subr.mxu0 0.0
        %2310 = vmatpush1.msra.mxu0 0.0
        %2311 = vmatprep.subr.mxu0 0.0
        %2312 = vmatpush1.msra.mxu0 0.0
        %2313 = vmatprep.subr.mxu0 0.0
        %2314 = vmatpush1.msra.mxu0 0.0
        %2315 = vmatprep.subr.mxu0 0.0
        %2316 = vmatpush1.msra.mxu0 0.0
        %2317 = vmatprep.subr.mxu0 0.0
        %2318 = vmatpush1.msra.mxu0 0.0
        %2319 = vmatprep.subr.mxu0 0.0
        %2320 = vmatpush1.msra.mxu0 0.0
        %2321 = vmatprep.subr.mxu0 0.0
        %2322 = vmatpush1.msra.mxu0 0.0
        %2323 = vmatprep.subr.mxu0 0.0
        %2324 = vmatpush1.msra.mxu0 0.0
        %2325 = vmatprep.subr.mxu0 0.0
        %2326 = vmatpush1.msra.mxu0 0.0
        %2327 = vmatprep.subr.mxu0 0.0
        %2328 = vmatpush1.msra.mxu0 0.0
        %2329 = vmatprep.subr.mxu0 0.0
        %2330 = vmatpush1.msra.mxu0 0.0
        %2331 = vmatprep.subr.mxu0 0.0
        %2332 = vmatpush1.msra.mxu0 0.0
        %2333 = vmatprep.subr.mxu0 0.0
        %2334 = vmatpush1.msra.mxu0 0.0
        %2335 = vmatprep.subr.mxu0 0.0
        %2336 = vmatpush1.msra.mxu0 0.0
        %2337 = vmatprep.subr.mxu0 0.0
        %2338 = vmatpush1.msra.mxu0 0.0
        %2339 = vmatprep.subr.mxu0 0.0
        %2340 = vmatpush1.msra.mxu0 0.0
        %2341 = vmatprep.subr.mxu0 0.0
        %2342 = vmatpush1.msra.mxu0 0.0
        %2343 = vmatprep.subr.mxu0 0.0
        %2344 = vmatpush1.msra.mxu0 0.0
        %2345 = vmatprep.subr.mxu0 0.0
        %2346 = vmatpush1.msra.mxu0 0.0
        %2347 = vmatprep.subr.mxu0 0.0
        %2348 = vmatpush1.msra.mxu0 0.0
        %2349 = vmatprep.subr.mxu0 0.0
        %2350 = vmatpush1.msra.mxu0 0.0
        %2351 = vmatprep.subr.mxu0 0.0
        %2352 = vmatpush1.msra.mxu0 0.0
        %2353 = vmatprep.subr.mxu0 0.0
        %2354 = vmatpush1.msra.mxu0 0.0
        %2355 = vmatprep.subr.mxu0 0.0
        %2356 = vmatpush1.msra.mxu0 0.0
        %2357 = vmatprep.subr.mxu0 0.0
        %2358 = vmatpush1.msra.mxu0 0.0
        %2359 = vmatprep.subr.mxu0 0.0
        %2360 = vmatpush1.msra.mxu0 0.0
        %2361 = vmatprep.mubr.f32.mxu0 0.0
        %2362 = vmatmul.mubr.f32.gmra.mrb[0].mxu0 %v2224
        %v2363 = vpop.f32.mrb[0].mxu0
        %v2364 = vadd.f32 0.0, %v2363
        %v2365 = vpop.f32.mrb[0].mxu0
        %2366 = vdwg.mxu0
        %v2367 = vadd.f32 %v2207, %v2293
        %v2368 = vadd.f32 %v2208, %v2295
        %v2369 = vadd.f32 %v2209, %v2364
        %s2370 = scalar_lea.vmem %s2, 24
        %v2371 = vld [vmem:[%s2370] sm:$0xff]
        %2372 = vrot.lane.b32.xlu0 %v1746, 110
        %v2373 = vpop.permute.xlu0 %2372
        %2374 = vrot.lane.b32.xlu0 %v1747, 110
        %v2375 = vpop.permute.xlu0 %2374
        %2376 = vrot.lane.b32.xlu0 %v1748, 110
        %v2377 = vpop.permute.xlu0 %2376
        %v2378 = vsel %vm741, %v2373, %v2375
        %v2379 = vsel %vm741, %v2375, %v2377
        %v2384 = vsel %vm1899, %v2371, 0
        %2386 = vmatprep.subr.mxu0 %v2379
        %2387 = vmatpush1.msra.mxu0 %v2378
        %2388 = vmatprep.subr.mxu0 0.0
        %2389 = vmatpush1.msra.mxu0 0.0
        %2390 = vmatprep.subr.mxu0 0.0
        %2391 = vmatpush1.msra.mxu0 0.0
        %2392 = vmatprep.subr.mxu0 0.0
        %2393 = vmatpush1.msra.mxu0 0.0
        %2394 = vmatprep.subr.mxu0 0.0
        %2395 = vmatpush1.msra.mxu0 0.0
        %2396 = vmatprep.subr.mxu0 0.0
        %2397 = vmatpush1.msra.mxu0 0.0
        %2398 = vmatprep.subr.mxu0 0.0
        %2399 = vmatpush1.msra.mxu0 0.0
        %2400 = vmatprep.subr.mxu0 0.0
        %2401 = vmatpush1.msra.mxu0 0.0
        %2402 = vmatprep.subr.mxu0 0.0
        %2403 = vmatpush1.msra.mxu0 0.0
        %2404 = vmatprep.subr.mxu0 0.0
        %2405 = vmatpush1.msra.mxu0 0.0
        %2406 = vmatprep.subr.mxu0 0.0
        %2407 = vmatpush1.msra.mxu0 0.0
        %2408 = vmatprep.subr.mxu0 0.0
        %2409 = vmatpush1.msra.mxu0 0.0
        %2410 = vmatprep.subr.mxu0 0.0
        %2411 = vmatpush1.msra.mxu0 0.0
        %2412 = vmatprep.subr.mxu0 0.0
        %2413 = vmatpush1.msra.mxu0 0.0
        %2414 = vmatprep.subr.mxu0 0.0
        %2415 = vmatpush1.msra.mxu0 0.0
        %2416 = vmatprep.subr.mxu0 0.0
        %2417 = vmatpush1.msra.mxu0 0.0
        %2418 = vmatprep.subr.mxu0 0.0
        %2419 = vmatpush1.msra.mxu0 0.0
        %2420 = vmatprep.subr.mxu0 0.0
        %2421 = vmatpush1.msra.mxu0 0.0
        %2422 = vmatprep.subr.mxu0 0.0
        %2423 = vmatpush1.msra.mxu0 0.0
        %2424 = vmatprep.subr.mxu0 0.0
        %2425 = vmatpush1.msra.mxu0 0.0
        %2426 = vmatprep.subr.mxu0 0.0
        %2427 = vmatpush1.msra.mxu0 0.0
        %2428 = vmatprep.subr.mxu0 0.0
        %2429 = vmatpush1.msra.mxu0 0.0
        %2430 = vmatprep.subr.mxu0 0.0
        %2431 = vmatpush1.msra.mxu0 0.0
        %2432 = vmatprep.subr.mxu0 0.0
        %2433 = vmatpush1.msra.mxu0 0.0
        %2434 = vmatprep.subr.mxu0 0.0
        %2435 = vmatpush1.msra.mxu0 0.0
        %2436 = vmatprep.subr.mxu0 0.0
        %2437 = vmatpush1.msra.mxu0 0.0
        %2438 = vmatprep.subr.mxu0 0.0
        %2439 = vmatpush1.msra.mxu0 0.0
        %2440 = vmatprep.subr.mxu0 0.0
        %2441 = vmatpush1.msra.mxu0 0.0
        %2442 = vmatprep.subr.mxu0 0.0
        %2443 = vmatpush1.msra.mxu0 0.0
        %2444 = vmatprep.subr.mxu0 0.0
        %2445 = vmatpush1.msra.mxu0 0.0
        %2446 = vmatprep.subr.mxu0 0.0
        %2447 = vmatpush1.msra.mxu0 0.0
        %2448 = vmatprep.subr.mxu0 0.0
        %2449 = vmatpush1.msra.mxu0 0.0
        %2450 = vmatprep.mubr.f32.mxu0 0.0
        %2451 = vmatmul.mubr.f32.gmra.mrb[0].mxu0 %v2384
        %v2452 = vpop.f32.mrb[0].mxu0
        %v2453 = vadd.f32 0.0, %v2452
        %v2454 = vpop.f32.mrb[0].mxu0
        %v2455 = vadd.f32 0.0, %v2454
        %2456 = vdwg.mxu0
        %2457 = vmatprep.subr.mxu0 0.0
        %2458 = vmatpush1.msra.mxu0 %v2377
        %2459 = vmatprep.subr.mxu0 0.0
        %2460 = vmatpush1.msra.mxu0 0.0
        %2461 = vmatprep.subr.mxu0 0.0
        %2462 = vmatpush1.msra.mxu0 0.0
        %2463 = vmatprep.subr.mxu0 0.0
        %2464 = vmatpush1.msra.mxu0 0.0
        %2465 = vmatprep.subr.mxu0 0.0
        %2466 = vmatpush1.msra.mxu0 0.0
        %2467 = vmatprep.subr.mxu0 0.0
        %2468 = vmatpush1.msra.mxu0 0.0
        %2469 = vmatprep.subr.mxu0 0.0
        %2470 = vmatpush1.msra.mxu0 0.0
        %2471 = vmatprep.subr.mxu0 0.0
        %2472 = vmatpush1.msra.mxu0 0.0
        %2473 = vmatprep.subr.mxu0 0.0
        %2474 = vmatpush1.msra.mxu0 0.0
        %2475 = vmatprep.subr.mxu0 0.0
        %2476 = vmatpush1.msra.mxu0 0.0
        %2477 = vmatprep.subr.mxu0 0.0
        %2478 = vmatpush1.msra.mxu0 0.0
        %2479 = vmatprep.subr.mxu0 0.0
        %2480 = vmatpush1.msra.mxu0 0.0
        %2481 = vmatprep.subr.mxu0 0.0
        %2482 = vmatpush1.msra.mxu0 0.0
        %2483 = vmatprep.subr.mxu0 0.0
        %2484 = vmatpush1.msra.mxu0 0.0
        %2485 = vmatprep.subr.mxu0 0.0
        %2486 = vmatpush1.msra.mxu0 0.0
        %2487 = vmatprep.subr.mxu0 0.0
        %2488 = vmatpush1.msra.mxu0 0.0
        %2489 = vmatprep.subr.mxu0 0.0
        %2490 = vmatpush1.msra.mxu0 0.0
        %2491 = vmatprep.subr.mxu0 0.0
        %2492 = vmatpush1.msra.mxu0 0.0
        %2493 = vmatprep.subr.mxu0 0.0
        %2494 = vmatpush1.msra.mxu0 0.0
        %2495 = vmatprep.subr.mxu0 0.0
        %2496 = vmatpush1.msra.mxu0 0.0
        %2497 = vmatprep.subr.mxu0 0.0
        %2498 = vmatpush1.msra.mxu0 0.0
        %2499 = vmatprep.subr.mxu0 0.0
        %2500 = vmatpush1.msra.mxu0 0.0
        %2501 = vmatprep.subr.mxu0 0.0
        %2502 = vmatpush1.msra.mxu0 0.0
        %2503 = vmatprep.subr.mxu0 0.0
        %2504 = vmatpush1.msra.mxu0 0.0
        %2505 = vmatprep.subr.mxu0 0.0
        %2506 = vmatpush1.msra.mxu0 0.0
        %2507 = vmatprep.subr.mxu0 0.0
        %2508 = vmatpush1.msra.mxu0 0.0
        %2509 = vmatprep.subr.mxu0 0.0
        %2510 = vmatpush1.msra.mxu0 0.0
        %2511 = vmatprep.subr.mxu0 0.0
        %2512 = vmatpush1.msra.mxu0 0.0
        %2513 = vmatprep.subr.mxu0 0.0
        %2514 = vmatpush1.msra.mxu0 0.0
        %2515 = vmatprep.subr.mxu0 0.0
        %2516 = vmatpush1.msra.mxu0 0.0
        %2517 = vmatprep.subr.mxu0 0.0
        %2518 = vmatpush1.msra.mxu0 0.0
        %2519 = vmatprep.subr.mxu0 0.0
        %2520 = vmatpush1.msra.mxu0 0.0
        %2521 = vmatprep.mubr.f32.mxu0 0.0
        %2522 = vmatmul.mubr.f32.gmra.mrb[0].mxu0 %v2384
        %v2523 = vpop.f32.mrb[0].mxu0
        %v2524 = vadd.f32 0.0, %v2523
        %v2525 = vpop.f32.mrb[0].mxu0
        %2526 = vdwg.mxu0
        %v2527 = vadd.f32 %v2367, %v2453
        %v2528 = vadd.f32 %v2368, %v2455
        %v2529 = vadd.f32 %v2369, %v2524
        %s2530 = scalar_lea.vmem %s2, 32
        %v2531 = vld [vmem:[%s2530] sm:$0xff]
        %2532 = vrot.lane.b32.xlu0 %v1746, 109
        %v2533 = vpop.permute.xlu0 %2532
        %2534 = vrot.lane.b32.xlu0 %v1747, 109
        %v2535 = vpop.permute.xlu0 %2534
        %2536 = vrot.lane.b32.xlu0 %v1748, 109
        %v2537 = vpop.permute.xlu0 %2536
        %v2538 = vsel %vm905, %v2533, %v2535
        %v2539 = vsel %vm905, %v2535, %v2537
        %v2544 = vsel %vm1899, %v2531, 0
        %2546 = vmatprep.subr.mxu0 %v2539
        %2547 = vmatpush1.msra.mxu0 %v2538
        %2548 = vmatprep.subr.mxu0 0.0
        %2549 = vmatpush1.msra.mxu0 0.0
        %2550 = vmatprep.subr.mxu0 0.0
        %2551 = vmatpush1.msra.mxu0 0.0
        %2552 = vmatprep.subr.mxu0 0.0
        %2553 = vmatpush1.msra.mxu0 0.0
        %2554 = vmatprep.subr.mxu0 0.0
        %2555 = vmatpush1.msra.mxu0 0.0
        %2556 = vmatprep.subr.mxu0 0.0
        %2557 = vmatpush1.msra.mxu0 0.0
        %2558 = vmatprep.subr.mxu0 0.0
        %2559 = vmatpush1.msra.mxu0 0.0
        %2560 = vmatprep.subr.mxu0 0.0
        %2561 = vmatpush1.msra.mxu0 0.0
        %2562 = vmatprep.subr.mxu0 0.0
        %2563 = vmatpush1.msra.mxu0 0.0
        %2564 = vmatprep.subr.mxu0 0.0
        %2565 = vmatpush1.msra.mxu0 0.0
        %2566 = vmatprep.subr.mxu0 0.0
        %2567 = vmatpush1.msra.mxu0 0.0
        %2568 = vmatprep.subr.mxu0 0.0
        %2569 = vmatpush1.msra.mxu0 0.0
        %2570 = vmatprep.subr.mxu0 0.0
        %2571 = vmatpush1.msra.mxu0 0.0
        %2572 = vmatprep.subr.mxu0 0.0
        %2573 = vmatpush1.msra.mxu0 0.0
        %2574 = vmatprep.subr.mxu0 0.0
        %2575 = vmatpush1.msra.mxu0 0.0
        %2576 = vmatprep.subr.mxu0 0.0
        %2577 = vmatpush1.msra.mxu0 0.0
        %2578 = vmatprep.subr.mxu0 0.0
        %2579 = vmatpush1.msra.mxu0 0.0
        %2580 = vmatprep.subr.mxu0 0.0
        %2581 = vmatpush1.msra.mxu0 0.0
        %2582 = vmatprep.subr.mxu0 0.0
        %2583 = vmatpush1.msra.mxu0 0.0
        %2584 = vmatprep.subr.mxu0 0.0
        %2585 = vmatpush1.msra.mxu0 0.0
        %2586 = vmatprep.subr.mxu0 0.0
        %2587 = vmatpush1.msra.mxu0 0.0
        %2588 = vmatprep.subr.mxu0 0.0
        %2589 = vmatpush1.msra.mxu0 0.0
        %2590 = vmatprep.subr.mxu0 0.0
        %2591 = vmatpush1.msra.mxu0 0.0
        %2592 = vmatprep.subr.mxu0 0.0
        %2593 = vmatpush1.msra.mxu0 0.0
        %2594 = vmatprep.subr.mxu0 0.0
        %2595 = vmatpush1.msra.mxu0 0.0
        %2596 = vmatprep.subr.mxu0 0.0
        %2597 = vmatpush1.msra.mxu0 0.0
        %2598 = vmatprep.subr.mxu0 0.0
        %2599 = vmatpush1.msra.mxu0 0.0
        %2600 = vmatprep.subr.mxu0 0.0
        %2601 = vmatpush1.msra.mxu0 0.0
        %2602 = vmatprep.subr.mxu0 0.0
        %2603 = vmatpush1.msra.mxu0 0.0
        %2604 = vmatprep.subr.mxu0 0.0
        %2605 = vmatpush1.msra.mxu0 0.0
        %2606 = vmatprep.subr.mxu0 0.0
        %2607 = vmatpush1.msra.mxu0 0.0
        %2608 = vmatprep.subr.mxu0 0.0
        %2609 = vmatpush1.msra.mxu0 0.0
        %2610 = vmatprep.mubr.f32.mxu0 0.0
        %2611 = vmatmul.mubr.f32.gmra.mrb[0].mxu0 %v2544
        %v2612 = vpop.f32.mrb[0].mxu0
        %v2613 = vadd.f32 0.0, %v2612
        %v2614 = vpop.f32.mrb[0].mxu0
        %v2615 = vadd.f32 0.0, %v2614
        %2616 = vdwg.mxu0
        %2617 = vmatprep.subr.mxu0 0.0
        %2618 = vmatpush1.msra.mxu0 %v2537
        %2619 = vmatprep.subr.mxu0 0.0
        %2620 = vmatpush1.msra.mxu0 0.0
        %2621 = vmatprep.subr.mxu0 0.0
        %2622 = vmatpush1.msra.mxu0 0.0
        %2623 = vmatprep.subr.mxu0 0.0
        %2624 = vmatpush1.msra.mxu0 0.0
        %2625 = vmatprep.subr.mxu0 0.0
        %2626 = vmatpush1.msra.mxu0 0.0
        %2627 = vmatprep.subr.mxu0 0.0
        %2628 = vmatpush1.msra.mxu0 0.0
        %2629 = vmatprep.subr.mxu0 0.0
        %2630 = vmatpush1.msra.mxu0 0.0
        %2631 = vmatprep.subr.mxu0 0.0
        %2632 = vmatpush1.msra.mxu0 0.0
        %2633 = vmatprep.subr.mxu0 0.0
        %2634 = vmatpush1.msra.mxu0 0.0
        %2635 = vmatprep.subr.mxu0 0.0
        %2636 = vmatpush1.msra.mxu0 0.0
        %2637 = vmatprep.subr.mxu0 0.0
        %2638 = vmatpush1.msra.mxu0 0.0
        %2639 = vmatprep.subr.mxu0 0.0
        %2640 = vmatpush1.msra.mxu0 0.0
        %2641 = vmatprep.subr.mxu0 0.0
        %2642 = vmatpush1.msra.mxu0 0.0
        %2643 = vmatprep.subr.mxu0 0.0
        %2644 = vmatpush1.msra.mxu0 0.0
        %2645 = vmatprep.subr.mxu0 0.0
        %2646 = vmatpush1.msra.mxu0 0.0
        %2647 = vmatprep.subr.mxu0 0.0
        %2648 = vmatpush1.msra.mxu0 0.0
        %2649 = vmatprep.subr.mxu0 0.0
        %2650 = vmatpush1.msra.mxu0 0.0
        %2651 = vmatprep.subr.mxu0 0.0
        %2652 = vmatpush1.msra.mxu0 0.0
        %2653 = vmatprep.subr.mxu0 0.0
        %2654 = vmatpush1.msra.mxu0 0.0
        %2655 = vmatprep.subr.mxu0 0.0
        %2656 = vmatpush1.msra.mxu0 0.0
        %2657 = vmatprep.subr.mxu0 0.0
        %2658 = vmatpush1.msra.mxu0 0.0
        %2659 = vmatprep.subr.mxu0 0.0
        %2660 = vmatpush1.msra.mxu0 0.0
        %2661 = vmatprep.subr.mxu0 0.0
        %2662 = vmatpush1.msra.mxu0 0.0
        %2663 = vmatprep.subr.mxu0 0.0
        %2664 = vmatpush1.msra.mxu0 0.0
        %2665 = vmatprep.subr.mxu0 0.0
        %2666 = vmatpush1.msra.mxu0 0.0
        %2667 = vmatprep.subr.mxu0 0.0
        %2668 = vmatpush1.msra.mxu0 0.0
        %2669 = vmatprep.subr.mxu0 0.0
        %2670 = vmatpush1.msra.mxu0 0.0
        %2671 = vmatprep.subr.mxu0 0.0
        %2672 = vmatpush1.msra.mxu0 0.0
        %2673 = vmatprep.subr.mxu0 0.0
        %2674 = vmatpush1.msra.mxu0 0.0
        %2675 = vmatprep.subr.mxu0 0.0
        %2676 = vmatpush1.msra.mxu0 0.0
        %2677 = vmatprep.subr.mxu0 0.0
        %2678 = vmatpush1.msra.mxu0 0.0
        %2679 = vmatprep.subr.mxu0 0.0
        %2680 = vmatpush1.msra.mxu0 0.0
        %2681 = vmatprep.mubr.f32.mxu0 0.0
        %2682 = vmatmul.mubr.f32.gmra.mrb[0].mxu0 %v2544
        %v2683 = vpop.f32.mrb[0].mxu0
        %v2684 = vadd.f32 0.0, %v2683
        %v2685 = vpop.f32.mrb[0].mxu0
        %2686 = vdwg.mxu0
        %v2687 = vadd.f32 %v2527, %v2613
        %v2688 = vadd.f32 %v2528, %v2615
        %v2689 = vadd.f32 %v2529, %v2684
        %s2690 = scalar_lea.vmem %s2, 40
        %v2691 = vld [vmem:[%s2690] sm:$0xff]
        %2692 = vrot.lane.b32.xlu0 %v1746, 108
        %v2693 = vpop.permute.xlu0 %2692
        %2694 = vrot.lane.b32.xlu0 %v1747, 108
        %v2695 = vpop.permute.xlu0 %2694
        %2696 = vrot.lane.b32.xlu0 %v1748, 108
        %v2697 = vpop.permute.xlu0 %2696
        %v2698 = vsel %vm1069, %v2693, %v2695
        %v2699 = vsel %vm1069, %v2695, %v2697
        %v2704 = vsel %vm1899, %v2691, 0
        %2706 = vmatprep.subr.mxu0 %v2699
        %2707 = vmatpush1.msra.mxu0 %v2698
        %2708 = vmatprep.subr.mxu0 0.0
        %2709 = vmatpush1.msra.mxu0 0.0
        %2710 = vmatprep.subr.mxu0 0.0
        %2711 = vmatpush1.msra.mxu0 0.0
        %2712 = vmatprep.subr.mxu0 0.0
        %2713 = vmatpush1.msra.mxu0 0.0
        %2714 = vmatprep.subr.mxu0 0.0
        %2715 = vmatpush1.msra.mxu0 0.0
        %2716 = vmatprep.subr.mxu0 0.0
        %2717 = vmatpush1.msra.mxu0 0.0
        %2718 = vmatprep.subr.mxu0 0.0
        %2719 = vmatpush1.msra.mxu0 0.0
        %2720 = vmatprep.subr.mxu0 0.0
        %2721 = vmatpush1.msra.mxu0 0.0
        %2722 = vmatprep.subr.mxu0 0.0
        %2723 = vmatpush1.msra.mxu0 0.0
        %2724 = vmatprep.subr.mxu0 0.0
        %2725 = vmatpush1.msra.mxu0 0.0
        %2726 = vmatprep.subr.mxu0 0.0
        %2727 = vmatpush1.msra.mxu0 0.0
        %2728 = vmatprep.subr.mxu0 0.0
        %2729 = vmatpush1.msra.mxu0 0.0
        %2730 = vmatprep.subr.mxu0 0.0
        %2731 = vmatpush1.msra.mxu0 0.0
        %2732 = vmatprep.subr.mxu0 0.0
        %2733 = vmatpush1.msra.mxu0 0.0
        %2734 = vmatprep.subr.mxu0 0.0
        %2735 = vmatpush1.msra.mxu0 0.0
        %2736 = vmatprep.subr.mxu0 0.0
        %2737 = vmatpush1.msra.mxu0 0.0
        %2738 = vmatprep.subr.mxu0 0.0
        %2739 = vmatpush1.msra.mxu0 0.0
        %2740 = vmatprep.subr.mxu0 0.0
        %2741 = vmatpush1.msra.mxu0 0.0
        %2742 = vmatprep.subr.mxu0 0.0
        %2743 = vmatpush1.msra.mxu0 0.0
        %2744 = vmatprep.subr.mxu0 0.0
        %2745 = vmatpush1.msra.mxu0 0.0
        %2746 = vmatprep.subr.mxu0 0.0
        %2747 = vmatpush1.msra.mxu0 0.0
        %2748 = vmatprep.subr.mxu0 0.0
        %2749 = vmatpush1.msra.mxu0 0.0
        %2750 = vmatprep.subr.mxu0 0.0
        %2751 = vmatpush1.msra.mxu0 0.0
        %2752 = vmatprep.subr.mxu0 0.0
        %2753 = vmatpush1.msra.mxu0 0.0
        %2754 = vmatprep.subr.mxu0 0.0
        %2755 = vmatpush1.msra.mxu0 0.0
        %2756 = vmatprep.subr.mxu0 0.0
        %2757 = vmatpush1.msra.mxu0 0.0
        %2758 = vmatprep.subr.mxu0 0.0
        %2759 = vmatpush1.msra.mxu0 0.0
        %2760 = vmatprep.subr.mxu0 0.0
        %2761 = vmatpush1.msra.mxu0 0.0
        %2762 = vmatprep.subr.mxu0 0.0
        %2763 = vmatpush1.msra.mxu0 0.0
        %2764 = vmatprep.subr.mxu0 0.0
        %2765 = vmatpush1.msra.mxu0 0.0
        %2766 = vmatprep.subr.mxu0 0.0
        %2767 = vmatpush1.msra.mxu0 0.0
        %2768 = vmatprep.subr.mxu0 0.0
        %2769 = vmatpush1.msra.mxu0 0.0
        %2770 = vmatprep.mubr.f32.mxu0 0.0
        %2771 = vmatmul.mubr.f32.gmra.mrb[0].mxu0 %v2704
        %v2772 = vpop.f32.mrb[0].mxu0
        %v2773 = vadd.f32 0.0, %v2772
        %v2774 = vpop.f32.mrb[0].mxu0
        %v2775 = vadd.f32 0.0, %v2774
        %2776 = vdwg.mxu0
        %2777 = vmatprep.subr.mxu0 0.0
        %2778 = vmatpush1.msra.mxu0 %v2697
        %2779 = vmatprep.subr.mxu0 0.0
        %2780 = vmatpush1.msra.mxu0 0.0
        %2781 = vmatprep.subr.mxu0 0.0
        %2782 = vmatpush1.msra.mxu0 0.0
        %2783 = vmatprep.subr.mxu0 0.0
        %2784 = vmatpush1.msra.mxu0 0.0
        %2785 = vmatprep.subr.mxu0 0.0
        %2786 = vmatpush1.msra.mxu0 0.0
        %2787 = vmatprep.subr.mxu0 0.0
        %2788 = vmatpush1.msra.mxu0 0.0
        %2789 = vmatprep.subr.mxu0 0.0
        %2790 = vmatpush1.msra.mxu0 0.0
        %2791 = vmatprep.subr.mxu0 0.0
        %2792 = vmatpush1.msra.mxu0 0.0
        %2793 = vmatprep.subr.mxu0 0.0
        %2794 = vmatpush1.msra.mxu0 0.0
        %2795 = vmatprep.subr.mxu0 0.0
        %2796 = vmatpush1.msra.mxu0 0.0
        %2797 = vmatprep.subr.mxu0 0.0
        %2798 = vmatpush1.msra.mxu0 0.0
        %2799 = vmatprep.subr.mxu0 0.0
        %2800 = vmatpush1.msra.mxu0 0.0
        %2801 = vmatprep.subr.mxu0 0.0
        %2802 = vmatpush1.msra.mxu0 0.0
        %2803 = vmatprep.subr.mxu0 0.0
        %2804 = vmatpush1.msra.mxu0 0.0
        %2805 = vmatprep.subr.mxu0 0.0
        %2806 = vmatpush1.msra.mxu0 0.0
        %2807 = vmatprep.subr.mxu0 0.0
        %2808 = vmatpush1.msra.mxu0 0.0
        %2809 = vmatprep.subr.mxu0 0.0
        %2810 = vmatpush1.msra.mxu0 0.0
        %2811 = vmatprep.subr.mxu0 0.0
        %2812 = vmatpush1.msra.mxu0 0.0
        %2813 = vmatprep.subr.mxu0 0.0
        %2814 = vmatpush1.msra.mxu0 0.0
        %2815 = vmatprep.subr.mxu0 0.0
        %2816 = vmatpush1.msra.mxu0 0.0
        %2817 = vmatprep.subr.mxu0 0.0
        %2818 = vmatpush1.msra.mxu0 0.0
        %2819 = vmatprep.subr.mxu0 0.0
        %2820 = vmatpush1.msra.mxu0 0.0
        %2821 = vmatprep.subr.mxu0 0.0
        %2822 = vmatpush1.msra.mxu0 0.0
        %2823 = vmatprep.subr.mxu0 0.0
        %2824 = vmatpush1.msra.mxu0 0.0
        %2825 = vmatprep.subr.mxu0 0.0
        %2826 = vmatpush1.msra.mxu0 0.0
        %2827 = vmatprep.subr.mxu0 0.0
        %2828 = vmatpush1.msra.mxu0 0.0
        %2829 = vmatprep.subr.mxu0 0.0
        %2830 = vmatpush1.msra.mxu0 0.0
        %2831 = vmatprep.subr.mxu0 0.0
        %2832 = vmatpush1.msra.mxu0 0.0
        %2833 = vmatprep.subr.mxu0 0.0
        %2834 = vmatpush1.msra.mxu0 0.0
        %2835 = vmatprep.subr.mxu0 0.0
        %2836 = vmatpush1.msra.mxu0 0.0
        %2837 = vmatprep.subr.mxu0 0.0
        %2838 = vmatpush1.msra.mxu0 0.0
        %2839 = vmatprep.subr.mxu0 0.0
        %2840 = vmatpush1.msra.mxu0 0.0
        %2841 = vmatprep.mubr.f32.mxu0 0.0
        %2842 = vmatmul.mubr.f32.gmra.mrb[0].mxu0 %v2704
        %v2843 = vpop.f32.mrb[0].mxu0
        %v2844 = vadd.f32 0.0, %v2843
        %v2845 = vpop.f32.mrb[0].mxu0
        %2846 = vdwg.mxu0
        %v2847 = vadd.f32 %v2687, %v2773
        %v2848 = vadd.f32 %v2688, %v2775
        %v2849 = vadd.f32 %v2689, %v2844
        %s2850 = scalar_lea.vmem %s2, 48
        %v2851 = vld [vmem:[%s2850] sm:$0xff]
        %2852 = vrot.lane.b32.xlu0 %v1746, 92
        %v2853 = vpop.permute.xlu0 %2852
        %2854 = vrot.lane.b32.xlu0 %v1747, 92
        %v2855 = vpop.permute.xlu0 %2854
        %2856 = vrot.lane.b32.xlu0 %v1748, 92
        %v2857 = vpop.permute.xlu0 %2856
        %v2858 = vsel %vm1233, %v2853, %v2855
        %v2859 = vsel %vm1233, %v2855, %v2857
        %v2864 = vsel %vm1899, %v2851, 0
        %2866 = vmatprep.subr.mxu0 %v2859
        %2867 = vmatpush1.msra.mxu0 %v2858
        %2868 = vmatprep.subr.mxu0 0.0
        %2869 = vmatpush1.msra.mxu0 0.0
        %2870 = vmatprep.subr.mxu0 0.0
        %2871 = vmatpush1.msra.mxu0 0.0
        %2872 = vmatprep.subr.mxu0 0.0
        %2873 = vmatpush1.msra.mxu0 0.0
        %2874 = vmatprep.subr.mxu0 0.0
        %2875 = vmatpush1.msra.mxu0 0.0
        %2876 = vmatprep.subr.mxu0 0.0
        %2877 = vmatpush1.msra.mxu0 0.0
        %2878 = vmatprep.subr.mxu0 0.0
        %2879 = vmatpush1.msra.mxu0 0.0
        %2880 = vmatprep.subr.mxu0 0.0
        %2881 = vmatpush1.msra.mxu0 0.0
        %2882 = vmatprep.subr.mxu0 0.0
        %2883 = vmatpush1.msra.mxu0 0.0
        %2884 = vmatprep.subr.mxu0 0.0
        %2885 = vmatpush1.msra.mxu0 0.0
        %2886 = vmatprep.subr.mxu0 0.0
        %2887 = vmatpush1.msra.mxu0 0.0
        %2888 = vmatprep.subr.mxu0 0.0
        %2889 = vmatpush1.msra.mxu0 0.0
        %2890 = vmatprep.subr.mxu0 0.0
        %2891 = vmatpush1.msra.mxu0 0.0
        %2892 = vmatprep.subr.mxu0 0.0
        %2893 = vmatpush1.msra.mxu0 0.0
        %2894 = vmatprep.subr.mxu0 0.0
        %2895 = vmatpush1.msra.mxu0 0.0
        %2896 = vmatprep.subr.mxu0 0.0
        %2897 = vmatpush1.msra.mxu0 0.0
        %2898 = vmatprep.subr.mxu0 0.0
        %2899 = vmatpush1.msra.mxu0 0.0
        %2900 = vmatprep.subr.mxu0 0.0
        %2901 = vmatpush1.msra.mxu0 0.0
        %2902 = vmatprep.subr.mxu0 0.0
        %2903 = vmatpush1.msra.mxu0 0.0
        %2904 = vmatprep.subr.mxu0 0.0
        %2905 = vmatpush1.msra.mxu0 0.0
        %2906 = vmatprep.subr.mxu0 0.0
        %2907 = vmatpush1.msra.mxu0 0.0
        %2908 = vmatprep.subr.mxu0 0.0
        %2909 = vmatpush1.msra.mxu0 0.0
        %2910 = vmatprep.subr.mxu0 0.0
        %2911 = vmatpush1.msra.mxu0 0.0
        %2912 = vmatprep.subr.mxu0 0.0
        %2913 = vmatpush1.msra.mxu0 0.0
        %2914 = vmatprep.subr.mxu0 0.0
        %2915 = vmatpush1.msra.mxu0 0.0
        %2916 = vmatprep.subr.mxu0 0.0
        %2917 = vmatpush1.msra.mxu0 0.0
        %2918 = vmatprep.subr.mxu0 0.0
        %2919 = vmatpush1.msra.mxu0 0.0
        %2920 = vmatprep.subr.mxu0 0.0
        %2921 = vmatpush1.msra.mxu0 0.0
        %2922 = vmatprep.subr.mxu0 0.0
        %2923 = vmatpush1.msra.mxu0 0.0
        %2924 = vmatprep.subr.mxu0 0.0
        %2925 = vmatpush1.msra.mxu0 0.0
        %2926 = vmatprep.subr.mxu0 0.0
        %2927 = vmatpush1.msra.mxu0 0.0
        %2928 = vmatprep.subr.mxu0 0.0
        %2929 = vmatpush1.msra.mxu0 0.0
        %2930 = vmatprep.mubr.f32.mxu0 0.0
        %2931 = vmatmul.mubr.f32.gmra.mrb[0].mxu0 %v2864
        %v2932 = vpop.f32.mrb[0].mxu0
        %v2933 = vadd.f32 0.0, %v2932
        %v2934 = vpop.f32.mrb[0].mxu0
        %v2935 = vadd.f32 0.0, %v2934
        %2936 = vdwg.mxu0
        %2937 = vmatprep.subr.mxu0 0.0
        %2938 = vmatpush1.msra.mxu0 %v2857
        %2939 = vmatprep.subr.mxu0 0.0
        %2940 = vmatpush1.msra.mxu0 0.0
        %2941 = vmatprep.subr.mxu0 0.0
        %2942 = vmatpush1.msra.mxu0 0.0
        %2943 = vmatprep.subr.mxu0 0.0
        %2944 = vmatpush1.msra.mxu0 0.0
        %2945 = vmatprep.subr.mxu0 0.0
        %2946 = vmatpush1.msra.mxu0 0.0
        %2947 = vmatprep.subr.mxu0 0.0
        %2948 = vmatpush1.msra.mxu0 0.0
        %2949 = vmatprep.subr.mxu0 0.0
        %2950 = vmatpush1.msra.mxu0 0.0
        %2951 = vmatprep.subr.mxu0 0.0
        %2952 = vmatpush1.msra.mxu0 0.0
        %2953 = vmatprep.subr.mxu0 0.0
        %2954 = vmatpush1.msra.mxu0 0.0
        %2955 = vmatprep.subr.mxu0 0.0
        %2956 = vmatpush1.msra.mxu0 0.0
        %2957 = vmatprep.subr.mxu0 0.0
        %2958 = vmatpush1.msra.mxu0 0.0
        %2959 = vmatprep.subr.mxu0 0.0
        %2960 = vmatpush1.msra.mxu0 0.0
        %2961 = vmatprep.subr.mxu0 0.0
        %2962 = vmatpush1.msra.mxu0 0.0
        %2963 = vmatprep.subr.mxu0 0.0
        %2964 = vmatpush1.msra.mxu0 0.0
        %2965 = vmatprep.subr.mxu0 0.0
        %2966 = vmatpush1.msra.mxu0 0.0
        %2967 = vmatprep.subr.mxu0 0.0
        %2968 = vmatpush1.msra.mxu0 0.0
        %2969 = vmatprep.subr.mxu0 0.0
        %2970 = vmatpush1.msra.mxu0 0.0
        %2971 = vmatprep.subr.mxu0 0.0
        %2972 = vmatpush1.msra.mxu0 0.0
        %2973 = vmatprep.subr.mxu0 0.0
        %2974 = vmatpush1.msra.mxu0 0.0
        %2975 = vmatprep.subr.mxu0 0.0
        %2976 = vmatpush1.msra.mxu0 0.0
        %2977 = vmatprep.subr.mxu0 0.0
        %2978 = vmatpush1.msra.mxu0 0.0
        %2979 = vmatprep.subr.mxu0 0.0
        %2980 = vmatpush1.msra.mxu0 0.0
        %2981 = vmatprep.subr.mxu0 0.0
        %2982 = vmatpush1.msra.mxu0 0.0
        %2983 = vmatprep.subr.mxu0 0.0
        %2984 = vmatpush1.msra.mxu0 0.0
        %2985 = vmatprep.subr.mxu0 0.0
        %2986 = vmatpush1.msra.mxu0 0.0
        %2987 = vmatprep.subr.mxu0 0.0
        %2988 = vmatpush1.msra.mxu0 0.0
        %2989 = vmatprep.subr.mxu0 0.0
        %2990 = vmatpush1.msra.mxu0 0.0
        %2991 = vmatprep.subr.mxu0 0.0
        %2992 = vmatpush1.msra.mxu0 0.0
        %2993 = vmatprep.subr.mxu0 0.0
        %2994 = vmatpush1.msra.mxu0 0.0
        %2995 = vmatprep.subr.mxu0 0.0
        %2996 = vmatpush1.msra.mxu0 0.0
        %2997 = vmatprep.subr.mxu0 0.0
        %2998 = vmatpush1.msra.mxu0 0.0
        %2999 = vmatprep.subr.mxu0 0.0
        %3000 = vmatpush1.msra.mxu0 0.0
        %3001 = vmatprep.mubr.f32.mxu0 0.0
        %3002 = vmatmul.mubr.f32.gmra.mrb[0].mxu0 %v2864
        %v3003 = vpop.f32.mrb[0].mxu0
        %v3004 = vadd.f32 0.0, %v3003
        %v3005 = vpop.f32.mrb[0].mxu0
        %3006 = vdwg.mxu0
        %v3007 = vadd.f32 %v2847, %v2933
        %v3008 = vadd.f32 %v2848, %v2935
        %v3009 = vadd.f32 %v2849, %v3004
        %s3010 = scalar_lea.vmem %s2, 56
        %v3011 = vld [vmem:[%s3010] sm:$0xff]
        %3012 = vrot.lane.b32.xlu0 %v1746, 91
        %v3013 = vpop.permute.xlu0 %3012
        %3014 = vrot.lane.b32.xlu0 %v1747, 91
        %v3015 = vpop.permute.xlu0 %3014
        %3016 = vrot.lane.b32.xlu0 %v1748, 91
        %v3017 = vpop.permute.xlu0 %3016
        %v3018 = vsel %vm1397, %v3013, %v3015
        %v3019 = vsel %vm1397, %v3015, %v3017
        %v3024 = vsel %vm1899, %v3011, 0
        %3026 = vmatprep.subr.mxu0 %v3019
        %3027 = vmatpush1.msra.mxu0 %v3018
        %3028 = vmatprep.subr.mxu0 0.0
        %3029 = vmatpush1.msra.mxu0 0.0
        %3030 = vmatprep.subr.mxu0 0.0
        %3031 = vmatpush1.msra.mxu0 0.0
        %3032 = vmatprep.subr.mxu0 0.0
        %3033 = vmatpush1.msra.mxu0 0.0
        %3034 = vmatprep.subr.mxu0 0.0
        %3035 = vmatpush1.msra.mxu0 0.0
        %3036 = vmatprep.subr.mxu0 0.0
        %3037 = vmatpush1.msra.mxu0 0.0
        %3038 = vmatprep.subr.mxu0 0.0
        %3039 = vmatpush1.msra.mxu0 0.0
        %3040 = vmatprep.subr.mxu0 0.0
        %3041 = vmatpush1.msra.mxu0 0.0
        %3042 = vmatprep.subr.mxu0 0.0
        %3043 = vmatpush1.msra.mxu0 0.0
        %3044 = vmatprep.subr.mxu0 0.0
        %3045 = vmatpush1.msra.mxu0 0.0
        %3046 = vmatprep.subr.mxu0 0.0
        %3047 = vmatpush1.msra.mxu0 0.0
        %3048 = vmatprep.subr.mxu0 0.0
        %3049 = vmatpush1.msra.mxu0 0.0
        %3050 = vmatprep.subr.mxu0 0.0
        %3051 = vmatpush1.msra.mxu0 0.0
        %3052 = vmatprep.subr.mxu0 0.0
        %3053 = vmatpush1.msra.mxu0 0.0
        %3054 = vmatprep.subr.mxu0 0.0
        %3055 = vmatpush1.msra.mxu0 0.0
        %3056 = vmatprep.subr.mxu0 0.0
        %3057 = vmatpush1.msra.mxu0 0.0
        %3058 = vmatprep.subr.mxu0 0.0
        %3059 = vmatpush1.msra.mxu0 0.0
        %3060 = vmatprep.subr.mxu0 0.0
        %3061 = vmatpush1.msra.mxu0 0.0
        %3062 = vmatprep.subr.mxu0 0.0
        %3063 = vmatpush1.msra.mxu0 0.0
        %3064 = vmatprep.subr.mxu0 0.0
        %3065 = vmatpush1.msra.mxu0 0.0
        %3066 = vmatprep.subr.mxu0 0.0
        %3067 = vmatpush1.msra.mxu0 0.0
        %3068 = vmatprep.subr.mxu0 0.0
        %3069 = vmatpush1.msra.mxu0 0.0
        %3070 = vmatprep.subr.mxu0 0.0
        %3071 = vmatpush1.msra.mxu0 0.0
        %3072 = vmatprep.subr.mxu0 0.0
        %3073 = vmatpush1.msra.mxu0 0.0
        %3074 = vmatprep.subr.mxu0 0.0
        %3075 = vmatpush1.msra.mxu0 0.0
        %3076 = vmatprep.subr.mxu0 0.0
        %3077 = vmatpush1.msra.mxu0 0.0
        %3078 = vmatprep.subr.mxu0 0.0
        %3079 = vmatpush1.msra.mxu0 0.0
        %3080 = vmatprep.subr.mxu0 0.0
        %3081 = vmatpush1.msra.mxu0 0.0
        %3082 = vmatprep.subr.mxu0 0.0
        %3083 = vmatpush1.msra.mxu0 0.0
        %3084 = vmatprep.subr.mxu0 0.0
        %3085 = vmatpush1.msra.mxu0 0.0
        %3086 = vmatprep.subr.mxu0 0.0
        %3087 = vmatpush1.msra.mxu0 0.0
        %3088 = vmatprep.subr.mxu0 0.0
        %3089 = vmatpush1.msra.mxu0 0.0
        %3090 = vmatprep.mubr.f32.mxu0 0.0
        %3091 = vmatmul.mubr.f32.gmra.mrb[0].mxu0 %v3024
        %v3092 = vpop.f32.mrb[0].mxu0
        %v3093 = vadd.f32 0.0, %v3092
        %v3094 = vpop.f32.mrb[0].mxu0
        %v3095 = vadd.f32 0.0, %v3094
        %3096 = vdwg.mxu0
        %3097 = vmatprep.subr.mxu0 0.0
        %3098 = vmatpush1.msra.mxu0 %v3017
        %3099 = vmatprep.subr.mxu0 0.0
        %3100 = vmatpush1.msra.mxu0 0.0
        %3101 = vmatprep.subr.mxu0 0.0
        %3102 = vmatpush1.msra.mxu0 0.0
        %3103 = vmatprep.subr.mxu0 0.0
        %3104 = vmatpush1.msra.mxu0 0.0
        %3105 = vmatprep.subr.mxu0 0.0
        %3106 = vmatpush1.msra.mxu0 0.0
        %3107 = vmatprep.subr.mxu0 0.0
        %3108 = vmatpush1.msra.mxu0 0.0
        %3109 = vmatprep.subr.mxu0 0.0
        %3110 = vmatpush1.msra.mxu0 0.0
        %3111 = vmatprep.subr.mxu0 0.0
        %3112 = vmatpush1.msra.mxu0 0.0
        %3113 = vmatprep.subr.mxu0 0.0
        %3114 = vmatpush1.msra.mxu0 0.0
        %3115 = vmatprep.subr.mxu0 0.0
        %3116 = vmatpush1.msra.mxu0 0.0
        %3117 = vmatprep.subr.mxu0 0.0
        %3118 = vmatpush1.msra.mxu0 0.0
        %3119 = vmatprep.subr.mxu0 0.0
        %3120 = vmatpush1.msra.mxu0 0.0
        %3121 = vmatprep.subr.mxu0 0.0
        %3122 = vmatpush1.msra.mxu0 0.0
        %3123 = vmatprep.subr.mxu0 0.0
        %3124 = vmatpush1.msra.mxu0 0.0
        %3125 = vmatprep.subr.mxu0 0.0
        %3126 = vmatpush1.msra.mxu0 0.0
        %3127 = vmatprep.subr.mxu0 0.0
        %3128 = vmatpush1.msra.mxu0 0.0
        %3129 = vmatprep.subr.mxu0 0.0
        %3130 = vmatpush1.msra.mxu0 0.0
        %3131 = vmatprep.subr.mxu0 0.0
        %3132 = vmatpush1.msra.mxu0 0.0
        %3133 = vmatprep.subr.mxu0 0.0
        %3134 = vmatpush1.msra.mxu0 0.0
        %3135 = vmatprep.subr.mxu0 0.0
        %3136 = vmatpush1.msra.mxu0 0.0
        %3137 = vmatprep.subr.mxu0 0.0
        %3138 = vmatpush1.msra.mxu0 0.0
        %3139 = vmatprep.subr.mxu0 0.0
        %3140 = vmatpush1.msra.mxu0 0.0
        %3141 = vmatprep.subr.mxu0 0.0
        %3142 = vmatpush1.msra.mxu0 0.0
        %3143 = vmatprep.subr.mxu0 0.0
        %3144 = vmatpush1.msra.mxu0 0.0
        %3145 = vmatprep.subr.mxu0 0.0
        %3146 = vmatpush1.msra.mxu0 0.0
        %3147 = vmatprep.subr.mxu0 0.0
        %3148 = vmatpush1.msra.mxu0 0.0
        %3149 = vmatprep.subr.mxu0 0.0
        %3150 = vmatpush1.msra.mxu0 0.0
        %3151 = vmatprep.subr.mxu0 0.0
        %3152 = vmatpush1.msra.mxu0 0.0
        %3153 = vmatprep.subr.mxu0 0.0
        %3154 = vmatpush1.msra.mxu0 0.0
        %3155 = vmatprep.subr.mxu0 0.0
        %3156 = vmatpush1.msra.mxu0 0.0
        %3157 = vmatprep.subr.mxu0 0.0
        %3158 = vmatpush1.msra.mxu0 0.0
        %3159 = vmatprep.subr.mxu0 0.0
        %3160 = vmatpush1.msra.mxu0 0.0
        %3161 = vmatprep.mubr.f32.mxu0 0.0
        %3162 = vmatmul.mubr.f32.gmra.mrb[0].mxu0 %v3024
        %v3163 = vpop.f32.mrb[0].mxu0
        %v3164 = vadd.f32 0.0, %v3163
        %v3165 = vpop.f32.mrb[0].mxu0
        %3166 = vdwg.mxu0
        %v3167 = vadd.f32 %v3007, %v3093
        %v3168 = vadd.f32 %v3008, %v3095
        %v3169 = vadd.f32 %v3009, %v3164
        %s3170 = scalar_lea.vmem %s2, 64
        %v3171 = vld [vmem:[%s3170] sm:$0xff]
        %3172 = vrot.lane.b32.xlu0 %v1746, 90
        %v3173 = vpop.permute.xlu0 %3172
        %3174 = vrot.lane.b32.xlu0 %v1747, 90
        %v3175 = vpop.permute.xlu0 %3174
        %3176 = vrot.lane.b32.xlu0 %v1748, 90
        %v3177 = vpop.permute.xlu0 %3176
        %v3178 = vsel %vm1561, %v3173, %v3175
        %v3179 = vsel %vm1561, %v3175, %v3177
        %v3184 = vsel %vm1899, %v3171, 0
        %3186 = vmatprep.subr.mxu0 %v3179
        %3187 = vmatpush1.msra.mxu0 %v3178
        %3188 = vmatprep.subr.mxu0 0.0
        %3189 = vmatpush1.msra.mxu0 0.0
        %3190 = vmatprep.subr.mxu0 0.0
        %3191 = vmatpush1.msra.mxu0 0.0
        %3192 = vmatprep.subr.mxu0 0.0
        %3193 = vmatpush1.msra.mxu0 0.0
        %3194 = vmatprep.subr.mxu0 0.0
        %3195 = vmatpush1.msra.mxu0 0.0
        %3196 = vmatprep.subr.mxu0 0.0
        %3197 = vmatpush1.msra.mxu0 0.0
        %3198 = vmatprep.subr.mxu0 0.0
        %3199 = vmatpush1.msra.mxu0 0.0
        %3200 = vmatprep.subr.mxu0 0.0
        %3201 = vmatpush1.msra.mxu0 0.0
        %3202 = vmatprep.subr.mxu0 0.0
        %3203 = vmatpush1.msra.mxu0 0.0
        %3204 = vmatprep.subr.mxu0 0.0
        %3205 = vmatpush1.msra.mxu0 0.0
        %3206 = vmatprep.subr.mxu0 0.0
        %3207 = vmatpush1.msra.mxu0 0.0
        %3208 = vmatprep.subr.mxu0 0.0
        %3209 = vmatpush1.msra.mxu0 0.0
        %3210 = vmatprep.subr.mxu0 0.0
        %3211 = vmatpush1.msra.mxu0 0.0
        %3212 = vmatprep.subr.mxu0 0.0
        %3213 = vmatpush1.msra.mxu0 0.0
        %3214 = vmatprep.subr.mxu0 0.0
        %3215 = vmatpush1.msra.mxu0 0.0
        %3216 = vmatprep.subr.mxu0 0.0
        %3217 = vmatpush1.msra.mxu0 0.0
        %3218 = vmatprep.subr.mxu0 0.0
        %3219 = vmatpush1.msra.mxu0 0.0
        %3220 = vmatprep.subr.mxu0 0.0
        %3221 = vmatpush1.msra.mxu0 0.0
        %3222 = vmatprep.subr.mxu0 0.0
        %3223 = vmatpush1.msra.mxu0 0.0
        %3224 = vmatprep.subr.mxu0 0.0
        %3225 = vmatpush1.msra.mxu0 0.0
        %3226 = vmatprep.subr.mxu0 0.0
        %3227 = vmatpush1.msra.mxu0 0.0
        %3228 = vmatprep.subr.mxu0 0.0
        %3229 = vmatpush1.msra.mxu0 0.0
        %3230 = vmatprep.subr.mxu0 0.0
        %3231 = vmatpush1.msra.mxu0 0.0
        %3232 = vmatprep.subr.mxu0 0.0
        %3233 = vmatpush1.msra.mxu0 0.0
        %3234 = vmatprep.subr.mxu0 0.0
        %3235 = vmatpush1.msra.mxu0 0.0
        %3236 = vmatprep.subr.mxu0 0.0
        %3237 = vmatpush1.msra.mxu0 0.0
        %3238 = vmatprep.subr.mxu0 0.0
        %3239 = vmatpush1.msra.mxu0 0.0
        %3240 = vmatprep.subr.mxu0 0.0
        %3241 = vmatpush1.msra.mxu0 0.0
        %3242 = vmatprep.subr.mxu0 0.0
        %3243 = vmatpush1.msra.mxu0 0.0
        %3244 = vmatprep.subr.mxu0 0.0
        %3245 = vmatpush1.msra.mxu0 0.0
        %3246 = vmatprep.subr.mxu0 0.0
        %3247 = vmatpush1.msra.mxu0 0.0
        %3248 = vmatprep.subr.mxu0 0.0
        %3249 = vmatpush1.msra.mxu0 0.0
        %3250 = vmatprep.mubr.f32.mxu0 0.0
        %3251 = vmatmul.mubr.f32.gmra.mrb[0].mxu0 %v3184
        %v3252 = vpop.f32.mrb[0].mxu0
        %v3253 = vadd.f32 0.0, %v3252
        %v3254 = vpop.f32.mrb[0].mxu0
        %v3255 = vadd.f32 0.0, %v3254
        %3256 = vdwg.mxu0
        %3257 = vmatprep.subr.mxu0 0.0
        %3258 = vmatpush1.msra.mxu0 %v3177
        %3259 = vmatprep.subr.mxu0 0.0
        %3260 = vmatpush1.msra.mxu0 0.0
        %3261 = vmatprep.subr.mxu0 0.0
        %3262 = vmatpush1.msra.mxu0 0.0
        %3263 = vmatprep.subr.mxu0 0.0
        %3264 = vmatpush1.msra.mxu0 0.0
        %3265 = vmatprep.subr.mxu0 0.0
        %3266 = vmatpush1.msra.mxu0 0.0
        %3267 = vmatprep.subr.mxu0 0.0
        %3268 = vmatpush1.msra.mxu0 0.0
        %3269 = vmatprep.subr.mxu0 0.0
        %3270 = vmatpush1.msra.mxu0 0.0
        %3271 = vmatprep.subr.mxu0 0.0
        %3272 = vmatpush1.msra.mxu0 0.0
        %3273 = vmatprep.subr.mxu0 0.0
        %3274 = vmatpush1.msra.mxu0 0.0
        %3275 = vmatprep.subr.mxu0 0.0
        %3276 = vmatpush1.msra.mxu0 0.0
        %3277 = vmatprep.subr.mxu0 0.0
        %3278 = vmatpush1.msra.mxu0 0.0
        %3279 = vmatprep.subr.mxu0 0.0
        %3280 = vmatpush1.msra.mxu0 0.0
        %3281 = vmatprep.subr.mxu0 0.0
        %3282 = vmatpush1.msra.mxu0 0.0
        %3283 = vmatprep.subr.mxu0 0.0
        %3284 = vmatpush1.msra.mxu0 0.0
        %3285 = vmatprep.subr.mxu0 0.0
        %3286 = vmatpush1.msra.mxu0 0.0
        %3287 = vmatprep.subr.mxu0 0.0
        %3288 = vmatpush1.msra.mxu0 0.0
        %3289 = vmatprep.subr.mxu0 0.0
        %3290 = vmatpush1.msra.mxu0 0.0
        %3291 = vmatprep.subr.mxu0 0.0
        %3292 = vmatpush1.msra.mxu0 0.0
        %3293 = vmatprep.subr.mxu0 0.0
        %3294 = vmatpush1.msra.mxu0 0.0
        %3295 = vmatprep.subr.mxu0 0.0
        %3296 = vmatpush1.msra.mxu0 0.0
        %3297 = vmatprep.subr.mxu0 0.0
        %3298 = vmatpush1.msra.mxu0 0.0
        %3299 = vmatprep.subr.mxu0 0.0
        %3300 = vmatpush1.msra.mxu0 0.0
        %3301 = vmatprep.subr.mxu0 0.0
        %3302 = vmatpush1.msra.mxu0 0.0
        %3303 = vmatprep.subr.mxu0 0.0
        %3304 = vmatpush1.msra.mxu0 0.0
        %3305 = vmatprep.subr.mxu0 0.0
        %3306 = vmatpush1.msra.mxu0 0.0
        %3307 = vmatprep.subr.mxu0 0.0
        %3308 = vmatpush1.msra.mxu0 0.0
        %3309 = vmatprep.subr.mxu0 0.0
        %3310 = vmatpush1.msra.mxu0 0.0
        %3311 = vmatprep.subr.mxu0 0.0
        %3312 = vmatpush1.msra.mxu0 0.0
        %3313 = vmatprep.subr.mxu0 0.0
        %3314 = vmatpush1.msra.mxu0 0.0
        %3315 = vmatprep.subr.mxu0 0.0
        %3316 = vmatpush1.msra.mxu0 0.0
        %3317 = vmatprep.subr.mxu0 0.0
        %3318 = vmatpush1.msra.mxu0 0.0
        %3319 = vmatprep.subr.mxu0 0.0
        %3320 = vmatpush1.msra.mxu0 0.0
        %3321 = vmatprep.mubr.f32.mxu0 0.0
        %3322 = vmatmul.mubr.f32.gmra.mrb[0].mxu0 %v3184
        %v3323 = vpop.f32.mrb[0].mxu0
        %v3324 = vadd.f32 0.0, %v3323
        %v3325 = vpop.f32.mrb[0].mxu0
        %3326 = vdwg.mxu0
        %v3327 = vadd.f32 %v3167, %v3253
        %v3328 = vadd.f32 %v3168, %v3255
        %v3329 = vadd.f32 %v3169, %v3324
        %v3330 = vmax.f32 %v3327, 0.0
        %v3331 = vmax.f32 %v3328, 0.0
        %v3332 = vmax.f32 %v3329, 0.0
        %3333 = vst [vmem:[%s244] sm:$0xff] %v3330
        %3334 = vst [vmem:[%s244 + $0x8] sm:$0xff] %v3331
        %vm3335 = vcmask 244736
        %3336 = vst.msk [vmem:[%s244 + $0x10] sm:$0xff] %vm3335, %v3332
        %s3337 = sand.u32 %s159, 1
        %s3338 = scalar_lea.sflag [#allocation3], %s3337
        %s3339 = sand.u32 %s159, 1
        %s3340 = smul.addr %s3339, 24
        %s3341 = scalar_lea.vmem [#allocation2], %s3340
        // Predicated region
        $region45: #{tpu_custom_call.1} parent=43 // pred_check
          %p3342 = pneg %p169
        $region46: #{tpu_custom_call.1} parent=43 // pred_check_branch
          %3344 = sbr.rel (%p3342) target = $region48
        $region47: #{tpu_custom_call.1} parent=43 // pred_region
          %s3346 = ssub.s32 384, 384
          %3347 = vsyncadd %s3338, %s3346
          %s3348 = smul.addr %s20, 3
          %s3349 = smul.addr %s3348, 128
          %s3350 = scalar_lea.hbm %s6, %s3349
          %s3352 = sshll.u32 %s3341, 4
          %s3353 = int_to_ptr.vmem [resolvable:$true] %s3352
          %3355 = dma.vmem_to_hbm [thread:$0]  %s3353, 384, %s3350, %s3338
        $region48: #{tpu_custom_call.1} parent=43 // pred_fallthru
          _
      $region44: #{tpu_custom_call.1} parent=5 // pred_fallthru
        _
      %p3356 = scmp.le.s32.totalorder 2, %s15
      // Predicated region
      $region49: #{tpu_custom_call.1} parent=5 // pred_check
        %p3357 = pneg %p3356
      $region50: #{tpu_custom_call.1} parent=5 // pred_check_branch
        %3359 = sbr.rel (%p3357) target = $region52
      $region51: #{tpu_custom_call.1} parent=5 // pred_region
        %s3360 = ssub.s32 %s15, 2
        // Predicated region
        $region53: #{tpu_custom_call.1} parent=51 // pred_check
          %p3361 = pneg %p175
        $region54: #{tpu_custom_call.1} parent=51 // pred_check_branch
          %3363 = sbr.rel (%p3361) target = $region56
        $region55: #{tpu_custom_call.1} parent=51 // pred_region
          %s3364 = sand.u32 %s160, 1
          %s3365 = scalar_lea.sflag [#allocation3], %s3364
          %s3366 = sand.u32 %s160, 1
          %s3367 = smul.addr %s3366, 24
          %s3368 = scalar_lea.vmem [#allocation2], %s3367
          %3369 = dma.done %s3365, 384
        $region56: #{tpu_custom_call.1} parent=51 // pred_fallthru
          _
      $region52: #{tpu_custom_call.1} parent=5 // pred_fallthru
        _
    $region6: #{tpu_custom_call.1} parent=1 // loop_footer
      %s19 = sadd.s32 1, %s15
    $region7: #{tpu_custom_call.1} parent=1 // loop_footer_branch
      %14 = sbr.rel target = $region3
    $region8: #{tpu_custom_call.1} parent=1 // loop_exit
      _
    %3370 = vsyncpa [#allocation3], 1
    %s3371 = scalar_lea.sflag [#allocation3], 1
    %3372 = vsyncpa %s3371, 1

</llo_original>
